<compile_context>
chip_gen: v5e
topology: v5e:2x2
jax: 0.10.0
libtpu: 0.0.40
codegen_flags: <defaults>
</compile_context>

<pallas_src>
import jax
import jax.numpy as jnp
from jax.experimental import pallas as pl

# ----------------------------- configuration ------------------------------
B = 2            # batch_size
DAY = 4          # day
FUT = 2          # future_day
AF = 3           # a_field_size
UF = 3           # u_field_size
E = 8            # embedding_size
UE = 8           # u_embedding_size
WE = 8           # week_embedding_size
HP = 4           # hidden_period_size  (2*HP == WE, required by the module)
H = 8            # hidden_size
PERIOD_NUM = 2
WEEK_NUM = 7
DAY_NUM = 31
A_FEAT = 20
U_FEAT = 20
HEADS = 2        # num_attention_head
BCE_WEIGHT = 0.5

OUT_SUBLANES = 8
OUT_LANES = 128

assert WE == 2 * HP, "module requires week_embedding_size == 2*hidden_period_size"


# ------------------------- static slab layouts -----------------------------
def _make_layout(shapes):
    off, rows = {}, 0
    for name, (r, _c) in shapes:
        off[name] = rows
        rows += ((r + 7) // 8) * 8          # sublane-align every entry
    return off, rows


_PARAM_SHAPES = (
    ("u_wqkv_t", (UE, 3 * UE)), ("u_bqkv", (1, 3 * UE)), ("u_wo_t", (UE, UE)), ("u_bo", (1, UE)),
    ("a_wqkv_t", (E, 3 * E)), ("a_bqkv", (1, 3 * E)), ("a_wo_t", (E, E)), ("a_bo", (1, E)),
    ("p_wqkv_t", (WE, 3 * WE)), ("p_bqkv", (1, 3 * WE)), ("p_wo_t", (WE, WE)), ("p_bo", (1, WE)),
    ("pf_wq_t", (2 * HP, 2 * HP)), ("pf_bq", (1, 2 * HP)),
    ("pf_wk_t", (2 * HP, 2 * HP)), ("pf_bk", (1, 2 * HP)),
    ("al_wih", (2 * AF * E, 8 * H)), ("al_whh", (2 * H, 8 * H)), ("al_b", (1, 8 * H)),
    ("pl_wih", (2 * WE, 8 * HP)), ("pl_whh", (2 * HP, 8 * HP)), ("pl_b", (1, 8 * HP)),
    ("fc1_w_t", (UF * UE, UE)), ("fc1_b", (1, UE)),
    ("fc2_w", (1, PERIOD_NUM)), ("fc2_b", (1, 1)),
    ("pred1_w_t", (2 * H + UE + 2 * HP, AF)), ("pred1_b", (1, AF)),
    ("l2_w_t", (FUT + FUT * 2 * H + FUT + UE, 1)), ("l2_b", (1, 1)),
    ("ls_w_t", (2 * HP, 1)), ("ls_b", (1, 1)),
    ("ti", (FUT * B, DAY)),                     # constant time-interval matrix
)
_PARAM_SHAPE = dict(_PARAM_SHAPES)
_PARAM_OFF, PARAM_ROWS = _make_layout(_PARAM_SHAPES)
PARAM_COLS = 8 * H
assert all(c <= PARAM_COLS for _, (_, c) in _PARAM_SHAPES)

_DATA_SHAPES = (
    ("u",   (UF * B, UE)),                      # rows s*B + b            (seq-major)
    ("per", (2 * B * (DAY + FUT), WE)),         # pos-major; rows t*B + b (time-major)
    ("a",   (AF * B * DAY, E)),                 # pos-major; rows d*B + b (time-major)
    ("y1",  (FUT * B, AF)),                     # rows f*B + b
    ("y2",  (B, 1)),
)
_DATA_SHAPE = dict(_DATA_SHAPES)
_DATA_OFF, DATA_ROWS = _make_layout(_DATA_SHAPES)
DATA_COLS = max(UE, WE, E, AF, 1)


# ------------------------- in-kernel helper functions -----------------------
def _mha_self(x, seq_len, n, w_qkv_t, b_qkv, w_o_t, b_o, heads):
    """torch.nn.MultiheadAttention self-attention, sequence positions row-stacked.

    x: (seq_len*n, emb), row s*n + b.  Returns (seq_len*n, emb) attention output.
    One fused QKV matmul, one output-projection matmul, lane-axis softmax per head.
    """
    f32 = jnp.float32
    emb = w_o_t.shape[0]
    hd = emb // heads
    scale = 1.0 / float(hd) ** 0.5
    qkv = jnp.dot(x, w_qkv_t, preferred_element_type=f32) + b_qkv        # (L*n, 3*emb)
    q = qkv[:, 0:emb] * scale
    k = qkv[:, emb:2 * emb]
    v = qkv[:, 2 * emb:3 * emb]
    # replicate key/value blocks across query positions: query row s*n+b attends
    # to key/value rows t*n+b.
    k_rep = [jnp.concatenate([k[t * n:(t + 1) * n, :]] * seq_len, axis=0) for t in range(seq_len)]
    v_rep = [jnp.concatenate([v[t * n:(t + 1) * n, :]] * seq_len, axis=0) for t in range(seq_len)]
    head_outs = []
    for h in range(heads):
        sl = slice(h * hd, (h + 1) * hd)
        qh = q[:, sl]
        logits = jnp.concatenate(
            [jnp.sum(qh * k_rep[t][:, sl], axis=1, keepdims=True) for t in range(seq_len)],
            axis=1)                                                      # (L*n, L)
        m = jnp.max(logits, axis=1, keepdims=True)
        p = jnp.exp(logits - m)
        w = p * pl.reciprocal(jnp.sum(p, axis=1, keepdims=True), approx=True)
        acc = w[:, 0:1] * v_rep[0][:, sl]
        for t in range(1, seq_len):
            acc = acc + w[:, t:t + 1] * v_rep[t][:, sl]
        head_outs.append(acc)                                            # (L*n, hd)
    o = jnp.concatenate(head_outs, axis=1)                               # (L*n, emb)
    return jnp.dot(o, w_o_t, preferred_element_type=f32) + b_o


def _mha_avg_weights(qx, kx, lq, lk, n, w_q_t, b_q, w_k_t, b_k, heads):
    """Head-averaged attention weights of torch MultiheadAttention (weights only).

    qx: (lq*n, emb) rows f*n+b; kx: (lk*n, emb) rows d*n+b.
    Returns (lq*n, lk): softmax over keys, averaged over heads.
    """
    f32 = jnp.float32
    emb = w_q_t.shape[1]
    hd = emb // heads
    scale = 1.0 / float(hd) ** 0.5
    q = (jnp.dot(qx, w_q_t, preferred_element_type=f32) + b_q) * scale
    k = jnp.dot(kx, w_k_t, preferred_element_type=f32) + b_k
    k_rep = [jnp.concatenate([k[t * n:(t + 1) * n, :]] * lq, axis=0) for t in range(lk)]
    w_sum = jnp.zeros((lq * n, lk), f32)
    for h in range(heads):
        sl = slice(h * hd, (h + 1) * hd)
        qh = q[:, sl]
        logits = jnp.concatenate(
            [jnp.sum(qh * k_rep[t][:, sl], axis=1, keepdims=True) for t in range(lk)],
            axis=1)                                                      # (lq*n, lk)
        m = jnp.max(logits, axis=1, keepdims=True)
        p = jnp.exp(logits - m)
        w_sum = w_sum + p * pl.reciprocal(jnp.sum(p, axis=1, keepdims=True), approx=True)
    return w_sum * (1.0 / heads)


def _bilstm(x, wih_big, whh_blk, b_fused, hid, t_len, n):
    """Fused bidirectional LSTM, PyTorch semantics, zero init, fully unrolled.

    x: (t_len*n, in) time-major (row t*n + b).
    wih_big: (2*in, 8*hid) maps [x | x_time_reversed] -> fused gate columns
             [i_f, i_b, f_f, f_b, o_f, o_b, g_f, g_b] (each `hid` wide).
    whh_blk: (2*hid, 8*hid) block-diagonal map of [h_f | h_b] onto the same columns.
    Returns list of t_len arrays (n, 2*hid): [h_fwd(t) | h_bwd(t)].
    """
    f32 = jnp.float32
    x_rev = jnp.concatenate(
        [x[(t_len - 1 - t) * n:(t_len - t) * n, :] for t in range(t_len)], axis=0)
    xcat = jnp.concatenate([x, x_rev], axis=1)                           # (t_len*n, 2*in)
    gx = jnp.dot(xcat, wih_big, preferred_element_type=f32) + b_fused    # (t_len*n, 8*hid)
    h2 = jnp.zeros((n, 2 * hid), f32)
    c2 = jnp.zeros((n, 2 * hid), f32)
    fwd = [None] * t_len
    bwd = [None] * t_len
    for i in range(t_len):
        gates = gx[i * n:(i + 1) * n, :] + jnp.dot(h2, whh_blk, preferred_element_type=f32)
        sg = jax.nn.sigmoid(gates[:, 0:6 * hid])                         # [i2 | f2 | o2]
        gg = jnp.tanh(gates[:, 6 * hid:8 * hid])                         # g2
        c2 = sg[:, 2 * hid:4 * hid] * c2 + sg[:, 0:2 * hid] * gg
        h2 = sg[:, 4 * hid:6 * hid] * jnp.tanh(c2)
        fwd[i] = h2[:, 0:hid]                                            # time i
        bwd[t_len - 1 - i] = h2[:, hid:2 * hid]                          # time t_len-1-i
    return [jnp.concatenate([fwd[t], bwd[t]], axis=1) for t in range(t_len)]


# ------------------------------ fused kernel --------------------------------
def _fused_kernel(data_ref, prm_ref, out_ref):
    f32 = jnp.float32

    def P(name):
        r0 = _PARAM_OFF[name]
        r, c = _PARAM_SHAPE[name]
        return prm_ref[r0:r0 + r, 0:c]

    def D(name):
        r0 = _DATA_OFF[name]
        r, c = _DATA_SHAPE[name]
        return data_ref[r0:r0 + r, 0:c]

    # ----- user tower -----
    att_u = _mha_self(D("u"), UF, B, P("u_wqkv_t"), P("u_bqkv"),
                      P("u_wo_t"), P("u_bo"), HEADS)                     # (UF*B, UE)
    # torch quirk: the (UF, B, UE) attention output is reshaped row-major to
    # (B, UF*UE), which mixes batch rows across feature columns, so it cannot be
    # folded into a fc1 weight permutation.  With seq-major stacking, output row i
    # is simply att rows [i*UF, (i+1)*UF) laid side by side (one-time layout work).
    u_flat = jnp.concatenate(
        [jnp.concatenate([att_u[i * UF + m: i * UF + m + 1, :] for m in range(UF)], axis=1)
         for i in range(B)], axis=0)                                     # (B, UF*UE)
    u_inter = jnp.maximum(
        jnp.dot(u_flat, P("fc1_w_t"), preferred_element_type=f32) + P("fc1_b"), 0.0)  # (B, UE)

    # ----- period tower -----
    t_per = DAY + FUT
    np_ = B * t_per
    att_p = _mha_self(D("per"), 2, np_, P("p_wqkv_t"), P("p_bqkv"),
                      P("p_wo_t"), P("p_bo"), HEADS)                     # (2*np_, WE)
    fc2_w = P("fc2_w")                                                   # (1, 2)
    period_x = jnp.maximum(
        att_p[0:np_, :] * fc2_w[0:1, 0:1]
        + att_p[np_:2 * np_, :] * fc2_w[0:1, 1:2] + P("fc2_b"), 0.0)     # (np_, WE) time-major
    per_out = _bilstm(period_x, P("pl_wih"), P("pl_whh"), P("pl_b"),
                      HP, t_per, B)                                      # t_per x (B, 2*HP)

    # ----- action tower -----
    na = B * DAY
    att_a = _mha_self(D("a"), AF, na, P("a_wqkv_t"), P("a_bqkv"),
                      P("a_wo_t"), P("a_bo"), HEADS)                     # (AF*na, E)
    x_a = jnp.concatenate([att_a[s * na:(s + 1) * na, :] for s in range(AF)], axis=1)  # (na, AF*E)
    a_out = _bilstm(x_a, P("al_wih"), P("al_whh"), P("al_b"),
                    H, DAY, B)                                           # DAY x (B, 2*H)

    # ----- multi-task head (multi_task_enable != 0, fine_grained == 1) -----
    per_fut = jnp.concatenate([per_out[DAY + f] for f in range(FUT)], axis=0)  # (FUT*B, 2HP)
    per_past = jnp.concatenate([per_out[d] for d in range(DAY)], axis=0)       # (DAY*B, 2HP)
    yw = _mha_avg_weights(per_fut, per_past, FUT, DAY, B,
                          P("pf_wq_t"), P("pf_bq"), P("pf_wk_t"), P("pf_bk"),
                          HEADS)                                         # (FUT*B, DAY)

    s_all = jax.nn.sigmoid(
        jnp.dot(per_fut, P("ls_w_t"), preferred_element_type=f32) + P("ls_b"))  # (FUT*B, 1)
    all_w = yw + jnp.exp(P("ti") * s_all)                                # (FUT*B, DAY)

    y_deep = jnp.zeros((FUT * B, 2 * H), f32)
    for d in range(DAY):
        a_rep = jnp.concatenate([a_out[d]] * FUT, axis=0)                # (FUT*B, 2H)
        y_deep = y_deep + all_w[:, d:d + 1] * a_rep

    u_rep = jnp.concatenate([u_inter] * FUT, axis=0)                     # (FUT*B, UE)
    in1 = jnp.concatenate([y_deep, u_rep, per_fut], axis=1)              # (FUT*B, 2H+UE+2HP)
    pred1 = jax.nn.sigmoid(
        jnp.dot(in1, P("pred1_w_t"), preferred_element_type=f32) + P("pred1_b"))  # (FUT*B, AF)

    in21 = jnp.max(pred1, axis=1, keepdims=True)                         # maxpool_1: (FUT*B, 1)
    in23 = jnp.max(per_fut, axis=1, keepdims=True)                       # maxpool_2: (FUT*B, 1)
    input_cat = jnp.concatenate(
        [in21[f * B:(f + 1) * B, :] for f in range(FUT)]
        + [y_deep[f * B:(f + 1) * B, :] for f in range(FUT)]
        + [in23[f * B:(f + 1) * B, :] for f in range(FUT)]
        + [u_inter], axis=1)                                             # (B, 44)
    pred2 = jax.nn.sigmoid(
        jnp.dot(input_cat, P("l2_w_t"), preferred_element_type=f32) + P("l2_b"))  # (B, 1)

    # ----- losses: MSE(pred_2, y2_labels) + bce_weight * BCE(pred_1, y_1) -----
    diff = pred2 - D("y2")
    mse = jnp.sum(diff * diff, axis=0, keepdims=True) * (1.0 / B)        # (1, 1)
    y1 = D("y1")                                                         # (FUT*B, AF)
    logp = jnp.maximum(jnp.log(pred1), -100.0)                           # torch BCE log clamp
    log1mp = jnp.maximum(jnp.log(1.0 - pred1), -100.0)
    bce_el = -(y1 * logp + (1.0 - y1) * log1mp)
    bce = jnp.sum(jnp.sum(bce_el, axis=1, keepdims=True), axis=0, keepdims=True)
    loss = mse + BCE_WEIGHT * bce * (1.0 / (B * FUT * AF))               # (1, 1)

    # ----- outputs: zero-init tile once, then small partial stores -----
    out_ref[...] = jnp.zeros((OUT_SUBLANES, OUT_LANES), f32)
    out_ref[0:1, 0:1] = loss
    out_ref[1:1 + B, 0:1] = pred2
    out_ref[3:3 + FUT * B, 0:AF] = pred1


# ------------------------------ parameters ---------------------------------
def init_params(key):
    """Random parameters in the PyTorch module's native (out_features, in_features) layout."""
    keys = iter(jax.random.split(key, 64))

    def w(shape, scale=0.1):
        return scale * jax.random.normal(next(keys), shape, dtype=jnp.float32)

    def zeros(n):
        return jnp.zeros((n,), jnp.float32)

    def mha_p(e, kd=None, vd=None):
        kd = e if kd is None else kd
        vd = e if vd is None else vd
        return dict(wq=w((e, e)), bq=zeros(e), wk=w((e, kd)), bk=zeros(e),
                    wv=w((e, vd)), bv=zeros(e), wo=w((e, e)), bo=zeros(e))

    def lstm_p(inp, hid):
        # single combined bias per direction (= b_ih + b_hh of torch)
        return dict(wih_f=w((4 * hid, inp)), whh_f=w((4 * hid, hid)), b_f=zeros(4 * hid),
                    wih_b=w((4 * hid, inp)), whh_b=w((4 * hid, hid)), b_b=zeros(4 * hid))

    return dict(
        a_emb=w((A_FEAT, E)), u_emb=w((U_FEAT, UE)),
        week_emb=w((WEEK_NUM, WE)), day_emb=w((DAY_NUM, WE)),
        mha_user=mha_p(UE), mha_a=mha_p(E), mha_period=mha_p(WE),
        mha_pf=mha_p(2 * HP, kd=2 * HP, vd=2 * H),
        lstm=lstm_p(AF * E, H), lstm_period=lstm_p(WE, HP),
        fc1_w=w((UE, UF * UE)), fc1_b=zeros(UE),
        fc2_w=w((1, PERIOD_NUM)), fc2_b=zeros(1),
        pred1_w=w((AF, 2 * H + UE + 2 * HP)), pred1_b=zeros(AF),
        l2_w=w((1, FUT + FUT * 2 * H + FUT + UE)), l2_b=zeros(1),
        ls_w=w((1, 2 * HP)), ls_b=zeros(1),
    )


def pack_params(p):
    """Pre-transpose / pre-permute torch-layout weights into ONE kernel slab (done once)."""
    f32 = jnp.float32
    t = lambda a: jnp.transpose(jnp.asarray(a, f32))
    row = lambda a: jnp.asarray(a, f32).reshape(1, -1)

    def mha_qkv(m):
        return (jnp.concatenate([t(m["wq"]), t(m["wk"]), t(m["wv"])], axis=1),
                jnp.concatenate([row(m["bq"]), row(m["bk"]), row(m["bv"])], axis=1),
                t(m["wo"]), row(m["bo"]))

    def fuse_dirs(wf, wb, hid):
        # torch weights (4h, in_or_h), gate row-block order (i, f, g, o); fused
        # column layout: [i_f, i_b, f_f, f_b, o_f, o_b, g_f, g_b].
        wf_t, wb_t = t(wf), t(wb)
        z = jnp.zeros((wf_t.shape[0], hid), f32)
        g = lambda m, k: m[:, k * hid:(k + 1) * hid]
        top = jnp.concatenate([g(wf_t, 0), z, g(wf_t, 1), z, g(wf_t, 3), z, g(wf_t, 2), z], axis=1)
        bot = jnp.concatenate([z, g(wb_t, 0), z, g(wb_t, 1), z, g(wb_t, 3), z, g(wb_t, 2)], axis=1)
        return jnp.concatenate([top, bot], axis=0)

    def fuse_bias(bf, bb, hid):
        bf = jnp.asarray(bf, f32)
        bb = jnp.asarray(bb, f32)
        g = lambda b, k: b[k * hid:(k + 1) * hid]
        return jnp.concatenate([g(bf, 0), g(bb, 0), g(bf, 1), g(bb, 1),
                                g(bf, 3), g(bb, 3), g(bf, 2), g(bb, 2)]).reshape(1, -1)

    u_qkv, u_bqkv, u_wo, u_bo = mha_qkv(p["mha_user"])
    a_qkv, a_bqkv, a_wo, a_bo = mha_qkv(p["mha_a"])
    p_qkv, p_bqkv, p_wo, p_bo = mha_qkv(p["mha_period"])

    # time_intervel[f, d] = (DAY+1+f) - (d+1); rows f*B + b
    ti = jnp.asarray([[float(DAY + f - d) for d in range(DAY)]
                      for f in range(FUT) for _ in range(B)], f32)

    kern = {
        "u_wqkv_t": u_qkv, "u_bqkv": u_bqkv, "u_wo_t": u_wo, "u_bo": u_bo,
        "a_wqkv_t": a_qkv, "a_bqkv": a_bqkv, "a_wo_t": a_wo, "a_bo": a_bo,
        "p_wqkv_t": p_qkv, "p_bqkv": p_bqkv, "p_wo_t": p_wo, "p_bo": p_bo,
        "pf_wq_t": t(p["mha_pf"]["wq"]), "pf_bq": row(p["mha_pf"]["bq"]),
        "pf_wk_t": t(p["mha_pf"]["wk"]), "pf_bk": row(p["mha_pf"]["bk"]),
        "al_wih": fuse_dirs(p["lstm"]["wih_f"], p["lstm"]["wih_b"], H),
        "al_whh": fuse_dirs(p["lstm"]["whh_f"], p["lstm"]["whh_b"], H),
        "al_b": fuse_bias(p["lstm"]["b_f"], p["lstm"]["b_b"], H),
        "pl_wih": fuse_dirs(p["lstm_period"]["wih_f"], p["lstm_period"]["wih_b"], HP),
        "pl_whh": fuse_dirs(p["lstm_period"]["whh_f"], p["lstm_period"]["whh_b"], HP),
        "pl_b": fuse_bias(p["lstm_period"]["b_f"], p["lstm_period"]["b_b"], HP),
        "fc1_w_t": t(p["fc1_w"]), "fc1_b": row(p["fc1_b"]),
        "fc2_w": jnp.asarray(p["fc2_w"], f32), "fc2_b": row(p["fc2_b"]),
        "pred1_w_t": t(p["pred1_w"]), "pred1_b": row(p["pred1_b"]),
        "l2_w_t": t(p["l2_w"]), "l2_b": row(p["l2_b"]),
        "ls_w_t": t(p["ls_w"]), "ls_b": row(p["ls_b"]),
        "ti": ti,
    }

    slab = jnp.zeros((PARAM_ROWS, PARAM_COLS), f32)
    for name, (r, c) in _PARAM_SHAPES:
        arr = kern[name]
        assert arr.shape == (r, c), (name, arr.shape, (r, c))
        slab = slab.at[_PARAM_OFF[name]:_PARAM_OFF[name] + r, 0:c].set(arr)

    return {
        "slab": slab,
        # embedding tables (used only by the XLA-side gathers in the wrapper)
        "u_emb_table": jnp.asarray(p["u_emb"], f32),
        "a_emb_table": jnp.asarray(p["a_emb"], f32),
        "week_emb_table": jnp.asarray(p["week_emb"], f32),
        "day_emb_table": jnp.asarray(p["day_emb"], f32),
    }


# -------------------------------- forward ----------------------------------
def mladp_forward(params, ui, uv, ai, av, y_1, y_2, time):
    f32 = jnp.float32
    t_per = DAY + FUT

    # Embedding gathers + value scaling stay in the wrapper (tiny XLA gathers that
    # fuse with the multiplies); everything else runs in the single fused kernel.
    # NOTE: jnp.take clamps out-of-range indices; a 0 in time[:,:,2]/time[:,:,3]
    # becomes -1 and clamps to row 0 instead of raising like torch.nn.Embedding.
    u_emb = jnp.take(params["u_emb_table"], ui, axis=0) * uv[..., None].astype(f32)   # (B, UF, UE)
    u_flat = jnp.transpose(u_emb, (1, 0, 2)).reshape(UF * B, UE)                      # rows s*B+b

    weeks_idx = jnp.transpose(time[:, :, 3] - 1)                                      # (T, B) time-major
    days_idx = jnp.transpose(time[:, :, 2] - 1)
    weeks_emb = jnp.take(params["week_emb_table"], weeks_idx, axis=0).reshape(t_per * B, WE)
    days_emb = jnp.take(params["day_emb_table"], days_idx, axis=0).reshape(t_per * B, WE)
    per_flat = jnp.concatenate([weeks_emb, days_emb], axis=0)                         # (2*T*B, WE)

    a_emb = jnp.take(params["a_emb_table"], ai, axis=0) * av[..., None].astype(f32)   # (B, DAY, AF, E)
    a_flat = jnp.transpose(a_emb, (2, 1, 0, 3)).reshape(AF * DAY * B, E)              # rows s*(D*B)+d*B+b

    y1_flat = jnp.transpose(y_1.astype(f32), (1, 0, 2)).reshape(FUT * B, AF)          # rows f*B+b
    y2_labels = (jnp.argmax(y_2, axis=1).astype(f32) / y_2.shape[1]).reshape(B, 1)

    data = jnp.zeros((DATA_ROWS, DATA_COLS), f32)
    for name, arr in (("u", u_flat), ("per", per_flat), ("a", a_flat),
                      ("y1", y1_flat), ("y2", y2_labels)):
        r, c = _DATA_SHAPE[name]
        data = data.at[_DATA_OFF[name]:_DATA_OFF[name] + r, 0:c].set(arr)

    slab = pl.pallas_call(
        _fused_kernel,
        out_shape=jax.ShapeDtypeStruct((OUT_SUBLANES, OUT_LANES), jnp.float32),
    )(data, params["slab"])

    loss = slab[0, 0]
    pred_2 = slab[1:1 + B, 0]
    pred_1 = slab[3:3 + FUT * B, 0:AF].reshape(FUT, B, AF).transpose(1, 0, 2)
    return loss, pred_1, pred_2


# --------------------------------- main -------------------------------------
if __name__ == "__main__":
    key = jax.random.PRNGKey(0)
    kp, k1, k2, k3, k4, k5, k6, k7, k8 = jax.random.split(key, 9)
    params = pack_params(init_params(kp))

    ui = jax.random.randint(k1, (B, UF), 0, U_FEAT)
    uv = jax.random.uniform(k2, (B, UF), dtype=jnp.float32)
    ai = jax.random.randint(k3, (B, DAY, AF), 0, A_FEAT)
    av = jax.random.uniform(k4, (B, DAY, AF), dtype=jnp.float32)
    y_1 = (jax.random.uniform(k5, (B, FUT, AF)) > 0.5).astype(jnp.float32)
    y_2 = jax.random.uniform(k6, (B, FUT), dtype=jnp.float32)
    t_week = jax.random.randint(k7, (B, DAY + FUT, 1), 1, WEEK_NUM + 1)
    t_day = jax.random.randint(k8, (B, DAY + FUT, 1), 1, DAY_NUM + 1)
    time = jnp.concatenate(
        [jnp.zeros((B, DAY + FUT, 2), jnp.int32), t_day, t_week], axis=2)  # cols: [_,_,day,week]

    fwd = jax.jit(mladp_forward)
    loss, pred_1, pred_2 = fwd(params, ui, uv, ai, av, y_1, y_2, time)
    jax.block_until_ready((loss, pred_1, pred_2))

    assert pred_1.shape == (B, FUT, AF)
    assert pred_2.shape == (B,)
    assert loss.shape == ()
    print("KERNEL_OK")
</pallas_src>

<mosaic_0001>
module attributes {stable_mosaic.version = 11 : i64} {
  func.func @_fused_kernel(%arg0: memref<72x8xf32, #tpu.memory_space<vmem>>, %arg1: memref<400x64xf32, #tpu.memory_space<vmem>>, %arg2: memref<8x128xf32, #tpu.memory_space<vmem>>) attributes {dimension_semantics = [], scalar_prefetch = 0 : i64, scratch_operands = 0 : i64, tpu.core_type = #tpu.core_type<tc>} {
    %c0 = arith.constant 0 : index
    %c0_0 = arith.constant 0 : index
    %0 = vector.load %arg0[%c0, %c0_0] : memref<72x8xf32, #tpu.memory_space<vmem>>, vector<6x8xf32>
    %c0_1 = arith.constant 0 : index
    %c0_2 = arith.constant 0 : index
    %1 = vector.load %arg1[%c0_1, %c0_2] : memref<400x64xf32, #tpu.memory_space<vmem>>, vector<8x24xf32>
    %c8 = arith.constant 8 : index
    %c0_3 = arith.constant 0 : index
    %2 = vector.load %arg1[%c8, %c0_3] : memref<400x64xf32, #tpu.memory_space<vmem>>, vector<1x24xf32>
    %c16 = arith.constant 16 : index
    %c0_4 = arith.constant 0 : index
    %3 = vector.load %arg1[%c16, %c0_4] : memref<400x64xf32, #tpu.memory_space<vmem>>, vector<8x8xf32>
    %c24 = arith.constant 24 : index
    %c0_5 = arith.constant 0 : index
    %4 = vector.load %arg1[%c24, %c0_5] : memref<400x64xf32, #tpu.memory_space<vmem>>, vector<1x8xf32>
    %cst = arith.constant dense<0.000000e+00> : vector<6x24xf32>
    %5 = tpu.matmul %0, %1, %cst {dimension_numbers = #tpu.dot_dimension_numbers<[1], [0], [0], [1], [0, 0, 1, 1], [], []>} : vector<6x8xf32>, vector<8x24xf32>, vector<6x24xf32> -> vector<6x24xf32>
    %6 = vector.broadcast %2 : vector<1x24xf32> to vector<6x24xf32>
    %7 = arith.addf %5, %6 : vector<6x24xf32>
    %8 = vector.extract_strided_slice %7 {offsets = [0, 0], sizes = [6, 8], strides = [1, 1]} : vector<6x24xf32> to vector<6x8xf32>
    %cst_6 = arith.constant 5.000000e-01 : f32
    %9 = vector.broadcast %cst_6 : f32 to vector<6x8xf32>
    %10 = arith.mulf %8, %9 : vector<6x8xf32>
    %11 = vector.extract_strided_slice %7 {offsets = [0, 8], sizes = [6, 8], strides = [1, 1]} : vector<6x24xf32> to vector<6x8xf32>
    %12 = vector.extract_strided_slice %7 {offsets = [0, 16], sizes = [6, 8], strides = [1, 1]} : vector<6x24xf32> to vector<6x8xf32>
    %13 = vector.extract_strided_slice %11 {offsets = [0, 0], sizes = [2, 8], strides = [1, 1]} : vector<6x8xf32> to vector<2x8xf32>
    %14 = tpu.concatenate %13, %13, %13 in 0 : vector<2x8xf32>, vector<2x8xf32>, vector<2x8xf32> -> vector<6x8xf32>
    %15 = vector.extract_strided_slice %11 {offsets = [2, 0], sizes = [2, 8], strides = [1, 1]} : vector<6x8xf32> to vector<2x8xf32>
    %16 = tpu.concatenate %15, %15, %15 in 0 : vector<2x8xf32>, vector<2x8xf32>, vector<2x8xf32> -> vector<6x8xf32>
    %17 = vector.extract_strided_slice %11 {offsets = [4, 0], sizes = [2, 8], strides = [1, 1]} : vector<6x8xf32> to vector<2x8xf32>
    %18 = tpu.concatenate %17, %17, %17 in 0 : vector<2x8xf32>, vector<2x8xf32>, vector<2x8xf32> -> vector<6x8xf32>
    %19 = vector.extract_strided_slice %12 {offsets = [0, 0], sizes = [2, 8], strides = [1, 1]} : vector<6x8xf32> to vector<2x8xf32>
    %20 = tpu.concatenate %19, %19, %19 in 0 : vector<2x8xf32>, vector<2x8xf32>, vector<2x8xf32> -> vector<6x8xf32>
    %21 = vector.extract_strided_slice %12 {offsets = [2, 0], sizes = [2, 8], strides = [1, 1]} : vector<6x8xf32> to vector<2x8xf32>
    %22 = tpu.concatenate %21, %21, %21 in 0 : vector<2x8xf32>, vector<2x8xf32>, vector<2x8xf32> -> vector<6x8xf32>
    %23 = vector.extract_strided_slice %12 {offsets = [4, 0], sizes = [2, 8], strides = [1, 1]} : vector<6x8xf32> to vector<2x8xf32>
    %24 = tpu.concatenate %23, %23, %23 in 0 : vector<2x8xf32>, vector<2x8xf32>, vector<2x8xf32> -> vector<6x8xf32>
    %25 = vector.extract_strided_slice %10 {offsets = [0, 0], sizes = [6, 4], strides = [1, 1]} : vector<6x8xf32> to vector<6x4xf32>
    %26 = vector.extract_strided_slice %14 {offsets = [0, 0], sizes = [6, 4], strides = [1, 1]} : vector<6x8xf32> to vector<6x4xf32>
    %27 = arith.mulf %25, %26 : vector<6x4xf32>
    %cst_7 = arith.constant dense<0.000000e+00> : vector<6xf32>
    %28 = vector.multi_reduction <add>, %27, %cst_7 [1] : vector<6x4xf32> to vector<6xf32>
    %29 = vector.shape_cast %28 : vector<6xf32> to vector<6x1xf32>
    %30 = vector.extract_strided_slice %16 {offsets = [0, 0], sizes = [6, 4], strides = [1, 1]} : vector<6x8xf32> to vector<6x4xf32>
    %31 = arith.mulf %25, %30 : vector<6x4xf32>
    %cst_8 = arith.constant dense<0.000000e+00> : vector<6xf32>
    %32 = vector.multi_reduction <add>, %31, %cst_8 [1] : vector<6x4xf32> to vector<6xf32>
    %33 = vector.shape_cast %32 : vector<6xf32> to vector<6x1xf32>
    %34 = vector.extract_strided_slice %18 {offsets = [0, 0], sizes = [6, 4], strides = [1, 1]} : vector<6x8xf32> to vector<6x4xf32>
    %35 = arith.mulf %25, %34 : vector<6x4xf32>
    %cst_9 = arith.constant dense<0.000000e+00> : vector<6xf32>
    %36 = vector.multi_reduction <add>, %35, %cst_9 [1] : vector<6x4xf32> to vector<6xf32>
    %37 = vector.shape_cast %36 : vector<6xf32> to vector<6x1xf32>
    %38 = tpu.concatenate %29, %33, %37 in 1 : vector<6x1xf32>, vector<6x1xf32>, vector<6x1xf32> -> vector<6x3xf32>
    %cst_10 = arith.constant dense<0xFF800000> : vector<6xf32>
    %39 = vector.multi_reduction <maximumf>, %38, %cst_10 [1] : vector<6x3xf32> to vector<6xf32>
    %40 = vector.shape_cast %39 : vector<6xf32> to vector<6x1xf32>
    %41 = vector.broadcast %40 : vector<6x1xf32> to vector<6x3xf32>
    %42 = arith.subf %38, %41 : vector<6x3xf32>
    %43 = math.exp %42 : vector<6x3xf32>
    %cst_11 = arith.constant dense<0.000000e+00> : vector<6xf32>
    %44 = vector.multi_reduction <add>, %43, %cst_11 [1] : vector<6x3xf32> to vector<6xf32>
    %45 = vector.shape_cast %44 : vector<6xf32> to vector<6x1xf32>
    %46 = tpu.reciprocal %45 {approx = true} : vector<6x1xf32> -> vector<6x1xf32>
    %47 = vector.broadcast %46 : vector<6x1xf32> to vector<6x3xf32>
    %48 = arith.mulf %43, %47 : vector<6x3xf32>
    %49 = vector.extract_strided_slice %48 {offsets = [0, 0], sizes = [6, 1], strides = [1, 1]} : vector<6x3xf32> to vector<6x1xf32>
    %50 = vector.extract_strided_slice %20 {offsets = [0, 0], sizes = [6, 4], strides = [1, 1]} : vector<6x8xf32> to vector<6x4xf32>
    %51 = vector.broadcast %49 : vector<6x1xf32> to vector<6x4xf32>
    %52 = arith.mulf %51, %50 : vector<6x4xf32>
    %53 = vector.extract_strided_slice %48 {offsets = [0, 1], sizes = [6, 1], strides = [1, 1]} : vector<6x3xf32> to vector<6x1xf32>
    %54 = vector.extract_strided_slice %22 {offsets = [0, 0], sizes = [6, 4], strides = [1, 1]} : vector<6x8xf32> to vector<6x4xf32>
    %55 = vector.broadcast %53 : vector<6x1xf32> to vector<6x4xf32>
    %56 = arith.mulf %55, %54 : vector<6x4xf32>
    %57 = arith.addf %52, %56 : vector<6x4xf32>
    %58 = vector.extract_strided_slice %48 {offsets = [0, 2], sizes = [6, 1], strides = [1, 1]} : vector<6x3xf32> to vector<6x1xf32>
    %59 = vector.extract_strided_slice %24 {offsets = [0, 0], sizes = [6, 4], strides = [1, 1]} : vector<6x8xf32> to vector<6x4xf32>
    %60 = vector.broadcast %58 : vector<6x1xf32> to vector<6x4xf32>
    %61 = arith.mulf %60, %59 : vector<6x4xf32>
    %62 = arith.addf %57, %61 : vector<6x4xf32>
    %63 = vector.extract_strided_slice %10 {offsets = [0, 4], sizes = [6, 4], strides = [1, 1]} : vector<6x8xf32> to vector<6x4xf32>
    %64 = vector.extract_strided_slice %14 {offsets = [0, 4], sizes = [6, 4], strides = [1, 1]} : vector<6x8xf32> to vector<6x4xf32>
    %65 = arith.mulf %63, %64 : vector<6x4xf32>
    %cst_12 = arith.constant dense<0.000000e+00> : vector<6xf32>
    %66 = vector.multi_reduction <add>, %65, %cst_12 [1] : vector<6x4xf32> to vector<6xf32>
    %67 = vector.shape_cast %66 : vector<6xf32> to vector<6x1xf32>
    %68 = vector.extract_strided_slice %16 {offsets = [0, 4], sizes = [6, 4], strides = [1, 1]} : vector<6x8xf32> to vector<6x4xf32>
    %69 = arith.mulf %63, %68 : vector<6x4xf32>
    %cst_13 = arith.constant dense<0.000000e+00> : vector<6xf32>
    %70 = vector.multi_reduction <add>, %69, %cst_13 [1] : vector<6x4xf32> to vector<6xf32>
    %71 = vector.shape_cast %70 : vector<6xf32> to vector<6x1xf32>
    %72 = vector.extract_strided_slice %18 {offsets = [0, 4], sizes = [6, 4], strides = [1, 1]} : vector<6x8xf32> to vector<6x4xf32>
    %73 = arith.mulf %63, %72 : vector<6x4xf32>
    %cst_14 = arith.constant dense<0.000000e+00> : vector<6xf32>
    %74 = vector.multi_reduction <add>, %73, %cst_14 [1] : vector<6x4xf32> to vector<6xf32>
    %75 = vector.shape_cast %74 : vector<6xf32> to vector<6x1xf32>
    %76 = tpu.concatenate %67, %71, %75 in 1 : vector<6x1xf32>, vector<6x1xf32>, vector<6x1xf32> -> vector<6x3xf32>
    %cst_15 = arith.constant dense<0xFF800000> : vector<6xf32>
    %77 = vector.multi_reduction <maximumf>, %76, %cst_15 [1] : vector<6x3xf32> to vector<6xf32>
    %78 = vector.shape_cast %77 : vector<6xf32> to vector<6x1xf32>
    %79 = vector.broadcast %78 : vector<6x1xf32> to vector<6x3xf32>
    %80 = arith.subf %76, %79 : vector<6x3xf32>
    %81 = math.exp %80 : vector<6x3xf32>
    %cst_16 = arith.constant dense<0.000000e+00> : vector<6xf32>
    %82 = vector.multi_reduction <add>, %81, %cst_16 [1] : vector<6x3xf32> to vector<6xf32>
    %83 = vector.shape_cast %82 : vector<6xf32> to vector<6x1xf32>
    %84 = tpu.reciprocal %83 {approx = true} : vector<6x1xf32> -> vector<6x1xf32>
    %85 = vector.broadcast %84 : vector<6x1xf32> to vector<6x3xf32>
    %86 = arith.mulf %81, %85 : vector<6x3xf32>
    %87 = vector.extract_strided_slice %86 {offsets = [0, 0], sizes = [6, 1], strides = [1, 1]} : vector<6x3xf32> to vector<6x1xf32>
    %88 = vector.extract_strided_slice %20 {offsets = [0, 4], sizes = [6, 4], strides = [1, 1]} : vector<6x8xf32> to vector<6x4xf32>
    %89 = vector.broadcast %87 : vector<6x1xf32> to vector<6x4xf32>
    %90 = arith.mulf %89, %88 : vector<6x4xf32>
    %91 = vector.extract_strided_slice %86 {offsets = [0, 1], sizes = [6, 1], strides = [1, 1]} : vector<6x3xf32> to vector<6x1xf32>
    %92 = vector.extract_strided_slice %22 {offsets = [0, 4], sizes = [6, 4], strides = [1, 1]} : vector<6x8xf32> to vector<6x4xf32>
    %93 = vector.broadcast %91 : vector<6x1xf32> to vector<6x4xf32>
    %94 = arith.mulf %93, %92 : vector<6x4xf32>
    %95 = arith.addf %90, %94 : vector<6x4xf32>
    %96 = vector.extract_strided_slice %86 {offsets = [0, 2], sizes = [6, 1], strides = [1, 1]} : vector<6x3xf32> to vector<6x1xf32>
    %97 = vector.extract_strided_slice %24 {offsets = [0, 4], sizes = [6, 4], strides = [1, 1]} : vector<6x8xf32> to vector<6x4xf32>
    %98 = vector.broadcast %96 : vector<6x1xf32> to vector<6x4xf32>
    %99 = arith.mulf %98, %97 : vector<6x4xf32>
    %100 = arith.addf %95, %99 : vector<6x4xf32>
    %101 = tpu.concatenate %62, %100 in 1 : vector<6x4xf32>, vector<6x4xf32> -> vector<6x8xf32>
    %cst_17 = arith.constant dense<0.000000e+00> : vector<6x8xf32>
    %102 = tpu.matmul %101, %3, %cst_17 {dimension_numbers = #tpu.dot_dimension_numbers<[1], [0], [0], [1], [0, 0, 1, 1], [], []>} : vector<6x8xf32>, vector<8x8xf32>, vector<6x8xf32> -> vector<6x8xf32>
    %103 = vector.broadcast %4 : vector<1x8xf32> to vector<6x8xf32>
    %104 = arith.addf %102, %103 : vector<6x8xf32>
    %105 = vector.extract_strided_slice %104 {offsets = [0, 0], sizes = [1, 8], strides = [1, 1]} : vector<6x8xf32> to vector<1x8xf32>
    %106 = vector.extract_strided_slice %104 {offsets = [1, 0], sizes = [1, 8], strides = [1, 1]} : vector<6x8xf32> to vector<1x8xf32>
    %107 = vector.extract_strided_slice %104 {offsets = [2, 0], sizes = [1, 8], strides = [1, 1]} : vector<6x8xf32> to vector<1x8xf32>
    %108 = tpu.concatenate %105, %106, %107 in 1 : vector<1x8xf32>, vector<1x8xf32>, vector<1x8xf32> -> vector<1x24xf32>
    %109 = vector.extract_strided_slice %104 {offsets = [3, 0], sizes = [1, 8], strides = [1, 1]} : vector<6x8xf32> to vector<1x8xf32>
    %110 = vector.extract_strided_slice %104 {offsets = [4, 0], sizes = [1, 8], strides = [1, 1]} : vector<6x8xf32> to vector<1x8xf32>
    %111 = vector.extract_strided_slice %104 {offsets = [5, 0], sizes = [1, 8], strides = [1, 1]} : vector<6x8xf32> to vector<1x8xf32>
    %112 = tpu.concatenate %109, %110, %111 in 1 : vector<1x8xf32>, vector<1x8xf32>, vector<1x8xf32> -> vector<1x24xf32>
    %113 = tpu.concatenate %108, %112 in 0 : vector<1x24xf32>, vector<1x24xf32> -> vector<2x24xf32>
    %c232 = arith.constant 232 : index
    %c0_18 = arith.constant 0 : index
    %114 = vector.load %arg1[%c232, %c0_18] : memref<400x64xf32, #tpu.memory_space<vmem>>, vector<24x8xf32>
    %cst_19 = arith.constant dense<0.000000e+00> : vector<2x8xf32>
    %115 = tpu.matmul %113, %114, %cst_19 {dimension_numbers = #tpu.dot_dimension_numbers<[1], [0], [0], [1], [0, 0, 1, 1], [], []>} : vector<2x24xf32>, vector<24x8xf32>, vector<2x8xf32> -> vector<2x8xf32>
    %c256 = arith.constant 256 : index
    %c0_20 = arith.constant 0 : index
    %116 = vector.load %arg1[%c256, %c0_20] : memref<400x64xf32, #tpu.memory_space<vmem>>, vector<1x8xf32>
    %117 = vector.broadcast %116 : vector<1x8xf32> to vector<2x8xf32>
    %118 = arith.addf %115, %117 : vector<2x8xf32>
    %cst_21 = arith.constant 0.000000e+00 : f32
    %119 = vector.broadcast %cst_21 : f32 to vector<2x8xf32>
    %120 = arith.maximumf %118, %119 : vector<2x8xf32>
    %c8_22 = arith.constant 8 : index
    %c0_23 = arith.constant 0 : index
    %121 = vector.load %arg0[%c8_22, %c0_23] : memref<72x8xf32, #tpu.memory_space<vmem>>, vector<24x8xf32>
    %c64 = arith.constant 64 : index
    %c0_24 = arith.constant 0 : index
    %122 = vector.load %arg1[%c64, %c0_24] : memref<400x64xf32, #tpu.memory_space<vmem>>, vector<8x24xf32>
    %c72 = arith.constant 72 : index
    %c0_25 = arith.constant 0 : index
    %123 = vector.load %arg1[%c72, %c0_25] : memref<400x64xf32, #tpu.memory_space<vmem>>, vector<1x24xf32>
    %c80 = arith.constant 80 : index
    %c0_26 = arith.constant 0 : index
    %124 = vector.load %arg1[%c80, %c0_26] : memref<400x64xf32, #tpu.memory_space<vmem>>, vector<8x8xf32>
    %c88 = arith.constant 88 : index
    %c0_27 = arith.constant 0 : index
    %125 = vector.load %arg1[%c88, %c0_27] : memref<400x64xf32, #tpu.memory_space<vmem>>, vector<1x8xf32>
    %cst_28 = arith.constant dense<0.000000e+00> : vector<24x24xf32>
    %126 = tpu.matmul %121, %122, %cst_28 {dimension_numbers = #tpu.dot_dimension_numbers<[1], [0], [0], [1], [0, 0, 1, 1], [], []>} : vector<24x8xf32>, vector<8x24xf32>, vector<24x24xf32> -> vector<24x24xf32>
    %127 = vector.broadcast %123 : vector<1x24xf32> to vector<24x24xf32>
    %128 = arith.addf %126, %127 : vector<24x24xf32>
    %129 = vector.extract_strided_slice %128 {offsets = [0, 0], sizes = [24, 8], strides = [1, 1]} : vector<24x24xf32> to vector<24x8xf32>
    %cst_29 = arith.constant 5.000000e-01 : f32
    %130 = vector.broadcast %cst_29 : f32 to vector<24x8xf32>
    %131 = arith.mulf %129, %130 : vector<24x8xf32>
    %132 = vector.extract_strided_slice %128 {offsets = [0, 8], sizes = [24, 8], strides = [1, 1]} : vector<24x24xf32> to vector<24x8xf32>
    %133 = vector.extract_strided_slice %128 {offsets = [0, 16], sizes = [24, 8], strides = [1, 1]} : vector<24x24xf32> to vector<24x8xf32>
    %134 = vector.extract_strided_slice %132 {offsets = [0, 0], sizes = [12, 8], strides = [1, 1]} : vector<24x8xf32> to vector<12x8xf32>
    %135 = tpu.concatenate %134, %134 in 0 : vector<12x8xf32>, vector<12x8xf32> -> vector<24x8xf32>
    %136 = vector.extract_strided_slice %132 {offsets = [12, 0], sizes = [12, 8], strides = [1, 1]} : vector<24x8xf32> to vector<12x8xf32>
    %137 = tpu.concatenate %136, %136 in 0 : vector<12x8xf32>, vector<12x8xf32> -> vector<24x8xf32>
    %138 = vector.extract_strided_slice %133 {offsets = [0, 0], sizes = [12, 8], strides = [1, 1]} : vector<24x8xf32> to vector<12x8xf32>
    %139 = tpu.concatenate %138, %138 in 0 : vector<12x8xf32>, vector<12x8xf32> -> vector<24x8xf32>
    %140 = vector.extract_strided_slice %133 {offsets = [12, 0], sizes = [12, 8], strides = [1, 1]} : vector<24x8xf32> to vector<12x8xf32>
    %141 = tpu.concatenate %140, %140 in 0 : vector<12x8xf32>, vector<12x8xf32> -> vector<24x8xf32>
    %142 = vector.extract_strided_slice %131 {offsets = [0, 0], sizes = [24, 4], strides = [1, 1]} : vector<24x8xf32> to vector<24x4xf32>
    %143 = vector.extract_strided_slice %135 {offsets = [0, 0], sizes = [24, 4], strides = [1, 1]} : vector<24x8xf32> to vector<24x4xf32>
    %144 = arith.mulf %142, %143 : vector<24x4xf32>
    %cst_30 = arith.constant dense<0.000000e+00> : vector<24xf32>
    %145 = vector.multi_reduction <add>, %144, %cst_30 [1] : vector<24x4xf32> to vector<24xf32>
    %146 = vector.shape_cast %145 : vector<24xf32> to vector<24x1xf32>
    %147 = vector.extract_strided_slice %137 {offsets = [0, 0], sizes = [24, 4], strides = [1, 1]} : vector<24x8xf32> to vector<24x4xf32>
    %148 = arith.mulf %142, %147 : vector<24x4xf32>
    %cst_31 = arith.constant dense<0.000000e+00> : vector<24xf32>
    %149 = vector.multi_reduction <add>, %148, %cst_31 [1] : vector<24x4xf32> to vector<24xf32>
    %150 = vector.shape_cast %149 : vector<24xf32> to vector<24x1xf32>
    %151 = tpu.concatenate %146, %150 in 1 : vector<24x1xf32>, vector<24x1xf32> -> vector<24x2xf32>
    %cst_32 = arith.constant dense<0xFF800000> : vector<24xf32>
    %152 = vector.multi_reduction <maximumf>, %151, %cst_32 [1] : vector<24x2xf32> to vector<24xf32>
    %153 = vector.shape_cast %152 : vector<24xf32> to vector<24x1xf32>
    %154 = vector.broadcast %153 : vector<24x1xf32> to vector<24x2xf32>
    %155 = arith.subf %151, %154 : vector<24x2xf32>
    %156 = math.exp %155 : vector<24x2xf32>
    %cst_33 = arith.constant dense<0.000000e+00> : vector<24xf32>
    %157 = vector.multi_reduction <add>, %156, %cst_33 [1] : vector<24x2xf32> to vector<24xf32>
    %158 = vector.shape_cast %157 : vector<24xf32> to vector<24x1xf32>
    %159 = tpu.reciprocal %158 {approx = true} : vector<24x1xf32> -> vector<24x1xf32>
    %160 = vector.broadcast %159 : vector<24x1xf32> to vector<24x2xf32>
    %161 = arith.mulf %156, %160 : vector<24x2xf32>
    %162 = vector.extract_strided_slice %161 {offsets = [0, 0], sizes = [24, 1], strides = [1, 1]} : vector<24x2xf32> to vector<24x1xf32>
    %163 = vector.extract_strided_slice %139 {offsets = [0, 0], sizes = [24, 4], strides = [1, 1]} : vector<24x8xf32> to vector<24x4xf32>
    %164 = vector.broadcast %162 : vector<24x1xf32> to vector<24x4xf32>
    %165 = arith.mulf %164, %163 : vector<24x4xf32>
    %166 = vector.extract_strided_slice %161 {offsets = [0, 1], sizes = [24, 1], strides = [1, 1]} : vector<24x2xf32> to vector<24x1xf32>
    %167 = vector.extract_strided_slice %141 {offsets = [0, 0], sizes = [24, 4], strides = [1, 1]} : vector<24x8xf32> to vector<24x4xf32>
    %168 = vector.broadcast %166 : vector<24x1xf32> to vector<24x4xf32>
    %169 = arith.mulf %168, %167 : vector<24x4xf32>
    %170 = arith.addf %165, %169 : vector<24x4xf32>
    %171 = vector.extract_strided_slice %131 {offsets = [0, 4], sizes = [24, 4], strides = [1, 1]} : vector<24x8xf32> to vector<24x4xf32>
    %172 = vector.extract_strided_slice %135 {offsets = [0, 4], sizes = [24, 4], strides = [1, 1]} : vector<24x8xf32> to vector<24x4xf32>
    %173 = arith.mulf %171, %172 : vector<24x4xf32>
    %cst_34 = arith.constant dense<0.000000e+00> : vector<24xf32>
    %174 = vector.multi_reduction <add>, %173, %cst_34 [1] : vector<24x4xf32> to vector<24xf32>
    %175 = vector.shape_cast %174 : vector<24xf32> to vector<24x1xf32>
    %176 = vector.extract_strided_slice %137 {offsets = [0, 4], sizes = [24, 4], strides = [1, 1]} : vector<24x8xf32> to vector<24x4xf32>
    %177 = arith.mulf %171, %176 : vector<24x4xf32>
    %cst_35 = arith.constant dense<0.000000e+00> : vector<24xf32>
    %178 = vector.multi_reduction <add>, %177, %cst_35 [1] : vector<24x4xf32> to vector<24xf32>
    %179 = vector.shape_cast %178 : vector<24xf32> to vector<24x1xf32>
    %180 = tpu.concatenate %175, %179 in 1 : vector<24x1xf32>, vector<24x1xf32> -> vector<24x2xf32>
    %cst_36 = arith.constant dense<0xFF800000> : vector<24xf32>
    %181 = vector.multi_reduction <maximumf>, %180, %cst_36 [1] : vector<24x2xf32> to vector<24xf32>
    %182 = vector.shape_cast %181 : vector<24xf32> to vector<24x1xf32>
    %183 = vector.broadcast %182 : vector<24x1xf32> to vector<24x2xf32>
    %184 = arith.subf %180, %183 : vector<24x2xf32>
    %185 = math.exp %184 : vector<24x2xf32>
    %cst_37 = arith.constant dense<0.000000e+00> : vector<24xf32>
    %186 = vector.multi_reduction <add>, %185, %cst_37 [1] : vector<24x2xf32> to vector<24xf32>
    %187 = vector.shape_cast %186 : vector<24xf32> to vector<24x1xf32>
    %188 = tpu.reciprocal %187 {approx = true} : vector<24x1xf32> -> vector<24x1xf32>
    %189 = vector.broadcast %188 : vector<24x1xf32> to vector<24x2xf32>
    %190 = arith.mulf %185, %189 : vector<24x2xf32>
    %191 = vector.extract_strided_slice %190 {offsets = [0, 0], sizes = [24, 1], strides = [1, 1]} : vector<24x2xf32> to vector<24x1xf32>
    %192 = vector.extract_strided_slice %139 {offsets = [0, 4], sizes = [24, 4], strides = [1, 1]} : vector<24x8xf32> to vector<24x4xf32>
    %193 = vector.broadcast %191 : vector<24x1xf32> to vector<24x4xf32>
    %194 = arith.mulf %193, %192 : vector<24x4xf32>
    %195 = vector.extract_strided_slice %190 {offsets = [0, 1], sizes = [24, 1], strides = [1, 1]} : vector<24x2xf32> to vector<24x1xf32>
    %196 = vector.extract_strided_slice %141 {offsets = [0, 4], sizes = [24, 4], strides = [1, 1]} : vector<24x8xf32> to vector<24x4xf32>
    %197 = vector.broadcast %195 : vector<24x1xf32> to vector<24x4xf32>
    %198 = arith.mulf %197, %196 : vector<24x4xf32>
    %199 = arith.addf %194, %198 : vector<24x4xf32>
    %200 = tpu.concatenate %170, %199 in 1 : vector<24x4xf32>, vector<24x4xf32> -> vector<24x8xf32>
    %cst_38 = arith.constant dense<0.000000e+00> : vector<24x8xf32>
    %201 = tpu.matmul %200, %124, %cst_38 {dimension_numbers = #tpu.dot_dimension_numbers<[1], [0], [0], [1], [0, 0, 1, 1], [], []>} : vector<24x8xf32>, vector<8x8xf32>, vector<24x8xf32> -> vector<24x8xf32>
    %202 = vector.broadcast %125 : vector<1x8xf32> to vector<24x8xf32>
    %203 = arith.addf %201, %202 : vector<24x8xf32>
    %c264 = arith.constant 264 : index
    %c0_39 = arith.constant 0 : index
    %204 = vector.load %arg1[%c264, %c0_39] : memref<400x64xf32, #tpu.memory_space<vmem>>, vector<1x2xf32>
    %205 = vector.extract_strided_slice %203 {offsets = [0, 0], sizes = [12, 8], strides = [1, 1]} : vector<24x8xf32> to vector<12x8xf32>
    %206 = vector.extract_strided_slice %204 {offsets = [0, 0], sizes = [1, 1], strides = [1, 1]} : vector<1x2xf32> to vector<1x1xf32>
    %207 = vector.broadcast %206 : vector<1x1xf32> to vector<12x8xf32>
    %208 = arith.mulf %205, %207 : vector<12x8xf32>
    %209 = vector.extract_strided_slice %203 {offsets = [12, 0], sizes = [12, 8], strides = [1, 1]} : vector<24x8xf32> to vector<12x8xf32>
    %210 = vector.extract_strided_slice %204 {offsets = [0, 1], sizes = [1, 1], strides = [1, 1]} : vector<1x2xf32> to vector<1x1xf32>
    %211 = vector.broadcast %210 : vector<1x1xf32> to vector<12x8xf32>
    %212 = arith.mulf %209, %211 : vector<12x8xf32>
    %213 = arith.addf %208, %212 : vector<12x8xf32>
    %c272 = arith.constant 272 : index
    %c0_40 = arith.constant 0 : index
    %214 = vector.load %arg1[%c272, %c0_40] : memref<400x64xf32, #tpu.memory_space<vmem>>, vector<1x1xf32>
    %215 = vector.broadcast %214 : vector<1x1xf32> to vector<12x8xf32>
    %216 = arith.addf %213, %215 : vector<12x8xf32>
    %cst_41 = arith.constant 0.000000e+00 : f32
    %217 = vector.broadcast %cst_41 : f32 to vector<12x8xf32>
    %218 = arith.maximumf %216, %217 : vector<12x8xf32>
    %c200 = arith.constant 200 : index
    %c0_42 = arith.constant 0 : index
    %219 = vector.load %arg1[%c200, %c0_42] : memref<400x64xf32, #tpu.memory_space<vmem>>, vector<16x32xf32>
    %c216 = arith.constant 216 : index
    %c0_43 = arith.constant 0 : index
    %220 = vector.load %arg1[%c216, %c0_43] : memref<400x64xf32, #tpu.memory_space<vmem>>, vector<8x32xf32>
    %c224 = arith.constant 224 : index
    %c0_44 = arith.constant 0 : index
    %221 = vector.load %arg1[%c224, %c0_44] : memref<400x64xf32, #tpu.memory_space<vmem>>, vector<1x32xf32>
    %222 = vector.extract_strided_slice %218 {offsets = [10, 0], sizes = [2, 8], strides = [1, 1]} : vector<12x8xf32> to vector<2x8xf32>
    %223 = vector.extract_strided_slice %218 {offsets = [8, 0], sizes = [2, 8], strides = [1, 1]} : vector<12x8xf32> to vector<2x8xf32>
    %224 = vector.extract_strided_slice %218 {offsets = [6, 0], sizes = [2, 8], strides = [1, 1]} : vector<12x8xf32> to vector<2x8xf32>
    %225 = vector.extract_strided_slice %218 {offsets = [4, 0], sizes = [2, 8], strides = [1, 1]} : vector<12x8xf32> to vector<2x8xf32>
    %226 = vector.extract_strided_slice %218 {offsets = [2, 0], sizes = [2, 8], strides = [1, 1]} : vector<12x8xf32> to vector<2x8xf32>
    %227 = vector.extract_strided_slice %218 {offsets = [0, 0], sizes = [2, 8], strides = [1, 1]} : vector<12x8xf32> to vector<2x8xf32>
    %228 = tpu.concatenate %222, %223, %224, %225, %226, %227 in 0 : vector<2x8xf32>, vector<2x8xf32>, vector<2x8xf32>, vector<2x8xf32>, vector<2x8xf32>, vector<2x8xf32> -> vector<12x8xf32>
    %229 = tpu.concatenate %218, %228 in 1 : vector<12x8xf32>, vector<12x8xf32> -> vector<12x16xf32>
    %cst_45 = arith.constant dense<0.000000e+00> : vector<12x32xf32>
    %230 = tpu.matmul %229, %219, %cst_45 {dimension_numbers = #tpu.dot_dimension_numbers<[1], [0], [0], [1], [0, 0, 1, 1], [], []>} : vector<12x16xf32>, vector<16x32xf32>, vector<12x32xf32> -> vector<12x32xf32>
    %231 = vector.broadcast %221 : vector<1x32xf32> to vector<12x32xf32>
    %232 = arith.addf %230, %231 : vector<12x32xf32>
    %cst_46 = arith.constant 0.000000e+00 : f32
    %233 = vector.broadcast %cst_46 : f32 to vector<2x8xf32>
    %cst_47 = arith.constant 0.000000e+00 : f32
    %234 = vector.broadcast %cst_47 : f32 to vector<2x8xf32>
    %235 = vector.extract_strided_slice %232 {offsets = [0, 0], sizes = [2, 32], strides = [1, 1]} : vector<12x32xf32> to vector<2x32xf32>
    %cst_48 = arith.constant dense<0.000000e+00> : vector<2x32xf32>
    %236 = tpu.matmul %233, %220, %cst_48 {dimension_numbers = #tpu.dot_dimension_numbers<[1], [0], [0], [1], [0, 0, 1, 1], [], []>} : vector<2x8xf32>, vector<8x32xf32>, vector<2x32xf32> -> vector<2x32xf32>
    %237 = arith.addf %235, %236 : vector<2x32xf32>
    %238 = vector.extract_strided_slice %237 {offsets = [0, 0], sizes = [2, 24], strides = [1, 1]} : vector<2x32xf32> to vector<2x24xf32>
    %239 = arith.negf %238 : vector<2x24xf32>
    %240 = math.exp %239 : vector<2x24xf32>
    %cst_49 = arith.constant 1.000000e+00 : f32
    %241 = vector.broadcast %cst_49 : f32 to vector<2x24xf32>
    %242 = arith.addf %241, %240 : vector<2x24xf32>
    %243 = arith.divf %241, %242 : vector<2x24xf32>
    %244 = vector.extract_strided_slice %237 {offsets = [0, 24], sizes = [2, 8], strides = [1, 1]} : vector<2x32xf32> to vector<2x8xf32>
    %245 = math.tanh %244 : vector<2x8xf32>
    %246 = vector.extract_strided_slice %243 {offsets = [0, 8], sizes = [2, 8], strides = [1, 1]} : vector<2x24xf32> to vector<2x8xf32>
    %247 = arith.mulf %246, %234 : vector<2x8xf32>
    %248 = vector.extract_strided_slice %243 {offsets = [0, 0], sizes = [2, 8], strides = [1, 1]} : vector<2x24xf32> to vector<2x8xf32>
    %249 = arith.mulf %248, %245 : vector<2x8xf32>
    %250 = arith.addf %247, %249 : vector<2x8xf32>
    %251 = vector.extract_strided_slice %243 {offsets = [0, 16], sizes = [2, 8], strides = [1, 1]} : vector<2x24xf32> to vector<2x8xf32>
    %252 = math.tanh %250 : vector<2x8xf32>
    %253 = arith.mulf %251, %252 : vector<2x8xf32>
    %254 = vector.extract_strided_slice %253 {offsets = [0, 0], sizes = [2, 4], strides = [1, 1]} : vector<2x8xf32> to vector<2x4xf32>
    %255 = vector.extract_strided_slice %253 {offsets = [0, 4], sizes = [2, 4], strides = [1, 1]} : vector<2x8xf32> to vector<2x4xf32>
    %256 = vector.extract_strided_slice %232 {offsets = [2, 0], sizes = [2, 32], strides = [1, 1]} : vector<12x32xf32> to vector<2x32xf32>
    %cst_50 = arith.constant dense<0.000000e+00> : vector<2x32xf32>
    %257 = tpu.matmul %253, %220, %cst_50 {dimension_numbers = #tpu.dot_dimension_numbers<[1], [0], [0], [1], [0, 0, 1, 1], [], []>} : vector<2x8xf32>, vector<8x32xf32>, vector<2x32xf32> -> vector<2x32xf32>
    %258 = arith.addf %256, %257 : vector<2x32xf32>
    %259 = vector.extract_strided_slice %258 {offsets = [0, 0], sizes = [2, 24], strides = [1, 1]} : vector<2x32xf32> to vector<2x24xf32>
    %260 = arith.negf %259 : vector<2x24xf32>
    %261 = math.exp %260 : vector<2x24xf32>
    %cst_51 = arith.constant 1.000000e+00 : f32
    %262 = vector.broadcast %cst_51 : f32 to vector<2x24xf32>
    %263 = arith.addf %262, %261 : vector<2x24xf32>
    %264 = arith.divf %262, %263 : vector<2x24xf32>
    %265 = vector.extract_strided_slice %258 {offsets = [0, 24], sizes = [2, 8], strides = [1, 1]} : vector<2x32xf32> to vector<2x8xf32>
    %266 = math.tanh %265 : vector<2x8xf32>
    %267 = vector.extract_strided_slice %264 {offsets = [0, 8], sizes = [2, 8], strides = [1, 1]} : vector<2x24xf32> to vector<2x8xf32>
    %268 = arith.mulf %267, %250 : vector<2x8xf32>
    %269 = vector.extract_strided_slice %264 {offsets = [0, 0], sizes = [2, 8], strides = [1, 1]} : vector<2x24xf32> to vector<2x8xf32>
    %270 = arith.mulf %269, %266 : vector<2x8xf32>
    %271 = arith.addf %268, %270 : vector<2x8xf32>
    %272 = vector.extract_strided_slice %264 {offsets = [0, 16], sizes = [2, 8], strides = [1, 1]} : vector<2x24xf32> to vector<2x8xf32>
    %273 = math.tanh %271 : vector<2x8xf32>
    %274 = arith.mulf %272, %273 : vector<2x8xf32>
    %275 = vector.extract_strided_slice %274 {offsets = [0, 0], sizes = [2, 4], strides = [1, 1]} : vector<2x8xf32> to vector<2x4xf32>
    %276 = vector.extract_strided_slice %274 {offsets = [0, 4], sizes = [2, 4], strides = [1, 1]} : vector<2x8xf32> to vector<2x4xf32>
    %277 = vector.extract_strided_slice %232 {offsets = [4, 0], sizes = [2, 32], strides = [1, 1]} : vector<12x32xf32> to vector<2x32xf32>
    %cst_52 = arith.constant dense<0.000000e+00> : vector<2x32xf32>
    %278 = tpu.matmul %274, %220, %cst_52 {dimension_numbers = #tpu.dot_dimension_numbers<[1], [0], [0], [1], [0, 0, 1, 1], [], []>} : vector<2x8xf32>, vector<8x32xf32>, vector<2x32xf32> -> vector<2x32xf32>
    %279 = arith.addf %277, %278 : vector<2x32xf32>
    %280 = vector.extract_strided_slice %279 {offsets = [0, 0], sizes = [2, 24], strides = [1, 1]} : vector<2x32xf32> to vector<2x24xf32>
    %281 = arith.negf %280 : vector<2x24xf32>
    %282 = math.exp %281 : vector<2x24xf32>
    %cst_53 = arith.constant 1.000000e+00 : f32
    %283 = vector.broadcast %cst_53 : f32 to vector<2x24xf32>
    %284 = arith.addf %283, %282 : vector<2x24xf32>
    %285 = arith.divf %283, %284 : vector<2x24xf32>
    %286 = vector.extract_strided_slice %279 {offsets = [0, 24], sizes = [2, 8], strides = [1, 1]} : vector<2x32xf32> to vector<2x8xf32>
    %287 = math.tanh %286 : vector<2x8xf32>
    %288 = vector.extract_strided_slice %285 {offsets = [0, 8], sizes = [2, 8], strides = [1, 1]} : vector<2x24xf32> to vector<2x8xf32>
    %289 = arith.mulf %288, %271 : vector<2x8xf32>
    %290 = vector.extract_strided_slice %285 {offsets = [0, 0], sizes = [2, 8], strides = [1, 1]} : vector<2x24xf32> to vector<2x8xf32>
    %291 = arith.mulf %290, %287 : vector<2x8xf32>
    %292 = arith.addf %289, %291 : vector<2x8xf32>
    %293 = vector.extract_strided_slice %285 {offsets = [0, 16], sizes = [2, 8], strides = [1, 1]} : vector<2x24xf32> to vector<2x8xf32>
    %294 = math.tanh %292 : vector<2x8xf32>
    %295 = arith.mulf %293, %294 : vector<2x8xf32>
    %296 = vector.extract_strided_slice %295 {offsets = [0, 0], sizes = [2, 4], strides = [1, 1]} : vector<2x8xf32> to vector<2x4xf32>
    %297 = vector.extract_strided_slice %295 {offsets = [0, 4], sizes = [2, 4], strides = [1, 1]} : vector<2x8xf32> to vector<2x4xf32>
    %298 = vector.extract_strided_slice %232 {offsets = [6, 0], sizes = [2, 32], strides = [1, 1]} : vector<12x32xf32> to vector<2x32xf32>
    %cst_54 = arith.constant dense<0.000000e+00> : vector<2x32xf32>
    %299 = tpu.matmul %295, %220, %cst_54 {dimension_numbers = #tpu.dot_dimension_numbers<[1], [0], [0], [1], [0, 0, 1, 1], [], []>} : vector<2x8xf32>, vector<8x32xf32>, vector<2x32xf32> -> vector<2x32xf32>
    %300 = arith.addf %298, %299 : vector<2x32xf32>
    %301 = vector.extract_strided_slice %300 {offsets = [0, 0], sizes = [2, 24], strides = [1, 1]} : vector<2x32xf32> to vector<2x24xf32>
    %302 = arith.negf %301 : vector<2x24xf32>
    %303 = math.exp %302 : vector<2x24xf32>
    %cst_55 = arith.constant 1.000000e+00 : f32
    %304 = vector.broadcast %cst_55 : f32 to vector<2x24xf32>
    %305 = arith.addf %304, %303 : vector<2x24xf32>
    %306 = arith.divf %304, %305 : vector<2x24xf32>
    %307 = vector.extract_strided_slice %300 {offsets = [0, 24], sizes = [2, 8], strides = [1, 1]} : vector<2x32xf32> to vector<2x8xf32>
    %308 = math.tanh %307 : vector<2x8xf32>
    %309 = vector.extract_strided_slice %306 {offsets = [0, 8], sizes = [2, 8], strides = [1, 1]} : vector<2x24xf32> to vector<2x8xf32>
    %310 = arith.mulf %309, %292 : vector<2x8xf32>
    %311 = vector.extract_strided_slice %306 {offsets = [0, 0], sizes = [2, 8], strides = [1, 1]} : vector<2x24xf32> to vector<2x8xf32>
    %312 = arith.mulf %311, %308 : vector<2x8xf32>
    %313 = arith.addf %310, %312 : vector<2x8xf32>
    %314 = vector.extract_strided_slice %306 {offsets = [0, 16], sizes = [2, 8], strides = [1, 1]} : vector<2x24xf32> to vector<2x8xf32>
    %315 = math.tanh %313 : vector<2x8xf32>
    %316 = arith.mulf %314, %315 : vector<2x8xf32>
    %317 = vector.extract_strided_slice %316 {offsets = [0, 0], sizes = [2, 4], strides = [1, 1]} : vector<2x8xf32> to vector<2x4xf32>
    %318 = vector.extract_strided_slice %316 {offsets = [0, 4], sizes = [2, 4], strides = [1, 1]} : vector<2x8xf32> to vector<2x4xf32>
    %319 = vector.extract_strided_slice %232 {offsets = [8, 0], sizes = [2, 32], strides = [1, 1]} : vector<12x32xf32> to vector<2x32xf32>
    %cst_56 = arith.constant dense<0.000000e+00> : vector<2x32xf32>
    %320 = tpu.matmul %316, %220, %cst_56 {dimension_numbers = #tpu.dot_dimension_numbers<[1], [0], [0], [1], [0, 0, 1, 1], [], []>} : vector<2x8xf32>, vector<8x32xf32>, vector<2x32xf32> -> vector<2x32xf32>
    %321 = arith.addf %319, %320 : vector<2x32xf32>
    %322 = vector.extract_strided_slice %321 {offsets = [0, 0], sizes = [2, 24], strides = [1, 1]} : vector<2x32xf32> to vector<2x24xf32>
    %323 = arith.negf %322 : vector<2x24xf32>
    %324 = math.exp %323 : vector<2x24xf32>
    %cst_57 = arith.constant 1.000000e+00 : f32
    %325 = vector.broadcast %cst_57 : f32 to vector<2x24xf32>
    %326 = arith.addf %325, %324 : vector<2x24xf32>
    %327 = arith.divf %325, %326 : vector<2x24xf32>
    %328 = vector.extract_strided_slice %321 {offsets = [0, 24], sizes = [2, 8], strides = [1, 1]} : vector<2x32xf32> to vector<2x8xf32>
    %329 = math.tanh %328 : vector<2x8xf32>
    %330 = vector.extract_strided_slice %327 {offsets = [0, 8], sizes = [2, 8], strides = [1, 1]} : vector<2x24xf32> to vector<2x8xf32>
    %331 = arith.mulf %330, %313 : vector<2x8xf32>
    %332 = vector.extract_strided_slice %327 {offsets = [0, 0], sizes = [2, 8], strides = [1, 1]} : vector<2x24xf32> to vector<2x8xf32>
    %333 = arith.mulf %332, %329 : vector<2x8xf32>
    %334 = arith.addf %331, %333 : vector<2x8xf32>
    %335 = vector.extract_strided_slice %327 {offsets = [0, 16], sizes = [2, 8], strides = [1, 1]} : vector<2x24xf32> to vector<2x8xf32>
    %336 = math.tanh %334 : vector<2x8xf32>
    %337 = arith.mulf %335, %336 : vector<2x8xf32>
    %338 = vector.extract_strided_slice %337 {offsets = [0, 0], sizes = [2, 4], strides = [1, 1]} : vector<2x8xf32> to vector<2x4xf32>
    %339 = vector.extract_strided_slice %337 {offsets = [0, 4], sizes = [2, 4], strides = [1, 1]} : vector<2x8xf32> to vector<2x4xf32>
    %340 = vector.extract_strided_slice %232 {offsets = [10, 0], sizes = [2, 32], strides = [1, 1]} : vector<12x32xf32> to vector<2x32xf32>
    %cst_58 = arith.constant dense<0.000000e+00> : vector<2x32xf32>
    %341 = tpu.matmul %337, %220, %cst_58 {dimension_numbers = #tpu.dot_dimension_numbers<[1], [0], [0], [1], [0, 0, 1, 1], [], []>} : vector<2x8xf32>, vector<8x32xf32>, vector<2x32xf32> -> vector<2x32xf32>
    %342 = arith.addf %340, %341 : vector<2x32xf32>
    %343 = vector.extract_strided_slice %342 {offsets = [0, 0], sizes = [2, 24], strides = [1, 1]} : vector<2x32xf32> to vector<2x24xf32>
    %344 = arith.negf %343 : vector<2x24xf32>
    %345 = math.exp %344 : vector<2x24xf32>
    %cst_59 = arith.constant 1.000000e+00 : f32
    %346 = vector.broadcast %cst_59 : f32 to vector<2x24xf32>
    %347 = arith.addf %346, %345 : vector<2x24xf32>
    %348 = arith.divf %346, %347 : vector<2x24xf32>
    %349 = vector.extract_strided_slice %342 {offsets = [0, 24], sizes = [2, 8], strides = [1, 1]} : vector<2x32xf32> to vector<2x8xf32>
    %350 = math.tanh %349 : vector<2x8xf32>
    %351 = vector.extract_strided_slice %348 {offsets = [0, 8], sizes = [2, 8], strides = [1, 1]} : vector<2x24xf32> to vector<2x8xf32>
    %352 = arith.mulf %351, %334 : vector<2x8xf32>
    %353 = vector.extract_strided_slice %348 {offsets = [0, 0], sizes = [2, 8], strides = [1, 1]} : vector<2x24xf32> to vector<2x8xf32>
    %354 = arith.mulf %353, %350 : vector<2x8xf32>
    %355 = arith.addf %352, %354 : vector<2x8xf32>
    %356 = vector.extract_strided_slice %348 {offsets = [0, 16], sizes = [2, 8], strides = [1, 1]} : vector<2x24xf32> to vector<2x8xf32>
    %357 = math.tanh %355 : vector<2x8xf32>
    %358 = arith.mulf %356, %357 : vector<2x8xf32>
    %359 = vector.extract_strided_slice %358 {offsets = [0, 0], sizes = [2, 4], strides = [1, 1]} : vector<2x8xf32> to vector<2x4xf32>
    %360 = vector.extract_strided_slice %358 {offsets = [0, 4], sizes = [2, 4], strides = [1, 1]} : vector<2x8xf32> to vector<2x4xf32>
    %361 = tpu.concatenate %254, %360 in 1 : vector<2x4xf32>, vector<2x4xf32> -> vector<2x8xf32>
    %362 = tpu.concatenate %275, %339 in 1 : vector<2x4xf32>, vector<2x4xf32> -> vector<2x8xf32>
    %363 = tpu.concatenate %296, %318 in 1 : vector<2x4xf32>, vector<2x4xf32> -> vector<2x8xf32>
    %364 = tpu.concatenate %317, %297 in 1 : vector<2x4xf32>, vector<2x4xf32> -> vector<2x8xf32>
    %365 = tpu.concatenate %338, %276 in 1 : vector<2x4xf32>, vector<2x4xf32> -> vector<2x8xf32>
    %366 = tpu.concatenate %359, %255 in 1 : vector<2x4xf32>, vector<2x4xf32> -> vector<2x8xf32>
    %c32 = arith.constant 32 : index
    %c0_60 = arith.constant 0 : index
    %367 = vector.load %arg0[%c32, %c0_60] : memref<72x8xf32, #tpu.memory_space<vmem>>, vector<24x8xf32>
    %c32_61 = arith.constant 32 : index
    %c0_62 = arith.constant 0 : index
    %368 = vector.load %arg1[%c32_61, %c0_62] : memref<400x64xf32, #tpu.memory_space<vmem>>, vector<8x24xf32>
    %c40 = arith.constant 40 : index
    %c0_63 = arith.constant 0 : index
    %369 = vector.load %arg1[%c40, %c0_63] : memref<400x64xf32, #tpu.memory_space<vmem>>, vector<1x24xf32>
    %c48 = arith.constant 48 : index
    %c0_64 = arith.constant 0 : index
    %370 = vector.load %arg1[%c48, %c0_64] : memref<400x64xf32, #tpu.memory_space<vmem>>, vector<8x8xf32>
    %c56 = arith.constant 56 : index
    %c0_65 = arith.constant 0 : index
    %371 = vector.load %arg1[%c56, %c0_65] : memref<400x64xf32, #tpu.memory_space<vmem>>, vector<1x8xf32>
    %cst_66 = arith.constant dense<0.000000e+00> : vector<24x24xf32>
    %372 = tpu.matmul %367, %368, %cst_66 {dimension_numbers = #tpu.dot_dimension_numbers<[1], [0], [0], [1], [0, 0, 1, 1], [], []>} : vector<24x8xf32>, vector<8x24xf32>, vector<24x24xf32> -> vector<24x24xf32>
    %373 = vector.broadcast %369 : vector<1x24xf32> to vector<24x24xf32>
    %374 = arith.addf %372, %373 : vector<24x24xf32>
    %375 = vector.extract_strided_slice %374 {offsets = [0, 0], sizes = [24, 8], strides = [1, 1]} : vector<24x24xf32> to vector<24x8xf32>
    %cst_67 = arith.constant 5.000000e-01 : f32
    %376 = vector.broadcast %cst_67 : f32 to vector<24x8xf32>
    %377 = arith.mulf %375, %376 : vector<24x8xf32>
    %378 = vector.extract_strided_slice %374 {offsets = [0, 8], sizes = [24, 8], strides = [1, 1]} : vector<24x24xf32> to vector<24x8xf32>
    %379 = vector.extract_strided_slice %374 {offsets = [0, 16], sizes = [24, 8], strides = [1, 1]} : vector<24x24xf32> to vector<24x8xf32>
    %380 = vector.extract_strided_slice %378 {offsets = [0, 0], sizes = [8, 8], strides = [1, 1]} : vector<24x8xf32> to vector<8x8xf32>
    %381 = tpu.concatenate %380, %380, %380 in 0 : vector<8x8xf32>, vector<8x8xf32>, vector<8x8xf32> -> vector<24x8xf32>
    %382 = vector.extract_strided_slice %378 {offsets = [8, 0], sizes = [8, 8], strides = [1, 1]} : vector<24x8xf32> to vector<8x8xf32>
    %383 = tpu.concatenate %382, %382, %382 in 0 : vector<8x8xf32>, vector<8x8xf32>, vector<8x8xf32> -> vector<24x8xf32>
    %384 = vector.extract_strided_slice %378 {offsets = [16, 0], sizes = [8, 8], strides = [1, 1]} : vector<24x8xf32> to vector<8x8xf32>
    %385 = tpu.concatenate %384, %384, %384 in 0 : vector<8x8xf32>, vector<8x8xf32>, vector<8x8xf32> -> vector<24x8xf32>
    %386 = vector.extract_strided_slice %379 {offsets = [0, 0], sizes = [8, 8], strides = [1, 1]} : vector<24x8xf32> to vector<8x8xf32>
    %387 = tpu.concatenate %386, %386, %386 in 0 : vector<8x8xf32>, vector<8x8xf32>, vector<8x8xf32> -> vector<24x8xf32>
    %388 = vector.extract_strided_slice %379 {offsets = [8, 0], sizes = [8, 8], strides = [1, 1]} : vector<24x8xf32> to vector<8x8xf32>
    %389 = tpu.concatenate %388, %388, %388 in 0 : vector<8x8xf32>, vector<8x8xf32>, vector<8x8xf32> -> vector<24x8xf32>
    %390 = vector.extract_strided_slice %379 {offsets = [16, 0], sizes = [8, 8], strides = [1, 1]} : vector<24x8xf32> to vector<8x8xf32>
    %391 = tpu.concatenate %390, %390, %390 in 0 : vector<8x8xf32>, vector<8x8xf32>, vector<8x8xf32> -> vector<24x8xf32>
    %392 = vector.extract_strided_slice %377 {offsets = [0, 0], sizes = [24, 4], strides = [1, 1]} : vector<24x8xf32> to vector<24x4xf32>
    %393 = vector.extract_strided_slice %381 {offsets = [0, 0], sizes = [24, 4], strides = [1, 1]} : vector<24x8xf32> to vector<24x4xf32>
    %394 = arith.mulf %392, %393 : vector<24x4xf32>
    %cst_68 = arith.constant dense<0.000000e+00> : vector<24xf32>
    %395 = vector.multi_reduction <add>, %394, %cst_68 [1] : vector<24x4xf32> to vector<24xf32>
    %396 = vector.shape_cast %395 : vector<24xf32> to vector<24x1xf32>
    %397 = vector.extract_strided_slice %383 {offsets = [0, 0], sizes = [24, 4], strides = [1, 1]} : vector<24x8xf32> to vector<24x4xf32>
    %398 = arith.mulf %392, %397 : vector<24x4xf32>
    %cst_69 = arith.constant dense<0.000000e+00> : vector<24xf32>
    %399 = vector.multi_reduction <add>, %398, %cst_69 [1] : vector<24x4xf32> to vector<24xf32>
    %400 = vector.shape_cast %399 : vector<24xf32> to vector<24x1xf32>
    %401 = vector.extract_strided_slice %385 {offsets = [0, 0], sizes = [24, 4], strides = [1, 1]} : vector<24x8xf32> to vector<24x4xf32>
    %402 = arith.mulf %392, %401 : vector<24x4xf32>
    %cst_70 = arith.constant dense<0.000000e+00> : vector<24xf32>
    %403 = vector.multi_reduction <add>, %402, %cst_70 [1] : vector<24x4xf32> to vector<24xf32>
    %404 = vector.shape_cast %403 : vector<24xf32> to vector<24x1xf32>
    %405 = tpu.concatenate %396, %400, %404 in 1 : vector<24x1xf32>, vector<24x1xf32>, vector<24x1xf32> -> vector<24x3xf32>
    %cst_71 = arith.constant dense<0xFF800000> : vector<24xf32>
    %406 = vector.multi_reduction <maximumf>, %405, %cst_71 [1] : vector<24x3xf32> to vector<24xf32>
    %407 = vector.shape_cast %406 : vector<24xf32> to vector<24x1xf32>
    %408 = vector.broadcast %407 : vector<24x1xf32> to vector<24x3xf32>
    %409 = arith.subf %405, %408 : vector<24x3xf32>
    %410 = math.exp %409 : vector<24x3xf32>
    %cst_72 = arith.constant dense<0.000000e+00> : vector<24xf32>
    %411 = vector.multi_reduction <add>, %410, %cst_72 [1] : vector<24x3xf32> to vector<24xf32>
    %412 = vector.shape_cast %411 : vector<24xf32> to vector<24x1xf32>
    %413 = tpu.reciprocal %412 {approx = true} : vector<24x1xf32> -> vector<24x1xf32>
    %414 = vector.broadcast %413 : vector<24x1xf32> to vector<24x3xf32>
    %415 = arith.mulf %410, %414 : vector<24x3xf32>
    %416 = vector.extract_strided_slice %415 {offsets = [0, 0], sizes = [24, 1], strides = [1, 1]} : vector<24x3xf32> to vector<24x1xf32>
    %417 = vector.extract_strided_slice %387 {offsets = [0, 0], sizes = [24, 4], strides = [1, 1]} : vector<24x8xf32> to vector<24x4xf32>
    %418 = vector.broadcast %416 : vector<24x1xf32> to vector<24x4xf32>
    %419 = arith.mulf %418, %417 : vector<24x4xf32>
    %420 = vector.extract_strided_slice %415 {offsets = [0, 1], sizes = [24, 1], strides = [1, 1]} : vector<24x3xf32> to vector<24x1xf32>
    %421 = vector.extract_strided_slice %389 {offsets = [0, 0], sizes = [24, 4], strides = [1, 1]} : vector<24x8xf32> to vector<24x4xf32>
    %422 = vector.broadcast %420 : vector<24x1xf32> to vector<24x4xf32>
    %423 = arith.mulf %422, %421 : vector<24x4xf32>
    %424 = arith.addf %419, %423 : vector<24x4xf32>
    %425 = vector.extract_strided_slice %415 {offsets = [0, 2], sizes = [24, 1], strides = [1, 1]} : vector<24x3xf32> to vector<24x1xf32>
    %426 = vector.extract_strided_slice %391 {offsets = [0, 0], sizes = [24, 4], strides = [1, 1]} : vector<24x8xf32> to vector<24x4xf32>
    %427 = vector.broadcast %425 : vector<24x1xf32> to vector<24x4xf32>
    %428 = arith.mulf %427, %426 : vector<24x4xf32>
    %429 = arith.addf %424, %428 : vector<24x4xf32>
    %430 = vector.extract_strided_slice %377 {offsets = [0, 4], sizes = [24, 4], strides = [1, 1]} : vector<24x8xf32> to vector<24x4xf32>
    %431 = vector.extract_strided_slice %381 {offsets = [0, 4], sizes = [24, 4], strides = [1, 1]} : vector<24x8xf32> to vector<24x4xf32>
    %432 = arith.mulf %430, %431 : vector<24x4xf32>
    %cst_73 = arith.constant dense<0.000000e+00> : vector<24xf32>
    %433 = vector.multi_reduction <add>, %432, %cst_73 [1] : vector<24x4xf32> to vector<24xf32>
    %434 = vector.shape_cast %433 : vector<24xf32> to vector<24x1xf32>
    %435 = vector.extract_strided_slice %383 {offsets = [0, 4], sizes = [24, 4], strides = [1, 1]} : vector<24x8xf32> to vector<24x4xf32>
    %436 = arith.mulf %430, %435 : vector<24x4xf32>
    %cst_74 = arith.constant dense<0.000000e+00> : vector<24xf32>
    %437 = vector.multi_reduction <add>, %436, %cst_74 [1] : vector<24x4xf32> to vector<24xf32>
    %438 = vector.shape_cast %437 : vector<24xf32> to vector<24x1xf32>
    %439 = vector.extract_strided_slice %385 {offsets = [0, 4], sizes = [24, 4], strides = [1, 1]} : vector<24x8xf32> to vector<24x4xf32>
    %440 = arith.mulf %430, %439 : vector<24x4xf32>
    %cst_75 = arith.constant dense<0.000000e+00> : vector<24xf32>
    %441 = vector.multi_reduction <add>, %440, %cst_75 [1] : vector<24x4xf32> to vector<24xf32>
    %442 = vector.shape_cast %441 : vector<24xf32> to vector<24x1xf32>
    %443 = tpu.concatenate %434, %438, %442 in 1 : vector<24x1xf32>, vector<24x1xf32>, vector<24x1xf32> -> vector<24x3xf32>
    %cst_76 = arith.constant dense<0xFF800000> : vector<24xf32>
    %444 = vector.multi_reduction <maximumf>, %443, %cst_76 [1] : vector<24x3xf32> to vector<24xf32>
    %445 = vector.shape_cast %444 : vector<24xf32> to vector<24x1xf32>
    %446 = vector.broadcast %445 : vector<24x1xf32> to vector<24x3xf32>
    %447 = arith.subf %443, %446 : vector<24x3xf32>
    %448 = math.exp %447 : vector<24x3xf32>
    %cst_77 = arith.constant dense<0.000000e+00> : vector<24xf32>
    %449 = vector.multi_reduction <add>, %448, %cst_77 [1] : vector<24x3xf32> to vector<24xf32>
    %450 = vector.shape_cast %449 : vector<24xf32> to vector<24x1xf32>
    %451 = tpu.reciprocal %450 {approx = true} : vector<24x1xf32> -> vector<24x1xf32>
    %452 = vector.broadcast %451 : vector<24x1xf32> to vector<24x3xf32>
    %453 = arith.mulf %448, %452 : vector<24x3xf32>
    %454 = vector.extract_strided_slice %453 {offsets = [0, 0], sizes = [24, 1], strides = [1, 1]} : vector<24x3xf32> to vector<24x1xf32>
    %455 = vector.extract_strided_slice %387 {offsets = [0, 4], sizes = [24, 4], strides = [1, 1]} : vector<24x8xf32> to vector<24x4xf32>
    %456 = vector.broadcast %454 : vector<24x1xf32> to vector<24x4xf32>
    %457 = arith.mulf %456, %455 : vector<24x4xf32>
    %458 = vector.extract_strided_slice %453 {offsets = [0, 1], sizes = [24, 1], strides = [1, 1]} : vector<24x3xf32> to vector<24x1xf32>
    %459 = vector.extract_strided_slice %389 {offsets = [0, 4], sizes = [24, 4], strides = [1, 1]} : vector<24x8xf32> to vector<24x4xf32>
    %460 = vector.broadcast %458 : vector<24x1xf32> to vector<24x4xf32>
    %461 = arith.mulf %460, %459 : vector<24x4xf32>
    %462 = arith.addf %457, %461 : vector<24x4xf32>
    %463 = vector.extract_strided_slice %453 {offsets = [0, 2], sizes = [24, 1], strides = [1, 1]} : vector<24x3xf32> to vector<24x1xf32>
    %464 = vector.extract_strided_slice %391 {offsets = [0, 4], sizes = [24, 4], strides = [1, 1]} : vector<24x8xf32> to vector<24x4xf32>
    %465 = vector.broadcast %463 : vector<24x1xf32> to vector<24x4xf32>
    %466 = arith.mulf %465, %464 : vector<24x4xf32>
    %467 = arith.addf %462, %466 : vector<24x4xf32>
    %468 = tpu.concatenate %429, %467 in 1 : vector<24x4xf32>, vector<24x4xf32> -> vector<24x8xf32>
    %cst_78 = arith.constant dense<0.000000e+00> : vector<24x8xf32>
    %469 = tpu.matmul %468, %370, %cst_78 {dimension_numbers = #tpu.dot_dimension_numbers<[1], [0], [0], [1], [0, 0, 1, 1], [], []>} : vector<24x8xf32>, vector<8x8xf32>, vector<24x8xf32> -> vector<24x8xf32>
    %470 = vector.broadcast %371 : vector<1x8xf32> to vector<24x8xf32>
    %471 = arith.addf %469, %470 : vector<24x8xf32>
    %472 = vector.extract_strided_slice %471 {offsets = [0, 0], sizes = [8, 8], strides = [1, 1]} : vector<24x8xf32> to vector<8x8xf32>
    %473 = vector.extract_strided_slice %471 {offsets = [8, 0], sizes = [8, 8], strides = [1, 1]} : vector<24x8xf32> to vector<8x8xf32>
    %474 = vector.extract_strided_slice %471 {offsets = [16, 0], sizes = [8, 8], strides = [1, 1]} : vector<24x8xf32> to vector<8x8xf32>
    %475 = tpu.concatenate %472, %473, %474 in 1 : vector<8x8xf32>, vector<8x8xf32>, vector<8x8xf32> -> vector<8x24xf32>
    %c128 = arith.constant 128 : index
    %c0_79 = arith.constant 0 : index
    %476 = vector.load %arg1[%c128, %c0_79] : memref<400x64xf32, #tpu.memory_space<vmem>>, vector<48x64xf32>
    %c176 = arith.constant 176 : index
    %c0_80 = arith.constant 0 : index
    %477 = vector.load %arg1[%c176, %c0_80] : memref<400x64xf32, #tpu.memory_space<vmem>>, vector<16x64xf32>
    %c192 = arith.constant 192 : index
    %c0_81 = arith.constant 0 : index
    %478 = vector.load %arg1[%c192, %c0_81] : memref<400x64xf32, #tpu.memory_space<vmem>>, vector<1x64xf32>
    %479 = vector.extract_strided_slice %475 {offsets = [6, 0], sizes = [2, 24], strides = [1, 1]} : vector<8x24xf32> to vector<2x24xf32>
    %480 = vector.extract_strided_slice %475 {offsets = [4, 0], sizes = [2, 24], strides = [1, 1]} : vector<8x24xf32> to vector<2x24xf32>
    %481 = vector.extract_strided_slice %475 {offsets = [2, 0], sizes = [2, 24], strides = [1, 1]} : vector<8x24xf32> to vector<2x24xf32>
    %482 = vector.extract_strided_slice %475 {offsets = [0, 0], sizes = [2, 24], strides = [1, 1]} : vector<8x24xf32> to vector<2x24xf32>
    %483 = tpu.concatenate %479, %480, %481, %482 in 0 : vector<2x24xf32>, vector<2x24xf32>, vector<2x24xf32>, vector<2x24xf32> -> vector<8x24xf32>
    %484 = tpu.concatenate %475, %483 in 1 : vector<8x24xf32>, vector<8x24xf32> -> vector<8x48xf32>
    %cst_82 = arith.constant dense<0.000000e+00> : vector<8x64xf32>
    %485 = tpu.matmul %484, %476, %cst_82 {dimension_numbers = #tpu.dot_dimension_numbers<[1], [0], [0], [1], [0, 0, 1, 1], [], []>} : vector<8x48xf32>, vector<48x64xf32>, vector<8x64xf32> -> vector<8x64xf32>
    %486 = vector.broadcast %478 : vector<1x64xf32> to vector<8x64xf32>
    %487 = arith.addf %485, %486 : vector<8x64xf32>
    %cst_83 = arith.constant 0.000000e+00 : f32
    %488 = vector.broadcast %cst_83 : f32 to vector<2x16xf32>
    %cst_84 = arith.constant 0.000000e+00 : f32
    %489 = vector.broadcast %cst_84 : f32 to vector<2x16xf32>
    %490 = vector.extract_strided_slice %487 {offsets = [0, 0], sizes = [2, 64], strides = [1, 1]} : vector<8x64xf32> to vector<2x64xf32>
    %cst_85 = arith.constant dense<0.000000e+00> : vector<2x64xf32>
    %491 = tpu.matmul %488, %477, %cst_85 {dimension_numbers = #tpu.dot_dimension_numbers<[1], [0], [0], [1], [0, 0, 1, 1], [], []>} : vector<2x16xf32>, vector<16x64xf32>, vector<2x64xf32> -> vector<2x64xf32>
    %492 = arith.addf %490, %491 : vector<2x64xf32>
    %493 = vector.extract_strided_slice %492 {offsets = [0, 0], sizes = [2, 48], strides = [1, 1]} : vector<2x64xf32> to vector<2x48xf32>
    %494 = arith.negf %493 : vector<2x48xf32>
    %495 = math.exp %494 : vector<2x48xf32>
    %cst_86 = arith.constant 1.000000e+00 : f32
    %496 = vector.broadcast %cst_86 : f32 to vector<2x48xf32>
    %497 = arith.addf %496, %495 : vector<2x48xf32>
    %498 = arith.divf %496, %497 : vector<2x48xf32>
    %499 = vector.extract_strided_slice %492 {offsets = [0, 48], sizes = [2, 16], strides = [1, 1]} : vector<2x64xf32> to vector<2x16xf32>
    %500 = math.tanh %499 : vector<2x16xf32>
    %501 = vector.extract_strided_slice %498 {offsets = [0, 16], sizes = [2, 16], strides = [1, 1]} : vector<2x48xf32> to vector<2x16xf32>
    %502 = arith.mulf %501, %489 : vector<2x16xf32>
    %503 = vector.extract_strided_slice %498 {offsets = [0, 0], sizes = [2, 16], strides = [1, 1]} : vector<2x48xf32> to vector<2x16xf32>
    %504 = arith.mulf %503, %500 : vector<2x16xf32>
    %505 = arith.addf %502, %504 : vector<2x16xf32>
    %506 = vector.extract_strided_slice %498 {offsets = [0, 32], sizes = [2, 16], strides = [1, 1]} : vector<2x48xf32> to vector<2x16xf32>
    %507 = math.tanh %505 : vector<2x16xf32>
    %508 = arith.mulf %506, %507 : vector<2x16xf32>
    %509 = vector.extract_strided_slice %508 {offsets = [0, 0], sizes = [2, 8], strides = [1, 1]} : vector<2x16xf32> to vector<2x8xf32>
    %510 = vector.extract_strided_slice %508 {offsets = [0, 8], sizes = [2, 8], strides = [1, 1]} : vector<2x16xf32> to vector<2x8xf32>
    %511 = vector.extract_strided_slice %487 {offsets = [2, 0], sizes = [2, 64], strides = [1, 1]} : vector<8x64xf32> to vector<2x64xf32>
    %cst_87 = arith.constant dense<0.000000e+00> : vector<2x64xf32>
    %512 = tpu.matmul %508, %477, %cst_87 {dimension_numbers = #tpu.dot_dimension_numbers<[1], [0], [0], [1], [0, 0, 1, 1], [], []>} : vector<2x16xf32>, vector<16x64xf32>, vector<2x64xf32> -> vector<2x64xf32>
    %513 = arith.addf %511, %512 : vector<2x64xf32>
    %514 = vector.extract_strided_slice %513 {offsets = [0, 0], sizes = [2, 48], strides = [1, 1]} : vector<2x64xf32> to vector<2x48xf32>
    %515 = arith.negf %514 : vector<2x48xf32>
    %516 = math.exp %515 : vector<2x48xf32>
    %cst_88 = arith.constant 1.000000e+00 : f32
    %517 = vector.broadcast %cst_88 : f32 to vector<2x48xf32>
    %518 = arith.addf %517, %516 : vector<2x48xf32>
    %519 = arith.divf %517, %518 : vector<2x48xf32>
    %520 = vector.extract_strided_slice %513 {offsets = [0, 48], sizes = [2, 16], strides = [1, 1]} : vector<2x64xf32> to vector<2x16xf32>
    %521 = math.tanh %520 : vector<2x16xf32>
    %522 = vector.extract_strided_slice %519 {offsets = [0, 16], sizes = [2, 16], strides = [1, 1]} : vector<2x48xf32> to vector<2x16xf32>
    %523 = arith.mulf %522, %505 : vector<2x16xf32>
    %524 = vector.extract_strided_slice %519 {offsets = [0, 0], sizes = [2, 16], strides = [1, 1]} : vector<2x48xf32> to vector<2x16xf32>
    %525 = arith.mulf %524, %521 : vector<2x16xf32>
    %526 = arith.addf %523, %525 : vector<2x16xf32>
    %527 = vector.extract_strided_slice %519 {offsets = [0, 32], sizes = [2, 16], strides = [1, 1]} : vector<2x48xf32> to vector<2x16xf32>
    %528 = math.tanh %526 : vector<2x16xf32>
    %529 = arith.mulf %527, %528 : vector<2x16xf32>
    %530 = vector.extract_strided_slice %529 {offsets = [0, 0], sizes = [2, 8], strides = [1, 1]} : vector<2x16xf32> to vector<2x8xf32>
    %531 = vector.extract_strided_slice %529 {offsets = [0, 8], sizes = [2, 8], strides = [1, 1]} : vector<2x16xf32> to vector<2x8xf32>
    %532 = vector.extract_strided_slice %487 {offsets = [4, 0], sizes = [2, 64], strides = [1, 1]} : vector<8x64xf32> to vector<2x64xf32>
    %cst_89 = arith.constant dense<0.000000e+00> : vector<2x64xf32>
    %533 = tpu.matmul %529, %477, %cst_89 {dimension_numbers = #tpu.dot_dimension_numbers<[1], [0], [0], [1], [0, 0, 1, 1], [], []>} : vector<2x16xf32>, vector<16x64xf32>, vector<2x64xf32> -> vector<2x64xf32>
    %534 = arith.addf %532, %533 : vector<2x64xf32>
    %535 = vector.extract_strided_slice %534 {offsets = [0, 0], sizes = [2, 48], strides = [1, 1]} : vector<2x64xf32> to vector<2x48xf32>
    %536 = arith.negf %535 : vector<2x48xf32>
    %537 = math.exp %536 : vector<2x48xf32>
    %cst_90 = arith.constant 1.000000e+00 : f32
    %538 = vector.broadcast %cst_90 : f32 to vector<2x48xf32>
    %539 = arith.addf %538, %537 : vector<2x48xf32>
    %540 = arith.divf %538, %539 : vector<2x48xf32>
    %541 = vector.extract_strided_slice %534 {offsets = [0, 48], sizes = [2, 16], strides = [1, 1]} : vector<2x64xf32> to vector<2x16xf32>
    %542 = math.tanh %541 : vector<2x16xf32>
    %543 = vector.extract_strided_slice %540 {offsets = [0, 16], sizes = [2, 16], strides = [1, 1]} : vector<2x48xf32> to vector<2x16xf32>
    %544 = arith.mulf %543, %526 : vector<2x16xf32>
    %545 = vector.extract_strided_slice %540 {offsets = [0, 0], sizes = [2, 16], strides = [1, 1]} : vector<2x48xf32> to vector<2x16xf32>
    %546 = arith.mulf %545, %542 : vector<2x16xf32>
    %547 = arith.addf %544, %546 : vector<2x16xf32>
    %548 = vector.extract_strided_slice %540 {offsets = [0, 32], sizes = [2, 16], strides = [1, 1]} : vector<2x48xf32> to vector<2x16xf32>
    %549 = math.tanh %547 : vector<2x16xf32>
    %550 = arith.mulf %548, %549 : vector<2x16xf32>
    %551 = vector.extract_strided_slice %550 {offsets = [0, 0], sizes = [2, 8], strides = [1, 1]} : vector<2x16xf32> to vector<2x8xf32>
    %552 = vector.extract_strided_slice %550 {offsets = [0, 8], sizes = [2, 8], strides = [1, 1]} : vector<2x16xf32> to vector<2x8xf32>
    %553 = vector.extract_strided_slice %487 {offsets = [6, 0], sizes = [2, 64], strides = [1, 1]} : vector<8x64xf32> to vector<2x64xf32>
    %cst_91 = arith.constant dense<0.000000e+00> : vector<2x64xf32>
    %554 = tpu.matmul %550, %477, %cst_91 {dimension_numbers = #tpu.dot_dimension_numbers<[1], [0], [0], [1], [0, 0, 1, 1], [], []>} : vector<2x16xf32>, vector<16x64xf32>, vector<2x64xf32> -> vector<2x64xf32>
    %555 = arith.addf %553, %554 : vector<2x64xf32>
    %556 = vector.extract_strided_slice %555 {offsets = [0, 0], sizes = [2, 48], strides = [1, 1]} : vector<2x64xf32> to vector<2x48xf32>
    %557 = arith.negf %556 : vector<2x48xf32>
    %558 = math.exp %557 : vector<2x48xf32>
    %cst_92 = arith.constant 1.000000e+00 : f32
    %559 = vector.broadcast %cst_92 : f32 to vector<2x48xf32>
    %560 = arith.addf %559, %558 : vector<2x48xf32>
    %561 = arith.divf %559, %560 : vector<2x48xf32>
    %562 = vector.extract_strided_slice %555 {offsets = [0, 48], sizes = [2, 16], strides = [1, 1]} : vector<2x64xf32> to vector<2x16xf32>
    %563 = math.tanh %562 : vector<2x16xf32>
    %564 = vector.extract_strided_slice %561 {offsets = [0, 16], sizes = [2, 16], strides = [1, 1]} : vector<2x48xf32> to vector<2x16xf32>
    %565 = arith.mulf %564, %547 : vector<2x16xf32>
    %566 = vector.extract_strided_slice %561 {offsets = [0, 0], sizes = [2, 16], strides = [1, 1]} : vector<2x48xf32> to vector<2x16xf32>
    %567 = arith.mulf %566, %563 : vector<2x16xf32>
    %568 = arith.addf %565, %567 : vector<2x16xf32>
    %569 = vector.extract_strided_slice %561 {offsets = [0, 32], sizes = [2, 16], strides = [1, 1]} : vector<2x48xf32> to vector<2x16xf32>
    %570 = math.tanh %568 : vector<2x16xf32>
    %571 = arith.mulf %569, %570 : vector<2x16xf32>
    %572 = vector.extract_strided_slice %571 {offsets = [0, 0], sizes = [2, 8], strides = [1, 1]} : vector<2x16xf32> to vector<2x8xf32>
    %573 = vector.extract_strided_slice %571 {offsets = [0, 8], sizes = [2, 8], strides = [1, 1]} : vector<2x16xf32> to vector<2x8xf32>
    %574 = tpu.concatenate %509, %573 in 1 : vector<2x8xf32>, vector<2x8xf32> -> vector<2x16xf32>
    %575 = tpu.concatenate %530, %552 in 1 : vector<2x8xf32>, vector<2x8xf32> -> vector<2x16xf32>
    %576 = tpu.concatenate %551, %531 in 1 : vector<2x8xf32>, vector<2x8xf32> -> vector<2x16xf32>
    %577 = tpu.concatenate %572, %510 in 1 : vector<2x8xf32>, vector<2x8xf32> -> vector<2x16xf32>
    %578 = tpu.concatenate %365, %366 in 0 : vector<2x8xf32>, vector<2x8xf32> -> vector<4x8xf32>
    %579 = tpu.concatenate %361, %362, %363, %364 in 0 : vector<2x8xf32>, vector<2x8xf32>, vector<2x8xf32>, vector<2x8xf32> -> vector<8x8xf32>
    %c96 = arith.constant 96 : index
    %c0_93 = arith.constant 0 : index
    %580 = vector.load %arg1[%c96, %c0_93] : memref<400x64xf32, #tpu.memory_space<vmem>>, vector<8x8xf32>
    %c104 = arith.constant 104 : index
    %c0_94 = arith.constant 0 : index
    %581 = vector.load %arg1[%c104, %c0_94] : memref<400x64xf32, #tpu.memory_space<vmem>>, vector<1x8xf32>
    %c112 = arith.constant 112 : index
    %c0_95 = arith.constant 0 : index
    %582 = vector.load %arg1[%c112, %c0_95] : memref<400x64xf32, #tpu.memory_space<vmem>>, vector<8x8xf32>
    %c120 = arith.constant 120 : index
    %c0_96 = arith.constant 0 : index
    %583 = vector.load %arg1[%c120, %c0_96] : memref<400x64xf32, #tpu.memory_space<vmem>>, vector<1x8xf32>
    %cst_97 = arith.constant dense<0.000000e+00> : vector<4x8xf32>
    %584 = tpu.matmul %578, %580, %cst_97 {dimension_numbers = #tpu.dot_dimension_numbers<[1], [0], [0], [1], [0, 0, 1, 1], [], []>} : vector<4x8xf32>, vector<8x8xf32>, vector<4x8xf32> -> vector<4x8xf32>
    %585 = vector.broadcast %581 : vector<1x8xf32> to vector<4x8xf32>
    %586 = arith.addf %584, %585 : vector<4x8xf32>
    %cst_98 = arith.constant 5.000000e-01 : f32
    %587 = vector.broadcast %cst_98 : f32 to vector<4x8xf32>
    %588 = arith.mulf %586, %587 : vector<4x8xf32>
    %cst_99 = arith.constant dense<0.000000e+00> : vector<8x8xf32>
    %589 = tpu.matmul %579, %582, %cst_99 {dimension_numbers = #tpu.dot_dimension_numbers<[1], [0], [0], [1], [0, 0, 1, 1], [], []>} : vector<8x8xf32>, vector<8x8xf32>, vector<8x8xf32> -> vector<8x8xf32>
    %590 = vector.broadcast %583 : vector<1x8xf32> to vector<8x8xf32>
    %591 = arith.addf %589, %590 : vector<8x8xf32>
    %592 = vector.extract_strided_slice %591 {offsets = [0, 0], sizes = [2, 8], strides = [1, 1]} : vector<8x8xf32> to vector<2x8xf32>
    %593 = tpu.concatenate %592, %592 in 0 : vector<2x8xf32>, vector<2x8xf32> -> vector<4x8xf32>
    %594 = vector.extract_strided_slice %591 {offsets = [2, 0], sizes = [2, 8], strides = [1, 1]} : vector<8x8xf32> to vector<2x8xf32>
    %595 = tpu.concatenate %594, %594 in 0 : vector<2x8xf32>, vector<2x8xf32> -> vector<4x8xf32>
    %596 = vector.extract_strided_slice %591 {offsets = [4, 0], sizes = [2, 8], strides = [1, 1]} : vector<8x8xf32> to vector<2x8xf32>
    %597 = tpu.concatenate %596, %596 in 0 : vector<2x8xf32>, vector<2x8xf32> -> vector<4x8xf32>
    %598 = vector.extract_strided_slice %591 {offsets = [6, 0], sizes = [2, 8], strides = [1, 1]} : vector<8x8xf32> to vector<2x8xf32>
    %599 = tpu.concatenate %598, %598 in 0 : vector<2x8xf32>, vector<2x8xf32> -> vector<4x8xf32>
    %cst_100 = arith.constant 0.000000e+00 : f32
    %600 = vector.broadcast %cst_100 : f32 to vector<4x4xf32>
    %601 = vector.extract_strided_slice %588 {offsets = [0, 0], sizes = [4, 4], strides = [1, 1]} : vector<4x8xf32> to vector<4x4xf32>
    %602 = vector.extract_strided_slice %593 {offsets = [0, 0], sizes = [4, 4], strides = [1, 1]} : vector<4x8xf32> to vector<4x4xf32>
    %603 = arith.mulf %601, %602 : vector<4x4xf32>
    %cst_101 = arith.constant dense<0.000000e+00> : vector<4xf32>
    %604 = vector.multi_reduction <add>, %603, %cst_101 [1] : vector<4x4xf32> to vector<4xf32>
    %605 = vector.shape_cast %604 : vector<4xf32> to vector<4x1xf32>
    %606 = vector.extract_strided_slice %595 {offsets = [0, 0], sizes = [4, 4], strides = [1, 1]} : vector<4x8xf32> to vector<4x4xf32>
    %607 = arith.mulf %601, %606 : vector<4x4xf32>
    %cst_102 = arith.constant dense<0.000000e+00> : vector<4xf32>
    %608 = vector.multi_reduction <add>, %607, %cst_102 [1] : vector<4x4xf32> to vector<4xf32>
    %609 = vector.shape_cast %608 : vector<4xf32> to vector<4x1xf32>
    %610 = vector.extract_strided_slice %597 {offsets = [0, 0], sizes = [4, 4], strides = [1, 1]} : vector<4x8xf32> to vector<4x4xf32>
    %611 = arith.mulf %601, %610 : vector<4x4xf32>
    %cst_103 = arith.constant dense<0.000000e+00> : vector<4xf32>
    %612 = vector.multi_reduction <add>, %611, %cst_103 [1] : vector<4x4xf32> to vector<4xf32>
    %613 = vector.shape_cast %612 : vector<4xf32> to vector<4x1xf32>
    %614 = vector.extract_strided_slice %599 {offsets = [0, 0], sizes = [4, 4], strides = [1, 1]} : vector<4x8xf32> to vector<4x4xf32>
    %615 = arith.mulf %601, %614 : vector<4x4xf32>
    %cst_104 = arith.constant dense<0.000000e+00> : vector<4xf32>
    %616 = vector.multi_reduction <add>, %615, %cst_104 [1] : vector<4x4xf32> to vector<4xf32>
    %617 = vector.shape_cast %616 : vector<4xf32> to vector<4x1xf32>
    %618 = tpu.concatenate %605, %609, %613, %617 in 1 : vector<4x1xf32>, vector<4x1xf32>, vector<4x1xf32>, vector<4x1xf32> -> vector<4x4xf32>
    %cst_105 = arith.constant dense<0xFF800000> : vector<4xf32>
    %619 = vector.multi_reduction <maximumf>, %618, %cst_105 [1] : vector<4x4xf32> to vector<4xf32>
    %620 = vector.shape_cast %619 : vector<4xf32> to vector<4x1xf32>
    %621 = vector.broadcast %620 : vector<4x1xf32> to vector<4x4xf32>
    %622 = arith.subf %618, %621 : vector<4x4xf32>
    %623 = math.exp %622 : vector<4x4xf32>
    %cst_106 = arith.constant dense<0.000000e+00> : vector<4xf32>
    %624 = vector.multi_reduction <add>, %623, %cst_106 [1] : vector<4x4xf32> to vector<4xf32>
    %625 = vector.shape_cast %624 : vector<4xf32> to vector<4x1xf32>
    %626 = tpu.reciprocal %625 {approx = true} : vector<4x1xf32> -> vector<4x1xf32>
    %627 = vector.broadcast %626 : vector<4x1xf32> to vector<4x4xf32>
    %628 = arith.mulf %623, %627 : vector<4x4xf32>
    %629 = arith.addf %600, %628 : vector<4x4xf32>
    %630 = vector.extract_strided_slice %588 {offsets = [0, 4], sizes = [4, 4], strides = [1, 1]} : vector<4x8xf32> to vector<4x4xf32>
    %631 = vector.extract_strided_slice %593 {offsets = [0, 4], sizes = [4, 4], strides = [1, 1]} : vector<4x8xf32> to vector<4x4xf32>
    %632 = arith.mulf %630, %631 : vector<4x4xf32>
    %cst_107 = arith.constant dense<0.000000e+00> : vector<4xf32>
    %633 = vector.multi_reduction <add>, %632, %cst_107 [1] : vector<4x4xf32> to vector<4xf32>
    %634 = vector.shape_cast %633 : vector<4xf32> to vector<4x1xf32>
    %635 = vector.extract_strided_slice %595 {offsets = [0, 4], sizes = [4, 4], strides = [1, 1]} : vector<4x8xf32> to vector<4x4xf32>
    %636 = arith.mulf %630, %635 : vector<4x4xf32>
    %cst_108 = arith.constant dense<0.000000e+00> : vector<4xf32>
    %637 = vector.multi_reduction <add>, %636, %cst_108 [1] : vector<4x4xf32> to vector<4xf32>
    %638 = vector.shape_cast %637 : vector<4xf32> to vector<4x1xf32>
    %639 = vector.extract_strided_slice %597 {offsets = [0, 4], sizes = [4, 4], strides = [1, 1]} : vector<4x8xf32> to vector<4x4xf32>
    %640 = arith.mulf %630, %639 : vector<4x4xf32>
    %cst_109 = arith.constant dense<0.000000e+00> : vector<4xf32>
    %641 = vector.multi_reduction <add>, %640, %cst_109 [1] : vector<4x4xf32> to vector<4xf32>
    %642 = vector.shape_cast %641 : vector<4xf32> to vector<4x1xf32>
    %643 = vector.extract_strided_slice %599 {offsets = [0, 4], sizes = [4, 4], strides = [1, 1]} : vector<4x8xf32> to vector<4x4xf32>
    %644 = arith.mulf %630, %643 : vector<4x4xf32>
    %cst_110 = arith.constant dense<0.000000e+00> : vector<4xf32>
    %645 = vector.multi_reduction <add>, %644, %cst_110 [1] : vector<4x4xf32> to vector<4xf32>
    %646 = vector.shape_cast %645 : vector<4xf32> to vector<4x1xf32>
    %647 = tpu.concatenate %634, %638, %642, %646 in 1 : vector<4x1xf32>, vector<4x1xf32>, vector<4x1xf32>, vector<4x1xf32> -> vector<4x4xf32>
    %cst_111 = arith.constant dense<0xFF800000> : vector<4xf32>
    %648 = vector.multi_reduction <maximumf>, %647, %cst_111 [1] : vector<4x4xf32> to vector<4xf32>
    %649 = vector.shape_cast %648 : vector<4xf32> to vector<4x1xf32>
    %650 = vector.broadcast %649 : vector<4x1xf32> to vector<4x4xf32>
    %651 = arith.subf %647, %650 : vector<4x4xf32>
    %652 = math.exp %651 : vector<4x4xf32>
    %cst_112 = arith.constant dense<0.000000e+00> : vector<4xf32>
    %653 = vector.multi_reduction <add>, %652, %cst_112 [1] : vector<4x4xf32> to vector<4xf32>
    %654 = vector.shape_cast %653 : vector<4xf32> to vector<4x1xf32>
    %655 = tpu.reciprocal %654 {approx = true} : vector<4x1xf32> -> vector<4x1xf32>
    %656 = vector.broadcast %655 : vector<4x1xf32> to vector<4x4xf32>
    %657 = arith.mulf %652, %656 : vector<4x4xf32>
    %658 = arith.addf %629, %657 : vector<4x4xf32>
    %cst_113 = arith.constant 5.000000e-01 : f32
    %659 = vector.broadcast %cst_113 : f32 to vector<4x4xf32>
    %660 = arith.mulf %658, %659 : vector<4x4xf32>
    %c376 = arith.constant 376 : index
    %c0_114 = arith.constant 0 : index
    %661 = vector.load %arg1[%c376, %c0_114] : memref<400x64xf32, #tpu.memory_space<vmem>>, vector<8x1xf32>
    %cst_115 = arith.constant dense<0.000000e+00> : vector<4x1xf32>
    %662 = tpu.matmul %578, %661, %cst_115 {dimension_numbers = #tpu.dot_dimension_numbers<[1], [0], [0], [1], [0, 0, 1, 1], [], []>} : vector<4x8xf32>, vector<8x1xf32>, vector<4x1xf32> -> vector<4x1xf32>
    %c384 = arith.constant 384 : index
    %c0_116 = arith.constant 0 : index
    %663 = vector.load %arg1[%c384, %c0_116] : memref<400x64xf32, #tpu.memory_space<vmem>>, vector<1x1xf32>
    %664 = vector.broadcast %663 : vector<1x1xf32> to vector<4x1xf32>
    %665 = arith.addf %662, %664 : vector<4x1xf32>
    %666 = arith.negf %665 : vector<4x1xf32>
    %667 = math.exp %666 : vector<4x1xf32>
    %cst_117 = arith.constant 1.000000e+00 : f32
    %668 = vector.broadcast %cst_117 : f32 to vector<4x1xf32>
    %669 = arith.addf %668, %667 : vector<4x1xf32>
    %670 = arith.divf %668, %669 : vector<4x1xf32>
    %c392 = arith.constant 392 : index
    %c0_118 = arith.constant 0 : index
    %671 = vector.load %arg1[%c392, %c0_118] : memref<400x64xf32, #tpu.memory_space<vmem>>, vector<4x4xf32>
    %672 = vector.broadcast %670 : vector<4x1xf32> to vector<4x4xf32>
    %673 = arith.mulf %671, %672 : vector<4x4xf32>
    %674 = math.exp %673 : vector<4x4xf32>
    %675 = arith.addf %660, %674 : vector<4x4xf32>
    %cst_119 = arith.constant 0.000000e+00 : f32
    %676 = vector.broadcast %cst_119 : f32 to vector<4x16xf32>
    %677 = tpu.concatenate %574, %574 in 0 : vector<2x16xf32>, vector<2x16xf32> -> vector<4x16xf32>
    %678 = vector.extract_strided_slice %675 {offsets = [0, 0], sizes = [4, 1], strides = [1, 1]} : vector<4x4xf32> to vector<4x1xf32>
    %679 = vector.broadcast %678 : vector<4x1xf32> to vector<4x16xf32>
    %680 = arith.mulf %679, %677 : vector<4x16xf32>
    %681 = arith.addf %676, %680 : vector<4x16xf32>
    %682 = tpu.concatenate %575, %575 in 0 : vector<2x16xf32>, vector<2x16xf32> -> vector<4x16xf32>
    %683 = vector.extract_strided_slice %675 {offsets = [0, 1], sizes = [4, 1], strides = [1, 1]} : vector<4x4xf32> to vector<4x1xf32>
    %684 = vector.broadcast %683 : vector<4x1xf32> to vector<4x16xf32>
    %685 = arith.mulf %684, %682 : vector<4x16xf32>
    %686 = arith.addf %681, %685 : vector<4x16xf32>
    %687 = tpu.concatenate %576, %576 in 0 : vector<2x16xf32>, vector<2x16xf32> -> vector<4x16xf32>
    %688 = vector.extract_strided_slice %675 {offsets = [0, 2], sizes = [4, 1], strides = [1, 1]} : vector<4x4xf32> to vector<4x1xf32>
    %689 = vector.broadcast %688 : vector<4x1xf32> to vector<4x16xf32>
    %690 = arith.mulf %689, %687 : vector<4x16xf32>
    %691 = arith.addf %686, %690 : vector<4x16xf32>
    %692 = tpu.concatenate %577, %577 in 0 : vector<2x16xf32>, vector<2x16xf32> -> vector<4x16xf32>
    %693 = vector.extract_strided_slice %675 {offsets = [0, 3], sizes = [4, 1], strides = [1, 1]} : vector<4x4xf32> to vector<4x1xf32>
    %694 = vector.broadcast %693 : vector<4x1xf32> to vector<4x16xf32>
    %695 = arith.mulf %694, %692 : vector<4x16xf32>
    %696 = arith.addf %691, %695 : vector<4x16xf32>
    %697 = tpu.concatenate %120, %120 in 0 : vector<2x8xf32>, vector<2x8xf32> -> vector<4x8xf32>
    %698 = tpu.concatenate %696, %697, %578 in 1 : vector<4x16xf32>, vector<4x8xf32>, vector<4x8xf32> -> vector<4x32xf32>
    %c280 = arith.constant 280 : index
    %c0_120 = arith.constant 0 : index
    %699 = vector.load %arg1[%c280, %c0_120] : memref<400x64xf32, #tpu.memory_space<vmem>>, vector<32x3xf32>
    %cst_121 = arith.constant dense<0.000000e+00> : vector<4x3xf32>
    %700 = tpu.matmul %698, %699, %cst_121 {dimension_numbers = #tpu.dot_dimension_numbers<[1], [0], [0], [1], [0, 0, 1, 1], [], []>} : vector<4x32xf32>, vector<32x3xf32>, vector<4x3xf32> -> vector<4x3xf32>
    %c312 = arith.constant 312 : index
    %c0_122 = arith.constant 0 : index
    %701 = vector.load %arg1[%c312, %c0_122] : memref<400x64xf32, #tpu.memory_space<vmem>>, vector<1x3xf32>
    %702 = vector.broadcast %701 : vector<1x3xf32> to vector<4x3xf32>
    %703 = arith.addf %700, %702 : vector<4x3xf32>
    %704 = arith.negf %703 : vector<4x3xf32>
    %705 = math.exp %704 : vector<4x3xf32>
    %cst_123 = arith.constant 1.000000e+00 : f32
    %706 = vector.broadcast %cst_123 : f32 to vector<4x3xf32>
    %707 = arith.addf %706, %705 : vector<4x3xf32>
    %708 = arith.divf %706, %707 : vector<4x3xf32>
    %cst_124 = arith.constant dense<0xFF800000> : vector<4xf32>
    %709 = vector.multi_reduction <maximumf>, %708, %cst_124 [1] : vector<4x3xf32> to vector<4xf32>
    %710 = vector.shape_cast %709 : vector<4xf32> to vector<4x1xf32>
    %cst_125 = arith.constant dense<0xFF800000> : vector<4xf32>
    %711 = vector.multi_reduction <maximumf>, %578, %cst_125 [1] : vector<4x8xf32> to vector<4xf32>
    %712 = vector.shape_cast %711 : vector<4xf32> to vector<4x1xf32>
    %713 = vector.extract_strided_slice %710 {offsets = [0, 0], sizes = [2, 1], strides = [1, 1]} : vector<4x1xf32> to vector<2x1xf32>
    %714 = vector.extract_strided_slice %710 {offsets = [2, 0], sizes = [2, 1], strides = [1, 1]} : vector<4x1xf32> to vector<2x1xf32>
    %715 = vector.extract_strided_slice %696 {offsets = [0, 0], sizes = [2, 16], strides = [1, 1]} : vector<4x16xf32> to vector<2x16xf32>
    %716 = vector.extract_strided_slice %696 {offsets = [2, 0], sizes = [2, 16], strides = [1, 1]} : vector<4x16xf32> to vector<2x16xf32>
    %717 = vector.extract_strided_slice %712 {offsets = [0, 0], sizes = [2, 1], strides = [1, 1]} : vector<4x1xf32> to vector<2x1xf32>
    %718 = vector.extract_strided_slice %712 {offsets = [2, 0], sizes = [2, 1], strides = [1, 1]} : vector<4x1xf32> to vector<2x1xf32>
    %719 = tpu.concatenate %713, %714, %715, %716, %717, %718, %120 in 1 : vector<2x1xf32>, vector<2x1xf32>, vector<2x16xf32>, vector<2x16xf32>, vector<2x1xf32>, vector<2x1xf32>, vector<2x8xf32> -> vector<2x44xf32>
    %c320 = arith.constant 320 : index
    %c0_126 = arith.constant 0 : index
    %720 = vector.load %arg1[%c320, %c0_126] : memref<400x64xf32, #tpu.memory_space<vmem>>, vector<44x1xf32>
    %cst_127 = arith.constant dense<0.000000e+00> : vector<2x1xf32>
    %721 = tpu.matmul %719, %720, %cst_127 {dimension_numbers = #tpu.dot_dimension_numbers<[1], [0], [0], [1], [0, 0, 1, 1], [], []>} : vector<2x44xf32>, vector<44x1xf32>, vector<2x1xf32> -> vector<2x1xf32>
    %c368 = arith.constant 368 : index
    %c0_128 = arith.constant 0 : index
    %722 = vector.load %arg1[%c368, %c0_128] : memref<400x64xf32, #tpu.memory_space<vmem>>, vector<1x1xf32>
    %723 = vector.broadcast %722 : vector<1x1xf32> to vector<2x1xf32>
    %724 = arith.addf %721, %723 : vector<2x1xf32>
    %725 = arith.negf %724 : vector<2x1xf32>
    %726 = math.exp %725 : vector<2x1xf32>
    %cst_129 = arith.constant 1.000000e+00 : f32
    %727 = vector.broadcast %cst_129 : f32 to vector<2x1xf32>
    %728 = arith.addf %727, %726 : vector<2x1xf32>
    %729 = arith.divf %727, %728 : vector<2x1xf32>
    %c64_130 = arith.constant 64 : index
    %c0_131 = arith.constant 0 : index
    %730 = vector.load %arg0[%c64_130, %c0_131] : memref<72x8xf32, #tpu.memory_space<vmem>>, vector<2x1xf32>
    %731 = arith.subf %729, %730 : vector<2x1xf32>
    %732 = arith.mulf %731, %731 : vector<2x1xf32>
    %cst_132 = arith.constant dense<0.000000e+00> : vector<1xf32>
    %733 = vector.multi_reduction <add>, %732, %cst_132 [0] : vector<2x1xf32> to vector<1xf32>
    %734 = vector.shape_cast %733 : vector<1xf32> to vector<1x1xf32>
    %cst_133 = arith.constant 5.000000e-01 : f32
    %735 = vector.broadcast %cst_133 : f32 to vector<1x1xf32>
    %736 = arith.mulf %734, %735 : vector<1x1xf32>
    %c56_134 = arith.constant 56 : index
    %c0_135 = arith.constant 0 : index
    %737 = vector.load %arg0[%c56_134, %c0_135] : memref<72x8xf32, #tpu.memory_space<vmem>>, vector<4x3xf32>
    %738 = math.log %708 : vector<4x3xf32>
    %cst_136 = arith.constant -1.000000e+02 : f32
    %739 = vector.broadcast %cst_136 : f32 to vector<4x3xf32>
    %740 = arith.maximumf %738, %739 : vector<4x3xf32>
    %cst_137 = arith.constant 1.000000e+00 : f32
    %741 = vector.broadcast %cst_137 : f32 to vector<4x3xf32>
    %742 = arith.subf %741, %708 : vector<4x3xf32>
    %743 = math.log %742 : vector<4x3xf32>
    %cst_138 = arith.constant -1.000000e+02 : f32
    %744 = vector.broadcast %cst_138 : f32 to vector<4x3xf32>
    %745 = arith.maximumf %743, %744 : vector<4x3xf32>
    %746 = arith.mulf %737, %740 : vector<4x3xf32>
    %cst_139 = arith.constant 1.000000e+00 : f32
    %747 = vector.broadcast %cst_139 : f32 to vector<4x3xf32>
    %748 = arith.subf %747, %737 : vector<4x3xf32>
    %749 = arith.mulf %748, %745 : vector<4x3xf32>
    %750 = arith.addf %746, %749 : vector<4x3xf32>
    %cst_140 = arith.constant 0.000000e+00 : f32
    %751 = vector.broadcast %cst_140 : f32 to vector<4x3xf32>
    %752 = arith.subf %751, %750 : vector<4x3xf32>
    %cst_141 = arith.constant dense<0.000000e+00> : vector<4xf32>
    %753 = vector.multi_reduction <add>, %752, %cst_141 [1] : vector<4x3xf32> to vector<4xf32>
    %754 = vector.shape_cast %753 : vector<4xf32> to vector<4x1xf32>
    %cst_142 = arith.constant dense<0.000000e+00> : vector<1xf32>
    %755 = vector.multi_reduction <add>, %754, %cst_142 [0] : vector<4x1xf32> to vector<1xf32>
    %756 = vector.shape_cast %755 : vector<1xf32> to vector<1x1xf32>
    %cst_143 = arith.constant 5.000000e-01 : f32
    %757 = vector.broadcast %cst_143 : f32 to vector<1x1xf32>
    %758 = arith.mulf %757, %756 : vector<1x1xf32>
    %cst_144 = arith.constant 0.0833333358 : f32
    %759 = vector.broadcast %cst_144 : f32 to vector<1x1xf32>
    %760 = arith.mulf %758, %759 : vector<1x1xf32>
    %761 = arith.addf %736, %760 : vector<1x1xf32>
    %cst_145 = arith.constant 0.000000e+00 : f32
    %762 = vector.broadcast %cst_145 : f32 to vector<8x128xf32>
    %c0_146 = arith.constant 0 : index
    %c0_147 = arith.constant 0 : index
    %763 = vector.load %arg2[%c0_146, %c0_147] : memref<8x128xf32, #tpu.memory_space<vmem>>, vector<8x128xf32>
    tpu.vector_store %arg2[%c0_146, %c0_147], %762 {strides = array<i32>} : memref<8x128xf32, #tpu.memory_space<vmem>>, vector<8x128xf32>,
    %c0_148 = arith.constant 0 : index
    %c0_149 = arith.constant 0 : index
    %764 = vector.load %arg2[%c0_148, %c0_149] : memref<8x128xf32, #tpu.memory_space<vmem>>, vector<1x1xf32>
    tpu.vector_store %arg2[%c0_148, %c0_149], %761 {strides = array<i32>} : memref<8x128xf32, #tpu.memory_space<vmem>>, vector<1x1xf32>,
    %c1 = arith.constant 1 : index
    %c0_150 = arith.constant 0 : index
    %765 = vector.load %arg2[%c1, %c0_150] : memref<8x128xf32, #tpu.memory_space<vmem>>, vector<2x1xf32>
    tpu.vector_store %arg2[%c1, %c0_150], %729 {strides = array<i32>} : memref<8x128xf32, #tpu.memory_space<vmem>>, vector<2x1xf32>,
    %c3 = arith.constant 3 : index
    %c0_151 = arith.constant 0 : index
    %766 = vector.load %arg2[%c3, %c0_151] : memref<8x128xf32, #tpu.memory_space<vmem>>, vector<4x3xf32>
    tpu.vector_store %arg2[%c3, %c0_151], %708 {strides = array<i32>} : memref<8x128xf32, #tpu.memory_space<vmem>>, vector<4x3xf32>,
    return
  }
}

</mosaic_0001>

<llo_original>
// kernel: mladp_forward.1
$region0: #{mladp_forward.1}
  #allocation0 [shape = 'u32[]', space=smem, size = 0x4, offset = 0x4, fixed_abs, tag = 'smem constant byte address 0x4 - core index']
  #allocation1 [shape = 'u32[72,128]{1,0:T(1,128)}', space=vmem, size = 0x9000, scoped, tag = 'internal scratch']
  %s0 = inlined_call_operand.vmem [shape: f32[72,8], index: 0, kind: input, shape index: {}]
  %s1 = inlined_call_operand.vmem [shape: f32[400,64], index: 1, kind: input, shape index: {}]
  %s2 = inlined_call_operand.vmem [shape: f32[8,128], index: 2, kind: output, shape index: {}]
  %s3 = sld [smem:[#allocation0]]
  $region18: #{mladp_forward.1} parent=0
    _
  %s5 = ssub.s32 1, %s3
  %s6 = scalar_select 0, %s5, %s3
  // Predicated region
  $region2: #{mladp_forward.1} parent=0 // pred_check
    _
  $region3: #{mladp_forward.1} parent=0 // pred_check_branch
    %8 = sbr.rel (0) target = $region5
  $region4: #{mladp_forward.1} parent=0 // pred_region
    _
  $region5: #{mladp_forward.1} parent=0 // pred_fallthru
    _
  // Predicated region
  $region6: #{mladp_forward.1} parent=0 // pred_check
    _
  $region7: #{mladp_forward.1} parent=0 // pred_check_branch
    %10 = sbr.rel (0) target = $region9
  $region8: #{mladp_forward.1} parent=0 // pred_region
    _
  $region9: #{mladp_forward.1} parent=0 // pred_fallthru
    _
  %v11 = vld [vmem:[%s0] sm:$0x3f]
  %v12 = vld [vmem:[%s1] sm:$0xff]
  %v13 = vld [vmem:[%s1 + $0x8] sm:$0x1]
  %v14 = vld [vmem:[%s1 + $0x10] sm:$0xff]
  %v15 = vld [vmem:[%s1 + $0x18] sm:$0x1]
  %v16 = vperm.slane %v13, 0
  %vm17 = vcmask 64512
  %v19 = vsel %vm17, %v11, 0
  %21 = vmatpush.msra.mxu0 0.0
  %22 = vmatpush.msra.mxu0 0.0
  %23 = vmatpush.msra.mxu0 0.0
  %24 = vmatpush.msra.mxu0 0.0
  %25 = vmatpush.msra.mxu0 0.0
  %26 = vmatpush.msra.mxu0 0.0
  %27 = vmatpush.msra.mxu0 0.0
  %28 = vmatpush.msra.mxu0 0.0
  %29 = vmatpush.msra.mxu0 0.0
  %30 = vmatpush.msra.mxu0 0.0
  %31 = vmatpush.msra.mxu0 0.0
  %32 = vmatpush.msra.mxu0 0.0
  %33 = vmatpush.msra.mxu0 0.0
  %34 = vmatpush.msra.mxu0 0.0
  %35 = vmatpush.msra.mxu0 0.0
  %36 = vmatpush.msra.mxu0 %v12
  %37 = vmatmul.f32.gmra.mxu0 %v19
  %v38 = vpop.f32.mrf.mxu0
  %v39 = vadd.f32 %v16, %v38
  %40 = vdwg.mxu0
  %v41 = vmul.f32 %v39, 0.5
  %v43 = vrot.slane %v39, 6
  %v45 = vrot.slane %v39, 4
  %vm47 = vcmask 1041408
  %v48 = vsel %vm47, %v39, %v43
  %vm49 = vcmask 1043456
  %v50 = vsel %vm49, %v48, %v45
  %v51 = vrot.slane %v39, 2
  %v53 = vsel %vm47, %v51, %v39
  %v54 = vsel %vm49, %v53, %v43
  %v55 = vsel %vm47, %v45, %v51
  %v56 = vsel %vm49, %v55, %v39
  %58 = vrot.lane.b32.xlu0 %v50, 120
  %v59 = vpop.permute.xlu0 %58
  %v61 = vmul.f32 %v41, %v59
  %vm62 = vcmask 29696
  %v63 = vsel %vm62, %v61, 0.0
  %64 = vadd.xlane.f32.xlu0 %v63
  %v65 = vpop.xlane.xlu0 %64
  %67 = vrot.lane.b32.xlu0 %v54, 120
  %v68 = vpop.permute.xlu0 %67
  %v70 = vmul.f32 %v41, %v68
  %v71 = vsel %vm62, %v70, 0.0
  %72 = vadd.xlane.f32.xlu0 %v71
  %v73 = vpop.xlane.xlu0 %72
  %75 = vrot.lane.b32.xlu0 %v56, 120
  %v76 = vpop.permute.xlu0 %75
  %v78 = vmul.f32 %v41, %v76
  %v79 = vsel %vm62, %v78, 0.0
  %80 = vadd.xlane.f32.xlu0 %v79
  %v81 = vpop.xlane.xlu0 %80
  %vm82 = vcmask 7168
  %v83 = vsel %vm82, %v65, %v73
  %vm84 = vcmask 15360
  %v85 = vsel %vm84, %v83, %v81
  %vm86 = vcmask 21504
  %v87 = vsel %vm86, %v85, -inf
  %88 = vmax.xlane.f32.xlu0 %v87
  %v89 = vpop.xlane.xlu0 %88
  %v90 = vsub.f32 %v85, %v89
  %v91 = vmul.f32 %v90, 1.442695
  %v92 = vpow.pop %v91
  %v93 = vsel %vm86, %v92, 0.0
  %94 = vadd.xlane.f32.xlu0 %v93
  %v95 = vpop.xlane.xlu0 %94
  %v96 = vrcp.pop %v95
  %v97 = vmul.f32 %v92, %v96
  %99 = vset.pattern.permute.xlu0 0
  %100 = vperm.xlu0 %99, %v97
  %v101 = vpop.permute.xlu0 %100
  %v103 = vmul.f32 %v101, %v50
  %104 = vset.pattern.permute.xlu0 1
  %105 = vperm.xlu0 %104, %v97
  %v106 = vpop.permute.xlu0 %105
  %v108 = vmul.f32 %v106, %v54
  %v109 = vadd.f32 %v103, %v108
  %110 = vset.pattern.permute.xlu0 2
  %111 = vperm.xlu0 %110, %v97
  %v112 = vpop.permute.xlu0 %111
  %v114 = vmul.f32 %v112, %v56
  %v115 = vadd.f32 %v109, %v114
  %117 = vrot.lane.b32.xlu0 %v61, 124
  %v118 = vpop.permute.xlu0 %117
  %v120 = vsel %vm62, %v118, 0.0
  %121 = vadd.xlane.f32.xlu0 %v120
  %v122 = vpop.xlane.xlu0 %121
  %124 = vrot.lane.b32.xlu0 %v70, 124
  %v125 = vpop.permute.xlu0 %124
  %v127 = vsel %vm62, %v125, 0.0
  %128 = vadd.xlane.f32.xlu0 %v127
  %v129 = vpop.xlane.xlu0 %128
  %131 = vrot.lane.b32.xlu0 %v78, 124
  %v132 = vpop.permute.xlu0 %131
  %v134 = vsel %vm62, %v132, 0.0
  %135 = vadd.xlane.f32.xlu0 %v134
  %v136 = vpop.xlane.xlu0 %135
  %v137 = vsel %vm82, %v122, %v129
  %v138 = vsel %vm84, %v137, %v136
  %v139 = vsel %vm86, %v138, -inf
  %140 = vmax.xlane.f32.xlu0 %v139
  %v141 = vpop.xlane.xlu0 %140
  %v142 = vsub.f32 %v138, %v141
  %v143 = vmul.f32 %v142, 1.442695
  %v144 = vpow.pop %v143
  %v145 = vsel %vm86, %v144, 0.0
  %146 = vadd.xlane.f32.xlu0 %v145
  %v147 = vpop.xlane.xlu0 %146
  %v148 = vrcp.pop %v147
  %v149 = vmul.f32 %v144, %v148
  %151 = vset.pattern.permute.xlu0 0
  %152 = vperm.xlu0 %151, %v149
  %v153 = vpop.permute.xlu0 %152
  %v155 = vmul.f32 %v153, %v50
  %156 = vset.pattern.permute.xlu0 1
  %157 = vperm.xlu0 %156, %v149
  %v158 = vpop.permute.xlu0 %157
  %v160 = vmul.f32 %v158, %v54
  %v161 = vadd.f32 %v155, %v160
  %162 = vset.pattern.permute.xlu0 2
  %163 = vperm.xlu0 %162, %v149
  %v164 = vpop.permute.xlu0 %163
  %v166 = vmul.f32 %v164, %v56
  %v167 = vadd.f32 %v161, %v166
  %169 = vrot.lane.b32.xlu0 %v115, 112
  %v170 = vpop.permute.xlu0 %169
  %173 = vrot.lane.b32.xlu0 %v167, 112
  %v174 = vpop.permute.xlu0 %173
  %vm176 = vcmask 31744
  %v177 = vsel %vm176, %v170, %v174
  %v178 = vperm.slane %v15, 0
  %v180 = vsel %vm17, %v177, 0
  %182 = vmatpush.msra.mxu0 0.0
  %183 = vmatpush.msra.mxu0 0.0
  %184 = vmatpush.msra.mxu0 0.0
  %185 = vmatpush.msra.mxu0 0.0
  %186 = vmatpush.msra.mxu0 0.0
  %187 = vmatpush.msra.mxu0 0.0
  %188 = vmatpush.msra.mxu0 0.0
  %189 = vmatpush.msra.mxu0 0.0
  %190 = vmatpush.msra.mxu0 0.0
  %191 = vmatpush.msra.mxu0 0.0
  %192 = vmatpush.msra.mxu0 0.0
  %193 = vmatpush.msra.mxu0 0.0
  %194 = vmatpush.msra.mxu0 0.0
  %195 = vmatpush.msra.mxu0 0.0
  %196 = vmatpush.msra.mxu0 0.0
  %197 = vmatpush.msra.mxu0 %v14
  %198 = vmatmul.f32.gmra.mxu0 %v180
  %v199 = vpop.f32.mrf.mxu0
  %v200 = vadd.f32 %v178, %v199
  %201 = vdwg.mxu0
  %v203 = vrot.slane %v200, 1
  %204 = vrot.lane.b32.xlu0 %v203, 8
  %v205 = vpop.permute.xlu0 %204
  %v207 = vrot.slane %v200, 2
  %208 = vrot.lane.b32.xlu0 %v207, 16
  %v209 = vpop.permute.xlu0 %208
  %v211 = vsel %vm17, %v200, %v205
  %vm212 = vcmask 130048
  %v213 = vsel %vm212, %v211, %v209
  %v215 = vrot.slane %v213, 2
  %vm217 = vcmask 1040384
  %v218 = vsel %vm217, %v213, %v215
  %v219 = vld [vmem:[%s1 + $0xe8] sm:$0xff]
  %v220 = vld [vmem:[%s1 + $0xf0] sm:$0xff]
  %v221 = vld [vmem:[%s1 + $0xf8] sm:$0xff]
  %v222 = vld [vmem:[%s1 + $0x100] sm:$0x1]
  %v223 = vperm.slane %v222, 0
  %vm224 = vcmask 195584
  %v226 = vsel %vm224, %v218, 0
  %228 = vmatpush.msra.mxu0 0.0
  %229 = vmatpush.msra.mxu0 0.0
  %230 = vmatpush.msra.mxu0 0.0
  %231 = vmatpush.msra.mxu0 0.0
  %232 = vmatpush.msra.mxu0 0.0
  %233 = vmatpush.msra.mxu0 0.0
  %234 = vmatpush.msra.mxu0 0.0
  %235 = vmatpush.msra.mxu0 0.0
  %236 = vmatpush.msra.mxu0 0.0
  %237 = vmatpush.msra.mxu0 0.0
  %238 = vmatpush.msra.mxu0 0.0
  %239 = vmatpush.msra.mxu0 0.0
  %240 = vmatpush.msra.mxu0 0.0
  %241 = vmatpush.msra.mxu0 %v221
  %242 = vmatpush.msra.mxu0 %v220
  %243 = vmatpush.msra.mxu0 %v219
  %244 = vmatmul.f32.gmra.mxu0 %v226
  %v245 = vpop.f32.mrf.mxu0
  %v246 = vadd.f32 %v223, %v245
  %247 = vdwg.mxu0
  %v248 = vmax.f32 %v246, 0.0
  %v249 = vld [vmem:[%s0 + $0x8] sm:$0xff]
  %v250 = vld [vmem:[%s0 + $0x10] sm:$0xff]
  %v251 = vld [vmem:[%s0 + $0x18] sm:$0xff]
  %v252 = vld [vmem:[%s1 + $0x40] sm:$0xff]
  %v253 = vld [vmem:[%s1 + $0x48] sm:$0x1]
  %v254 = vld [vmem:[%s1 + $0x50] sm:$0xff]
  %v255 = vld [vmem:[%s1 + $0x58] sm:$0x1]
  %v256 = vperm.slane %v253, 0
  %v258 = vsel %vm17, %v249, 0
  %v261 = vsel %vm17, %v250, 0
  %v264 = vsel %vm17, %v251, 0
  %266 = vmatpush.msra.mxu0 0.0
  %267 = vmatpush.msra.mxu0 0.0
  %268 = vmatpush.msra.mxu0 0.0
  %269 = vmatpush.msra.mxu0 0.0
  %270 = vmatpush.msra.mxu0 0.0
  %271 = vmatpush.msra.mxu0 0.0
  %272 = vmatpush.msra.mxu0 0.0
  %273 = vmatpush.msra.mxu0 0.0
  %274 = vmatpush.msra.mxu0 0.0
  %275 = vmatpush.msra.mxu0 0.0
  %276 = vmatpush.msra.mxu0 0.0
  %277 = vmatpush.msra.mxu0 0.0
  %278 = vmatpush.msra.mxu0 0.0
  %279 = vmatpush.msra.mxu0 0.0
  %280 = vmatpush.msra.mxu0 0.0
  %281 = vmatpush.msra.mxu0 %v252
  %282 = vmatmul.f32.gmra.mxu0 %v258
  %v283 = vpop.f32.mrf.mxu0
  %v284 = vadd.f32 %v256, %v283
  %285 = vmatmul.f32.gmra.mxu0 %v261
  %v286 = vpop.f32.mrf.mxu0
  %v287 = vadd.f32 %v256, %v286
  %288 = vmatmul.f32.gmra.mxu0 %v264
  %v289 = vpop.f32.mrf.mxu0
  %v290 = vadd.f32 %v256, %v289
  %291 = vdwg.mxu0
  %v292 = vmul.f32 %v284, 0.5
  %v293 = vmul.f32 %v287, 0.5
  %v294 = vmul.f32 %v290, 0.5
  %v297 = vrot.slane %v284, 4
  %v298 = vrot.slane %v287, 4
  %v299 = vsel %vm49, %v297, %v298
  %v301 = vsel %vm49, %v287, %v297
  %v303 = vrot.slane %v290, 4
  %v304 = vsel %vm49, %v298, %v303
  %v306 = vsel %vm49, %v303, %v287
  %310 = vrot.lane.b32.xlu0 %v284, 120
  %v311 = vpop.permute.xlu0 %310
  %312 = vrot.lane.b32.xlu0 %v301, 120
  %v313 = vpop.permute.xlu0 %312
  %314 = vrot.lane.b32.xlu0 %v299, 120
  %v315 = vpop.permute.xlu0 %314
  %v319 = vmul.f32 %v292, %v311
  %v320 = vmul.f32 %v293, %v313
  %v321 = vmul.f32 %v294, %v315
  %v322 = vsel %vm176, %v319, 0.0
  %323 = vadd.xlane.f32.xlu0 %v322
  %v324 = vpop.xlane.xlu0 %323
  %v325 = vsel %vm176, %v320, 0.0
  %326 = vadd.xlane.f32.xlu0 %v325
  %v327 = vpop.xlane.xlu0 %326
  %v328 = vsel %vm176, %v321, 0.0
  %329 = vadd.xlane.f32.xlu0 %v328
  %v330 = vpop.xlane.xlu0 %329
  %332 = vrot.lane.b32.xlu0 %v304, 120
  %v333 = vpop.permute.xlu0 %332
  %334 = vrot.lane.b32.xlu0 %v306, 120
  %v335 = vpop.permute.xlu0 %334
  %336 = vrot.lane.b32.xlu0 %v290, 120
  %v337 = vpop.permute.xlu0 %336
  %v341 = vmul.f32 %v292, %v333
  %v342 = vmul.f32 %v293, %v335
  %v343 = vmul.f32 %v294, %v337
  %v344 = vsel %vm176, %v341, 0.0
  %345 = vadd.xlane.f32.xlu0 %v344
  %v346 = vpop.xlane.xlu0 %345
  %v347 = vsel %vm176, %v342, 0.0
  %348 = vadd.xlane.f32.xlu0 %v347
  %v349 = vpop.xlane.xlu0 %348
  %v350 = vsel %vm176, %v343, 0.0
  %351 = vadd.xlane.f32.xlu0 %v350
  %v352 = vpop.xlane.xlu0 %351
  %v353 = vsel %vm82, %v324, %v346
  %v354 = vsel %vm82, %v327, %v349
  %v355 = vsel %vm82, %v330, %v352
  %v356 = vsel %vm84, %v353, -inf
  %357 = vmax.xlane.f32.xlu0 %v356
  %v358 = vpop.xlane.xlu0 %357
  %v359 = vsel %vm84, %v354, -inf
  %360 = vmax.xlane.f32.xlu0 %v359
  %v361 = vpop.xlane.xlu0 %360
  %v362 = vsel %vm84, %v355, -inf
  %363 = vmax.xlane.f32.xlu0 %v362
  %v364 = vpop.xlane.xlu0 %363
  %v365 = vsub.f32 %v353, %v358
  %v366 = vsub.f32 %v354, %v361
  %v367 = vsub.f32 %v355, %v364
  %v368 = vmul.f32 %v365, 1.442695
  %v369 = vpow.pop %v368
  %v370 = vmul.f32 %v366, 1.442695
  %v371 = vpow.pop %v370
  %v372 = vmul.f32 %v367, 1.442695
  %v373 = vpow.pop %v372
  %v374 = vsel %vm84, %v369, 0.0
  %375 = vadd.xlane.f32.xlu0 %v374
  %v376 = vpop.xlane.xlu0 %375
  %v377 = vsel %vm84, %v371, 0.0
  %378 = vadd.xlane.f32.xlu0 %v377
  %v379 = vpop.xlane.xlu0 %378
  %v380 = vsel %vm84, %v373, 0.0
  %381 = vadd.xlane.f32.xlu0 %v380
  %v382 = vpop.xlane.xlu0 %381
  %v383 = vrcp.pop %v376
  %v384 = vrcp.pop %v379
  %v385 = vrcp.pop %v382
  %v386 = vmul.f32 %v369, %v383
  %v387 = vmul.f32 %v371, %v384
  %v388 = vmul.f32 %v373, %v385
  %390 = vset.pattern.permute.xlu0 0
  %391 = vperm.xlu0 %390, %v386
  %v392 = vpop.permute.xlu0 %391
  %395 = vset.pattern.permute.xlu0 0
  %396 = vperm.xlu0 %395, %v387
  %v397 = vpop.permute.xlu0 %396
  %400 = vset.pattern.permute.xlu0 0
  %401 = vperm.xlu0 %400, %v388
  %v402 = vpop.permute.xlu0 %401
  %v404 = vmul.f32 %v392, %v284
  %v405 = vmul.f32 %v397, %v301
  %v406 = vmul.f32 %v402, %v299
  %407 = vset.pattern.permute.xlu0 1
  %408 = vperm.xlu0 %407, %v386
  %v409 = vpop.permute.xlu0 %408
  %411 = vset.pattern.permute.xlu0 1
  %412 = vperm.xlu0 %411, %v387
  %v413 = vpop.permute.xlu0 %412
  %415 = vset.pattern.permute.xlu0 1
  %416 = vperm.xlu0 %415, %v388
  %v417 = vpop.permute.xlu0 %416
  %v419 = vmul.f32 %v409, %v304
  %v420 = vmul.f32 %v413, %v306
  %v421 = vmul.f32 %v417, %v290
  %v422 = vadd.f32 %v404, %v419
  %v423 = vadd.f32 %v405, %v420
  %v424 = vadd.f32 %v406, %v421
  %428 = vrot.lane.b32.xlu0 %v319, 124
  %v429 = vpop.permute.xlu0 %428
  %430 = vrot.lane.b32.xlu0 %v320, 124
  %v431 = vpop.permute.xlu0 %430
  %432 = vrot.lane.b32.xlu0 %v321, 124
  %v433 = vpop.permute.xlu0 %432
  %v437 = vsel %vm176, %v429, 0.0
  %438 = vadd.xlane.f32.xlu0 %v437
  %v439 = vpop.xlane.xlu0 %438
  %v440 = vsel %vm176, %v431, 0.0
  %441 = vadd.xlane.f32.xlu0 %v440
  %v442 = vpop.xlane.xlu0 %441
  %v443 = vsel %vm176, %v433, 0.0
  %444 = vadd.xlane.f32.xlu0 %v443
  %v445 = vpop.xlane.xlu0 %444
  %449 = vrot.lane.b32.xlu0 %v341, 124
  %v450 = vpop.permute.xlu0 %449
  %451 = vrot.lane.b32.xlu0 %v342, 124
  %v452 = vpop.permute.xlu0 %451
  %453 = vrot.lane.b32.xlu0 %v343, 124
  %v454 = vpop.permute.xlu0 %453
  %v458 = vsel %vm176, %v450, 0.0
  %459 = vadd.xlane.f32.xlu0 %v458
  %v460 = vpop.xlane.xlu0 %459
  %v461 = vsel %vm176, %v452, 0.0
  %462 = vadd.xlane.f32.xlu0 %v461
  %v463 = vpop.xlane.xlu0 %462
  %v464 = vsel %vm176, %v454, 0.0
  %465 = vadd.xlane.f32.xlu0 %v464
  %v466 = vpop.xlane.xlu0 %465
  %v467 = vsel %vm82, %v439, %v460
  %v468 = vsel %vm82, %v442, %v463
  %v469 = vsel %vm82, %v445, %v466
  %v470 = vsel %vm84, %v467, -inf
  %471 = vmax.xlane.f32.xlu0 %v470
  %v472 = vpop.xlane.xlu0 %471
  %v473 = vsel %vm84, %v468, -inf
  %474 = vmax.xlane.f32.xlu0 %v473
  %v475 = vpop.xlane.xlu0 %474
  %v476 = vsel %vm84, %v469, -inf
  %477 = vmax.xlane.f32.xlu0 %v476
  %v478 = vpop.xlane.xlu0 %477
  %v479 = vsub.f32 %v467, %v472
  %v480 = vsub.f32 %v468, %v475
  %v481 = vsub.f32 %v469, %v478
  %v482 = vmul.f32 %v479, 1.442695
  %v483 = vpow.pop %v482
  %v484 = vmul.f32 %v480, 1.442695
  %v485 = vpow.pop %v484
  %v486 = vmul.f32 %v481, 1.442695
  %v487 = vpow.pop %v486
  %v488 = vsel %vm84, %v483, 0.0
  %489 = vadd.xlane.f32.xlu0 %v488
  %v490 = vpop.xlane.xlu0 %489
  %v491 = vsel %vm84, %v485, 0.0
  %492 = vadd.xlane.f32.xlu0 %v491
  %v493 = vpop.xlane.xlu0 %492
  %v494 = vsel %vm84, %v487, 0.0
  %495 = vadd.xlane.f32.xlu0 %v494
  %v496 = vpop.xlane.xlu0 %495
  %v497 = vrcp.pop %v490
  %v498 = vrcp.pop %v493
  %v499 = vrcp.pop %v496
  %v500 = vmul.f32 %v483, %v497
  %v501 = vmul.f32 %v485, %v498
  %v502 = vmul.f32 %v487, %v499
  %504 = vset.pattern.permute.xlu0 0
  %505 = vperm.xlu0 %504, %v500
  %v506 = vpop.permute.xlu0 %505
  %509 = vset.pattern.permute.xlu0 0
  %510 = vperm.xlu0 %509, %v501
  %v511 = vpop.permute.xlu0 %510
  %514 = vset.pattern.permute.xlu0 0
  %515 = vperm.xlu0 %514, %v502
  %v516 = vpop.permute.xlu0 %515
  %v518 = vmul.f32 %v506, %v284
  %v519 = vmul.f32 %v511, %v301
  %v520 = vmul.f32 %v516, %v299
  %521 = vset.pattern.permute.xlu0 1
  %522 = vperm.xlu0 %521, %v500
  %v523 = vpop.permute.xlu0 %522
  %525 = vset.pattern.permute.xlu0 1
  %526 = vperm.xlu0 %525, %v501
  %v527 = vpop.permute.xlu0 %526
  %529 = vset.pattern.permute.xlu0 1
  %530 = vperm.xlu0 %529, %v502
  %v531 = vpop.permute.xlu0 %530
  %v533 = vmul.f32 %v523, %v304
  %v534 = vmul.f32 %v527, %v306
  %v535 = vmul.f32 %v531, %v290
  %v536 = vadd.f32 %v518, %v533
  %v537 = vadd.f32 %v519, %v534
  %v538 = vadd.f32 %v520, %v535
  %542 = vrot.lane.b32.xlu0 %v422, 112
  %v543 = vpop.permute.xlu0 %542
  %544 = vrot.lane.b32.xlu0 %v423, 112
  %v545 = vpop.permute.xlu0 %544
  %546 = vrot.lane.b32.xlu0 %v424, 112
  %v547 = vpop.permute.xlu0 %546
  %554 = vrot.lane.b32.xlu0 %v536, 112
  %v555 = vpop.permute.xlu0 %554
  %556 = vrot.lane.b32.xlu0 %v537, 112
  %v557 = vpop.permute.xlu0 %556
  %558 = vrot.lane.b32.xlu0 %v538, 112
  %v559 = vpop.permute.xlu0 %558
  %v563 = vsel %vm176, %v543, %v555
  %v564 = vsel %vm176, %v545, %v557
  %v565 = vsel %vm176, %v547, %v559
  %v566 = vperm.slane %v255, 0
  %v568 = vsel %vm17, %v563, 0
  %v571 = vsel %vm17, %v564, 0
  %v574 = vsel %vm17, %v565, 0
  %576 = vmatpush.msra.mxu0 0.0
  %577 = vmatpush.msra.mxu0 0.0
  %578 = vmatpush.msra.mxu0 0.0
  %579 = vmatpush.msra.mxu0 0.0
  %580 = vmatpush.msra.mxu0 0.0
  %581 = vmatpush.msra.mxu0 0.0
  %582 = vmatpush.msra.mxu0 0.0
  %583 = vmatpush.msra.mxu0 0.0
  %584 = vmatpush.msra.mxu0 0.0
  %585 = vmatpush.msra.mxu0 0.0
  %586 = vmatpush.msra.mxu0 0.0
  %587 = vmatpush.msra.mxu0 0.0
  %588 = vmatpush.msra.mxu0 0.0
  %589 = vmatpush.msra.mxu0 0.0
  %590 = vmatpush.msra.mxu0 0.0
  %591 = vmatpush.msra.mxu0 %v254
  %592 = vmatmul.f32.gmra.mxu0 %v568
  %v593 = vpop.f32.mrf.mxu0
  %v594 = vadd.f32 %v566, %v593
  %595 = vmatmul.f32.gmra.mxu0 %v571
  %v596 = vpop.f32.mrf.mxu0
  %v597 = vadd.f32 %v566, %v596
  %598 = vmatmul.f32.gmra.mxu0 %v574
  %v599 = vpop.f32.mrf.mxu0
  %v600 = vadd.f32 %v566, %v599
  %601 = vdwg.mxu0
  %v602 = vld [vmem:[%s1 + $0x108] sm:$0x1]
  %s604 = vtos %v602
  %v605 = vstv %s604
  %v607 = vmul.f32 %v594, %v605
  %v608 = vmul.f32 %v597, %v605
  %609 = vrot.lane.b32.xlu0 %v602, 127
  %v610 = vpop.permute.xlu0 %609
  %s611 = vtos %v610
  %v612 = vstv %s611
  %v614 = vmul.f32 %v597, %v612
  %v615 = vmul.f32 %v600, %v612
  %v618 = vrot.slane %v614, 4
  %v619 = vrot.slane %v615, 4
  %v620 = vsel %vm49, %v618, %v619
  %v623 = vadd.f32 %v607, %v620
  %v624 = vadd.f32 %v608, %v619
  %v625 = vld [vmem:[%s1 + $0x110] sm:$0x1]
  %s627 = vtos %v625
  %v628 = vstv %s627
  %v630 = vadd.f32 %v623, %v628
  %v631 = vadd.f32 %v624, %v628
  %v632 = vmax.f32 %v630, 0.0
  %v633 = vmax.f32 %v631, 0.0
  %v634 = vld [vmem:[%s1 + $0xc8] sm:$0xff]
  %v635 = vld [vmem:[%s1 + $0xd0] sm:$0xff]
  %v636 = vld [vmem:[%s1 + $0xd8] sm:$0xff]
  %v637 = vld [vmem:[%s1 + $0xe0] sm:$0x1]
  %v639 = vrot.slane %v633, 2
  %v641 = vrot.slane %v633, 6
  %v644 = vrot.slane %v632, 2
  %v646 = vrot.slane %v632, 6
  %v648 = vsel %vm47, %v639, %v641
  %v649 = vsel %vm49, %v648, %v644
  %vm650 = vcmask 1045504
  %v651 = vsel %vm650, %v649, %v646
  %v652 = vsel %vm47, %v644, %v646
  %655 = vrot.lane.b32.xlu0 %v651, 8
  %v656 = vpop.permute.xlu0 %655
  %657 = vrot.lane.b32.xlu0 %v652, 8
  %v658 = vpop.permute.xlu0 %657
  %v661 = vsel %vm17, %v632, %v656
  %v662 = vsel %vm17, %v633, %v658
  %v663 = vperm.slane %v637, 0
  %v665 = vsel %vm212, %v661, 0
  %v668 = vsel %vm212, %v662, 0
  %670 = vmatpush.msra.mxu0 0.0
  %671 = vmatpush.msra.mxu0 0.0
  %672 = vmatpush.msra.mxu0 0.0
  %673 = vmatpush.msra.mxu0 0.0
  %674 = vmatpush.msra.mxu0 0.0
  %675 = vmatpush.msra.mxu0 0.0
  %676 = vmatpush.msra.mxu0 0.0
  %677 = vmatpush.msra.mxu0 0.0
  %678 = vmatpush.msra.mxu0 0.0
  %679 = vmatpush.msra.mxu0 0.0
  %680 = vmatpush.msra.mxu0 0.0
  %681 = vmatpush.msra.mxu0 0.0
  %682 = vmatpush.msra.mxu0 0.0
  %683 = vmatpush.msra.mxu0 0.0
  %684 = vmatpush.msra.mxu0 %v635
  %685 = vmatpush.msra.mxu0 %v634
  %686 = vmatmul.f32.gmra.mxu0 %v665
  %v687 = vpop.f32.mrf.mxu0
  %v688 = vadd.f32 %v663, %v687
  %689 = vmatmul.f32.gmra.mxu0 %v668
  %v690 = vpop.f32.mrf.mxu0
  %v691 = vadd.f32 %v663, %v690
  %692 = vdwg.mxu0
  %v694 = vsel %vm17, 0.0, 0
  %696 = vmatpush.msra.mxu0 0.0
  %697 = vmatpush.msra.mxu0 0.0
  %698 = vmatpush.msra.mxu0 0.0
  %699 = vmatpush.msra.mxu0 0.0
  %700 = vmatpush.msra.mxu0 0.0
  %701 = vmatpush.msra.mxu0 0.0
  %702 = vmatpush.msra.mxu0 0.0
  %703 = vmatpush.msra.mxu0 0.0
  %704 = vmatpush.msra.mxu0 0.0
  %705 = vmatpush.msra.mxu0 0.0
  %706 = vmatpush.msra.mxu0 0.0
  %707 = vmatpush.msra.mxu0 0.0
  %708 = vmatpush.msra.mxu0 0.0
  %709 = vmatpush.msra.mxu0 0.0
  %710 = vmatpush.msra.mxu0 0.0
  %711 = vmatpush.msra.mxu0 %v636
  %712 = vmatmul.f32.gmra.mxu0 %v694
  %v713 = vpop.f32.mrf.mxu0
  %v714 = vadd.f32 0.0, %v713
  %715 = vdwg.mxu0
  %v716 = vadd.f32 %v688, %v714
  %v717 = vxor.u32 %v716, 2147483648
  %v718 = vmul.f32 %v717, 1.442695
  %v719 = vpow.pop %v718
  %v720 = vadd.f32 %v719, 1.0
  %v721 = vrcp.pop %v720
  %v722 = vmul.f32 %v720, %v721
  %v723 = vsub.f32 1.0, %v722
  %v724 = vmul.f32 %v721, %v723
  %v725 = vadd.f32 %v721, %v724
  %vm726 = vweird.f32 %v720
  %vm727 = vweird.f32 %v721
  %vm728 = vmor %vm726, %vm727
  %v729 = vsel %vm728, %v721, %v725
  %v730 = vand.u32 2147483647, %v720
  %vm731 = vcmp.eq.f32.partialorder %v730, 8.507059e+37
  %v732 = vand.u32 %v720, 2147483648
  %v733 = vor.u32 1.1754944e-38, %v732
  %v734 = vsel %vm731, %v733, %v729
  %v735 = vmul.f32 1.0, %v734
  %v736 = vtanh.pop %v716
  %v737 = vmul.f32 %v735, 0.0
  %739 = vrot.lane.b32.xlu0 %v736, 104
  %v740 = vpop.permute.xlu0 %739
  %v742 = vmul.f32 %v735, %v740
  %744 = vrot.lane.b32.xlu0 %v742, 8
  %v745 = vpop.permute.xlu0 %744
  %v747 = vadd.f32 %v737, %v745
  %v748 = vtanh.pop %v747
  %750 = vrot.lane.b32.xlu0 %v748, 8
  %v751 = vpop.permute.xlu0 %750
  %v753 = vmul.f32 %v735, %v751
  %755 = vrot.lane.b32.xlu0 %v753, 112
  %v756 = vpop.permute.xlu0 %755
  %v757 = vsel %vm17, %v756, 0
  %759 = vmatpush.msra.mxu0 0.0
  %760 = vmatpush.msra.mxu0 0.0
  %761 = vmatpush.msra.mxu0 0.0
  %762 = vmatpush.msra.mxu0 0.0
  %763 = vmatpush.msra.mxu0 0.0
  %764 = vmatpush.msra.mxu0 0.0
  %765 = vmatpush.msra.mxu0 0.0
  %766 = vmatpush.msra.mxu0 0.0
  %767 = vmatpush.msra.mxu0 0.0
  %768 = vmatpush.msra.mxu0 0.0
  %769 = vmatpush.msra.mxu0 0.0
  %770 = vmatpush.msra.mxu0 0.0
  %771 = vmatpush.msra.mxu0 0.0
  %772 = vmatpush.msra.mxu0 0.0
  %773 = vmatpush.msra.mxu0 0.0
  %774 = vmatpush.msra.mxu0 %v636
  %775 = vmatmul.f32.gmra.mxu0 %v757
  %v776 = vpop.f32.mrf.mxu0
  %v777 = vadd.f32 0.0, %v776
  %778 = vdwg.mxu0
  %v780 = vrot.slane %v777, 6
  %v782 = vadd.f32 %v688, %v780
  %v783 = vxor.u32 %v782, 2147483648
  %v784 = vmul.f32 %v783, 1.442695
  %v785 = vpow.pop %v784
  %v786 = vadd.f32 %v785, 1.0
  %v787 = vrcp.pop %v786
  %v788 = vmul.f32 %v786, %v787
  %v789 = vsub.f32 1.0, %v788
  %v790 = vmul.f32 %v787, %v789
  %v791 = vadd.f32 %v787, %v790
  %vm792 = vweird.f32 %v786
  %vm793 = vweird.f32 %v787
  %vm794 = vmor %vm792, %vm793
  %v795 = vsel %vm794, %v787, %v791
  %v796 = vand.u32 2147483647, %v786
  %vm797 = vcmp.eq.f32.partialorder %v796, 8.507059e+37
  %v798 = vand.u32 %v786, 2147483648
  %v799 = vor.u32 1.1754944e-38, %v798
  %v800 = vsel %vm797, %v799, %v795
  %v801 = vmul.f32 1.0, %v800
  %v802 = vtanh.pop %v782
  %v804 = vrot.slane %v747, 6
  %v806 = vmul.f32 %v801, %v804
  %808 = vrot.lane.b32.xlu0 %v802, 104
  %v809 = vpop.permute.xlu0 %808
  %v811 = vmul.f32 %v801, %v809
  %813 = vrot.lane.b32.xlu0 %v811, 8
  %v814 = vpop.permute.xlu0 %813
  %v816 = vadd.f32 %v806, %v814
  %v817 = vtanh.pop %v816
  %819 = vrot.lane.b32.xlu0 %v817, 8
  %v820 = vpop.permute.xlu0 %819
  %v822 = vmul.f32 %v801, %v820
  %v824 = vrot.slane %v822, 2
  %825 = vrot.lane.b32.xlu0 %v824, 112
  %v826 = vpop.permute.xlu0 %825
  %v827 = vsel %vm17, %v826, 0
  %829 = vmatpush.msra.mxu0 0.0
  %830 = vmatpush.msra.mxu0 0.0
  %831 = vmatpush.msra.mxu0 0.0
  %832 = vmatpush.msra.mxu0 0.0
  %833 = vmatpush.msra.mxu0 0.0
  %834 = vmatpush.msra.mxu0 0.0
  %835 = vmatpush.msra.mxu0 0.0
  %836 = vmatpush.msra.mxu0 0.0
  %837 = vmatpush.msra.mxu0 0.0
  %838 = vmatpush.msra.mxu0 0.0
  %839 = vmatpush.msra.mxu0 0.0
  %840 = vmatpush.msra.mxu0 0.0
  %841 = vmatpush.msra.mxu0 0.0
  %842 = vmatpush.msra.mxu0 0.0
  %843 = vmatpush.msra.mxu0 0.0
  %844 = vmatpush.msra.mxu0 %v636
  %845 = vmatmul.f32.gmra.mxu0 %v827
  %v846 = vpop.f32.mrf.mxu0
  %v847 = vadd.f32 0.0, %v846
  %848 = vdwg.mxu0
  %v850 = vrot.slane %v847, 4
  %v852 = vadd.f32 %v688, %v850
  %v853 = vxor.u32 %v852, 2147483648
  %v854 = vmul.f32 %v853, 1.442695
  %v855 = vpow.pop %v854
  %v856 = vadd.f32 %v855, 1.0
  %v857 = vrcp.pop %v856
  %v858 = vmul.f32 %v856, %v857
  %v859 = vsub.f32 1.0, %v858
  %v860 = vmul.f32 %v857, %v859
  %v861 = vadd.f32 %v857, %v860
  %vm862 = vweird.f32 %v856
  %vm863 = vweird.f32 %v857
  %vm864 = vmor %vm862, %vm863
  %v865 = vsel %vm864, %v857, %v861
  %v866 = vand.u32 2147483647, %v856
  %vm867 = vcmp.eq.f32.partialorder %v866, 8.507059e+37
  %v868 = vand.u32 %v856, 2147483648
  %v869 = vor.u32 1.1754944e-38, %v868
  %v870 = vsel %vm867, %v869, %v865
  %v871 = vmul.f32 1.0, %v870
  %v872 = vtanh.pop %v852
  %v874 = vrot.slane %v816, 6
  %v876 = vmul.f32 %v871, %v874
  %878 = vrot.lane.b32.xlu0 %v872, 104
  %v879 = vpop.permute.xlu0 %878
  %v881 = vmul.f32 %v871, %v879
  %883 = vrot.lane.b32.xlu0 %v881, 8
  %v884 = vpop.permute.xlu0 %883
  %v886 = vadd.f32 %v876, %v884
  %v887 = vtanh.pop %v886
  %889 = vrot.lane.b32.xlu0 %v887, 8
  %v890 = vpop.permute.xlu0 %889
  %v892 = vmul.f32 %v871, %v890
  %v894 = vrot.slane %v892, 4
  %895 = vrot.lane.b32.xlu0 %v894, 112
  %v896 = vpop.permute.xlu0 %895
  %v897 = vsel %vm17, %v896, 0
  %899 = vmatpush.msra.mxu0 0.0
  %900 = vmatpush.msra.mxu0 0.0
  %901 = vmatpush.msra.mxu0 0.0
  %902 = vmatpush.msra.mxu0 0.0
  %903 = vmatpush.msra.mxu0 0.0
  %904 = vmatpush.msra.mxu0 0.0
  %905 = vmatpush.msra.mxu0 0.0
  %906 = vmatpush.msra.mxu0 0.0
  %907 = vmatpush.msra.mxu0 0.0
  %908 = vmatpush.msra.mxu0 0.0
  %909 = vmatpush.msra.mxu0 0.0
  %910 = vmatpush.msra.mxu0 0.0
  %911 = vmatpush.msra.mxu0 0.0
  %912 = vmatpush.msra.mxu0 0.0
  %913 = vmatpush.msra.mxu0 0.0
  %914 = vmatpush.msra.mxu0 %v636
  %915 = vmatmul.f32.gmra.mxu0 %v897
  %v916 = vpop.f32.mrf.mxu0
  %v917 = vadd.f32 0.0, %v916
  %918 = vdwg.mxu0
  %v920 = vrot.slane %v917, 2
  %v922 = vadd.f32 %v688, %v920
  %v923 = vxor.u32 %v922, 2147483648
  %v924 = vmul.f32 %v923, 1.442695
  %v925 = vpow.pop %v924
  %v926 = vadd.f32 %v925, 1.0
  %v927 = vrcp.pop %v926
  %v928 = vmul.f32 %v926, %v927
  %v929 = vsub.f32 1.0, %v928
  %v930 = vmul.f32 %v927, %v929
  %v931 = vadd.f32 %v927, %v930
  %vm932 = vweird.f32 %v926
  %vm933 = vweird.f32 %v927
  %vm934 = vmor %vm932, %vm933
  %v935 = vsel %vm934, %v927, %v931
  %v936 = vand.u32 2147483647, %v926
  %vm937 = vcmp.eq.f32.partialorder %v936, 8.507059e+37
  %v938 = vand.u32 %v926, 2147483648
  %v939 = vor.u32 1.1754944e-38, %v938
  %v940 = vsel %vm937, %v939, %v935
  %v941 = vmul.f32 1.0, %v940
  %v942 = vtanh.pop %v922
  %v944 = vrot.slane %v886, 6
  %v946 = vmul.f32 %v941, %v944
  %948 = vrot.lane.b32.xlu0 %v942, 104
  %v949 = vpop.permute.xlu0 %948
  %v951 = vmul.f32 %v941, %v949
  %953 = vrot.lane.b32.xlu0 %v951, 8
  %v954 = vpop.permute.xlu0 %953
  %v956 = vadd.f32 %v946, %v954
  %v957 = vtanh.pop %v956
  %959 = vrot.lane.b32.xlu0 %v957, 8
  %v960 = vpop.permute.xlu0 %959
  %v962 = vmul.f32 %v941, %v960
  %v964 = vrot.slane %v962, 6
  %965 = vrot.lane.b32.xlu0 %v964, 112
  %v966 = vpop.permute.xlu0 %965
  %v967 = vsel %vm17, %v966, 0
  %969 = vmatpush.msra.mxu0 0.0
  %970 = vmatpush.msra.mxu0 0.0
  %971 = vmatpush.msra.mxu0 0.0
  %972 = vmatpush.msra.mxu0 0.0
  %973 = vmatpush.msra.mxu0 0.0
  %974 = vmatpush.msra.mxu0 0.0
  %975 = vmatpush.msra.mxu0 0.0
  %976 = vmatpush.msra.mxu0 0.0
  %977 = vmatpush.msra.mxu0 0.0
  %978 = vmatpush.msra.mxu0 0.0
  %979 = vmatpush.msra.mxu0 0.0
  %980 = vmatpush.msra.mxu0 0.0
  %981 = vmatpush.msra.mxu0 0.0
  %982 = vmatpush.msra.mxu0 0.0
  %983 = vmatpush.msra.mxu0 0.0
  %984 = vmatpush.msra.mxu0 %v636
  %985 = vmatmul.f32.gmra.mxu0 %v967
  %v986 = vpop.f32.mrf.mxu0
  %v987 = vadd.f32 0.0, %v986
  %988 = vdwg.mxu0
  %v989 = vadd.f32 %v691, %v987
  %v990 = vxor.u32 %v989, 2147483648
  %v991 = vmul.f32 %v990, 1.442695
  %v992 = vpow.pop %v991
  %v993 = vadd.f32 %v992, 1.0
  %v994 = vrcp.pop %v993
  %v995 = vmul.f32 %v993, %v994
  %v996 = vsub.f32 1.0, %v995
  %v997 = vmul.f32 %v994, %v996
  %v998 = vadd.f32 %v994, %v997
  %vm999 = vweird.f32 %v993
  %vm1000 = vweird.f32 %v994
  %vm1001 = vmor %vm999, %vm1000
  %v1002 = vsel %vm1001, %v994, %v998
  %v1003 = vand.u32 2147483647, %v993
  %vm1004 = vcmp.eq.f32.partialorder %v1003, 8.507059e+37
  %v1005 = vand.u32 %v993, 2147483648
  %v1006 = vor.u32 1.1754944e-38, %v1005
  %v1007 = vsel %vm1004, %v1006, %v1002
  %v1008 = vmul.f32 1.0, %v1007
  %v1009 = vtanh.pop %v989
  %v1011 = vrot.slane %v956, 6
  %v1013 = vmul.f32 %v1008, %v1011
  %1015 = vrot.lane.b32.xlu0 %v1009, 104
  %v1016 = vpop.permute.xlu0 %1015
  %v1018 = vmul.f32 %v1008, %v1016
  %1020 = vrot.lane.b32.xlu0 %v1018, 8
  %v1021 = vpop.permute.xlu0 %1020
  %v1023 = vadd.f32 %v1013, %v1021
  %v1024 = vtanh.pop %v1023
  %1026 = vrot.lane.b32.xlu0 %v1024, 8
  %v1027 = vpop.permute.xlu0 %1026
  %v1029 = vmul.f32 %v1008, %v1027
  %1031 = vrot.lane.b32.xlu0 %v1029, 112
  %v1032 = vpop.permute.xlu0 %1031
  %v1033 = vsel %vm17, %v1032, 0
  %1035 = vmatpush.msra.mxu0 0.0
  %1036 = vmatpush.msra.mxu0 0.0
  %1037 = vmatpush.msra.mxu0 0.0
  %1038 = vmatpush.msra.mxu0 0.0
  %1039 = vmatpush.msra.mxu0 0.0
  %1040 = vmatpush.msra.mxu0 0.0
  %1041 = vmatpush.msra.mxu0 0.0
  %1042 = vmatpush.msra.mxu0 0.0
  %1043 = vmatpush.msra.mxu0 0.0
  %1044 = vmatpush.msra.mxu0 0.0
  %1045 = vmatpush.msra.mxu0 0.0
  %1046 = vmatpush.msra.mxu0 0.0
  %1047 = vmatpush.msra.mxu0 0.0
  %1048 = vmatpush.msra.mxu0 0.0
  %1049 = vmatpush.msra.mxu0 0.0
  %1050 = vmatpush.msra.mxu0 %v636
  %1051 = vmatmul.f32.gmra.mxu0 %v1033
  %v1052 = vpop.f32.mrf.mxu0
  %v1053 = vadd.f32 0.0, %v1052
  %1054 = vdwg.mxu0
  %v1056 = vrot.slane %v1053, 6
  %v1058 = vadd.f32 %v691, %v1056
  %v1059 = vxor.u32 %v1058, 2147483648
  %v1060 = vmul.f32 %v1059, 1.442695
  %v1061 = vpow.pop %v1060
  %v1062 = vadd.f32 %v1061, 1.0
  %v1063 = vrcp.pop %v1062
  %v1064 = vmul.f32 %v1062, %v1063
  %v1065 = vsub.f32 1.0, %v1064
  %v1066 = vmul.f32 %v1063, %v1065
  %v1067 = vadd.f32 %v1063, %v1066
  %vm1068 = vweird.f32 %v1062
  %vm1069 = vweird.f32 %v1063
  %vm1070 = vmor %vm1068, %vm1069
  %v1071 = vsel %vm1070, %v1063, %v1067
  %v1072 = vand.u32 2147483647, %v1062
  %vm1073 = vcmp.eq.f32.partialorder %v1072, 8.507059e+37
  %v1074 = vand.u32 %v1062, 2147483648
  %v1075 = vor.u32 1.1754944e-38, %v1074
  %v1076 = vsel %vm1073, %v1075, %v1071
  %v1077 = vmul.f32 1.0, %v1076
  %v1078 = vtanh.pop %v1058
  %v1080 = vrot.slane %v1023, 6
  %v1082 = vmul.f32 %v1077, %v1080
  %1084 = vrot.lane.b32.xlu0 %v1078, 104
  %v1085 = vpop.permute.xlu0 %1084
  %v1087 = vmul.f32 %v1077, %v1085
  %1089 = vrot.lane.b32.xlu0 %v1087, 8
  %v1090 = vpop.permute.xlu0 %1089
  %v1092 = vadd.f32 %v1082, %v1090
  %v1093 = vtanh.pop %v1092
  %1095 = vrot.lane.b32.xlu0 %v1093, 8
  %v1096 = vpop.permute.xlu0 %1095
  %v1098 = vmul.f32 %v1077, %v1096
  %v1101 = vrot.slane %v1098, 2
  %1102 = vrot.lane.b32.xlu0 %v1101, 112
  %v1103 = vpop.permute.xlu0 %1102
  %v1105 = vsel %vm176, %v756, %v1103
  %1106 = vrot.lane.b32.xlu0 %v822, 112
  %v1107 = vpop.permute.xlu0 %1106
  %v1109 = vrot.slane %v1029, 6
  %1110 = vrot.lane.b32.xlu0 %v1109, 112
  %v1111 = vpop.permute.xlu0 %1110
  %v1113 = vsel %vm176, %v1107, %v1111
  %1114 = vrot.lane.b32.xlu0 %v892, 112
  %v1115 = vpop.permute.xlu0 %1114
  %v1117 = vrot.slane %v962, 2
  %1118 = vrot.lane.b32.xlu0 %v1117, 112
  %v1119 = vpop.permute.xlu0 %1118
  %v1121 = vsel %vm176, %v1115, %v1119
  %1122 = vrot.lane.b32.xlu0 %v962, 112
  %v1123 = vpop.permute.xlu0 %1122
  %v1125 = vrot.slane %v892, 6
  %1126 = vrot.lane.b32.xlu0 %v1125, 112
  %v1127 = vpop.permute.xlu0 %1126
  %v1129 = vsel %vm176, %v1123, %v1127
  %v1132 = vsel %vm176, %v1032, %v826
  %1133 = vrot.lane.b32.xlu0 %v1098, 112
  %v1134 = vpop.permute.xlu0 %1133
  %v1136 = vrot.slane %v753, 6
  %1137 = vrot.lane.b32.xlu0 %v1136, 112
  %v1138 = vpop.permute.xlu0 %1137
  %v1140 = vsel %vm176, %v1134, %v1138
  %v1141 = vld [vmem:[%s0 + $0x20] sm:$0xff]
  %v1142 = vld [vmem:[%s0 + $0x28] sm:$0xff]
  %v1143 = vld [vmem:[%s0 + $0x30] sm:$0xff]
  %v1144 = vld [vmem:[%s1 + $0x20] sm:$0xff]
  %v1145 = vld [vmem:[%s1 + $0x28] sm:$0x1]
  %v1146 = vld [vmem:[%s1 + $0x30] sm:$0xff]
  %v1147 = vld [vmem:[%s1 + $0x38] sm:$0x1]
  %v1148 = vperm.slane %v1145, 0
  %v1150 = vsel %vm17, %v1141, 0
  %v1153 = vsel %vm17, %v1142, 0
  %v1156 = vsel %vm17, %v1143, 0
  %1158 = vmatpush.msra.mxu0 0.0
  %1159 = vmatpush.msra.mxu0 0.0
  %1160 = vmatpush.msra.mxu0 0.0
  %1161 = vmatpush.msra.mxu0 0.0
  %1162 = vmatpush.msra.mxu0 0.0
  %1163 = vmatpush.msra.mxu0 0.0
  %1164 = vmatpush.msra.mxu0 0.0
  %1165 = vmatpush.msra.mxu0 0.0
  %1166 = vmatpush.msra.mxu0 0.0
  %1167 = vmatpush.msra.mxu0 0.0
  %1168 = vmatpush.msra.mxu0 0.0
  %1169 = vmatpush.msra.mxu0 0.0
  %1170 = vmatpush.msra.mxu0 0.0
  %1171 = vmatpush.msra.mxu0 0.0
  %1172 = vmatpush.msra.mxu0 0.0
  %1173 = vmatpush.msra.mxu0 %v1144
  %1174 = vmatmul.f32.gmra.mxu0 %v1150
  %v1175 = vpop.f32.mrf.mxu0
  %v1176 = vadd.f32 %v1148, %v1175
  %1177 = vmatmul.f32.gmra.mxu0 %v1153
  %v1178 = vpop.f32.mrf.mxu0
  %v1179 = vadd.f32 %v1148, %v1178
  %1180 = vmatmul.f32.gmra.mxu0 %v1156
  %v1181 = vpop.f32.mrf.mxu0
  %v1182 = vadd.f32 %v1148, %v1181
  %1183 = vdwg.mxu0
  %v1184 = vmul.f32 %v1176, 0.5
  %v1185 = vmul.f32 %v1179, 0.5
  %v1186 = vmul.f32 %v1182, 0.5
  %1188 = vrot.lane.b32.xlu0 %v1176, 120
  %v1189 = vpop.permute.xlu0 %1188
  %v1191 = vmul.f32 %v1184, %v1189
  %v1192 = vmul.f32 %v1185, %v1189
  %v1193 = vmul.f32 %v1186, %v1189
  %v1194 = vsel %vm176, %v1191, 0.0
  %1195 = vadd.xlane.f32.xlu0 %v1194
  %v1196 = vpop.xlane.xlu0 %1195
  %v1197 = vsel %vm176, %v1192, 0.0
  %1198 = vadd.xlane.f32.xlu0 %v1197
  %v1199 = vpop.xlane.xlu0 %1198
  %v1200 = vsel %vm176, %v1193, 0.0
  %1201 = vadd.xlane.f32.xlu0 %v1200
  %v1202 = vpop.xlane.xlu0 %1201
  %1204 = vrot.lane.b32.xlu0 %v1179, 120
  %v1205 = vpop.permute.xlu0 %1204
  %v1207 = vmul.f32 %v1184, %v1205
  %v1208 = vmul.f32 %v1185, %v1205
  %v1209 = vmul.f32 %v1186, %v1205
  %v1210 = vsel %vm176, %v1207, 0.0
  %1211 = vadd.xlane.f32.xlu0 %v1210
  %v1212 = vpop.xlane.xlu0 %1211
  %v1213 = vsel %vm176, %v1208, 0.0
  %1214 = vadd.xlane.f32.xlu0 %v1213
  %v1215 = vpop.xlane.xlu0 %1214
  %v1216 = vsel %vm176, %v1209, 0.0
  %1217 = vadd.xlane.f32.xlu0 %v1216
  %v1218 = vpop.xlane.xlu0 %1217
  %1220 = vrot.lane.b32.xlu0 %v1182, 120
  %v1221 = vpop.permute.xlu0 %1220
  %v1223 = vmul.f32 %v1184, %v1221
  %v1224 = vmul.f32 %v1185, %v1221
  %v1225 = vmul.f32 %v1186, %v1221
  %v1226 = vsel %vm176, %v1223, 0.0
  %1227 = vadd.xlane.f32.xlu0 %v1226
  %v1228 = vpop.xlane.xlu0 %1227
  %v1229 = vsel %vm176, %v1224, 0.0
  %1230 = vadd.xlane.f32.xlu0 %v1229
  %v1231 = vpop.xlane.xlu0 %1230
  %v1232 = vsel %vm176, %v1225, 0.0
  %1233 = vadd.xlane.f32.xlu0 %v1232
  %v1234 = vpop.xlane.xlu0 %1233
  %v1235 = vsel %vm82, %v1196, %v1212
  %v1236 = vsel %vm82, %v1199, %v1215
  %v1237 = vsel %vm82, %v1202, %v1218
  %v1238 = vsel %vm84, %v1235, %v1228
  %v1239 = vsel %vm84, %v1236, %v1231
  %v1240 = vsel %vm84, %v1237, %v1234
  %vm1241 = vcmask 23552
  %v1242 = vsel %vm1241, %v1238, -inf
  %1243 = vmax.xlane.f32.xlu0 %v1242
  %v1244 = vpop.xlane.xlu0 %1243
  %v1245 = vsel %vm1241, %v1239, -inf
  %1246 = vmax.xlane.f32.xlu0 %v1245
  %v1247 = vpop.xlane.xlu0 %1246
  %v1248 = vsel %vm1241, %v1240, -inf
  %1249 = vmax.xlane.f32.xlu0 %v1248
  %v1250 = vpop.xlane.xlu0 %1249
  %v1251 = vsub.f32 %v1238, %v1244
  %v1252 = vsub.f32 %v1239, %v1247
  %v1253 = vsub.f32 %v1240, %v1250
  %v1254 = vmul.f32 %v1251, 1.442695
  %v1255 = vpow.pop %v1254
  %v1256 = vmul.f32 %v1252, 1.442695
  %v1257 = vpow.pop %v1256
  %v1258 = vmul.f32 %v1253, 1.442695
  %v1259 = vpow.pop %v1258
  %v1260 = vsel %vm1241, %v1255, 0.0
  %1261 = vadd.xlane.f32.xlu0 %v1260
  %v1262 = vpop.xlane.xlu0 %1261
  %v1263 = vsel %vm1241, %v1257, 0.0
  %1264 = vadd.xlane.f32.xlu0 %v1263
  %v1265 = vpop.xlane.xlu0 %1264
  %v1266 = vsel %vm1241, %v1259, 0.0
  %1267 = vadd.xlane.f32.xlu0 %v1266
  %v1268 = vpop.xlane.xlu0 %1267
  %v1269 = vrcp.pop %v1262
  %v1270 = vrcp.pop %v1265
  %v1271 = vrcp.pop %v1268
  %v1272 = vmul.f32 %v1255, %v1269
  %v1273 = vmul.f32 %v1257, %v1270
  %v1274 = vmul.f32 %v1259, %v1271
  %1276 = vset.pattern.permute.xlu0 0
  %1277 = vperm.xlu0 %1276, %v1272
  %v1278 = vpop.permute.xlu0 %1277
  %1281 = vset.pattern.permute.xlu0 0
  %1282 = vperm.xlu0 %1281, %v1273
  %v1283 = vpop.permute.xlu0 %1282
  %1286 = vset.pattern.permute.xlu0 0
  %1287 = vperm.xlu0 %1286, %v1274
  %v1288 = vpop.permute.xlu0 %1287
  %v1290 = vmul.f32 %v1278, %v1176
  %v1291 = vmul.f32 %v1283, %v1176
  %v1292 = vmul.f32 %v1288, %v1176
  %1293 = vset.pattern.permute.xlu0 1
  %1294 = vperm.xlu0 %1293, %v1272
  %v1295 = vpop.permute.xlu0 %1294
  %1297 = vset.pattern.permute.xlu0 1
  %1298 = vperm.xlu0 %1297, %v1273
  %v1299 = vpop.permute.xlu0 %1298
  %1301 = vset.pattern.permute.xlu0 1
  %1302 = vperm.xlu0 %1301, %v1274
  %v1303 = vpop.permute.xlu0 %1302
  %v1305 = vmul.f32 %v1295, %v1179
  %v1306 = vmul.f32 %v1299, %v1179
  %v1307 = vmul.f32 %v1303, %v1179
  %v1308 = vadd.f32 %v1290, %v1305
  %v1309 = vadd.f32 %v1291, %v1306
  %v1310 = vadd.f32 %v1292, %v1307
  %1311 = vset.pattern.permute.xlu0 2
  %1312 = vperm.xlu0 %1311, %v1272
  %v1313 = vpop.permute.xlu0 %1312
  %1315 = vset.pattern.permute.xlu0 2
  %1316 = vperm.xlu0 %1315, %v1273
  %v1317 = vpop.permute.xlu0 %1316
  %1319 = vset.pattern.permute.xlu0 2
  %1320 = vperm.xlu0 %1319, %v1274
  %v1321 = vpop.permute.xlu0 %1320
  %v1323 = vmul.f32 %v1313, %v1182
  %v1324 = vmul.f32 %v1317, %v1182
  %v1325 = vmul.f32 %v1321, %v1182
  %v1326 = vadd.f32 %v1308, %v1323
  %v1327 = vadd.f32 %v1309, %v1324
  %v1328 = vadd.f32 %v1310, %v1325
  %1332 = vrot.lane.b32.xlu0 %v1191, 124
  %v1333 = vpop.permute.xlu0 %1332
  %1334 = vrot.lane.b32.xlu0 %v1192, 124
  %v1335 = vpop.permute.xlu0 %1334
  %1336 = vrot.lane.b32.xlu0 %v1193, 124
  %v1337 = vpop.permute.xlu0 %1336
  %v1341 = vsel %vm176, %v1333, 0.0
  %1342 = vadd.xlane.f32.xlu0 %v1341
  %v1343 = vpop.xlane.xlu0 %1342
  %v1344 = vsel %vm176, %v1335, 0.0
  %1345 = vadd.xlane.f32.xlu0 %v1344
  %v1346 = vpop.xlane.xlu0 %1345
  %v1347 = vsel %vm176, %v1337, 0.0
  %1348 = vadd.xlane.f32.xlu0 %v1347
  %v1349 = vpop.xlane.xlu0 %1348
  %1353 = vrot.lane.b32.xlu0 %v1207, 124
  %v1354 = vpop.permute.xlu0 %1353
  %1355 = vrot.lane.b32.xlu0 %v1208, 124
  %v1356 = vpop.permute.xlu0 %1355
  %1357 = vrot.lane.b32.xlu0 %v1209, 124
  %v1358 = vpop.permute.xlu0 %1357
  %v1362 = vsel %vm176, %v1354, 0.0
  %1363 = vadd.xlane.f32.xlu0 %v1362
  %v1364 = vpop.xlane.xlu0 %1363
  %v1365 = vsel %vm176, %v1356, 0.0
  %1366 = vadd.xlane.f32.xlu0 %v1365
  %v1367 = vpop.xlane.xlu0 %1366
  %v1368 = vsel %vm176, %v1358, 0.0
  %1369 = vadd.xlane.f32.xlu0 %v1368
  %v1370 = vpop.xlane.xlu0 %1369
  %1374 = vrot.lane.b32.xlu0 %v1223, 124
  %v1375 = vpop.permute.xlu0 %1374
  %1376 = vrot.lane.b32.xlu0 %v1224, 124
  %v1377 = vpop.permute.xlu0 %1376
  %1378 = vrot.lane.b32.xlu0 %v1225, 124
  %v1379 = vpop.permute.xlu0 %1378
  %v1383 = vsel %vm176, %v1375, 0.0
  %1384 = vadd.xlane.f32.xlu0 %v1383
  %v1385 = vpop.xlane.xlu0 %1384
  %v1386 = vsel %vm176, %v1377, 0.0
  %1387 = vadd.xlane.f32.xlu0 %v1386
  %v1388 = vpop.xlane.xlu0 %1387
  %v1389 = vsel %vm176, %v1379, 0.0
  %1390 = vadd.xlane.f32.xlu0 %v1389
  %v1391 = vpop.xlane.xlu0 %1390
  %v1392 = vsel %vm82, %v1343, %v1364
  %v1393 = vsel %vm82, %v1346, %v1367
  %v1394 = vsel %vm82, %v1349, %v1370
  %v1395 = vsel %vm84, %v1392, %v1385
  %v1396 = vsel %vm84, %v1393, %v1388
  %v1397 = vsel %vm84, %v1394, %v1391
  %v1398 = vsel %vm1241, %v1395, -inf
  %1399 = vmax.xlane.f32.xlu0 %v1398
  %v1400 = vpop.xlane.xlu0 %1399
  %v1401 = vsel %vm1241, %v1396, -inf
  %1402 = vmax.xlane.f32.xlu0 %v1401
  %v1403 = vpop.xlane.xlu0 %1402
  %v1404 = vsel %vm1241, %v1397, -inf
  %1405 = vmax.xlane.f32.xlu0 %v1404
  %v1406 = vpop.xlane.xlu0 %1405
  %v1407 = vsub.f32 %v1395, %v1400
  %v1408 = vsub.f32 %v1396, %v1403
  %v1409 = vsub.f32 %v1397, %v1406
  %v1410 = vmul.f32 %v1407, 1.442695
  %v1411 = vpow.pop %v1410
  %v1412 = vmul.f32 %v1408, 1.442695
  %v1413 = vpow.pop %v1412
  %v1414 = vmul.f32 %v1409, 1.442695
  %v1415 = vpow.pop %v1414
  %v1416 = vsel %vm1241, %v1411, 0.0
  %1417 = vadd.xlane.f32.xlu0 %v1416
  %v1418 = vpop.xlane.xlu0 %1417
  %v1419 = vsel %vm1241, %v1413, 0.0
  %1420 = vadd.xlane.f32.xlu0 %v1419
  %v1421 = vpop.xlane.xlu0 %1420
  %v1422 = vsel %vm1241, %v1415, 0.0
  %1423 = vadd.xlane.f32.xlu0 %v1422
  %v1424 = vpop.xlane.xlu0 %1423
  %v1425 = vrcp.pop %v1418
  %v1426 = vrcp.pop %v1421
  %v1427 = vrcp.pop %v1424
  %v1428 = vmul.f32 %v1411, %v1425
  %v1429 = vmul.f32 %v1413, %v1426
  %v1430 = vmul.f32 %v1415, %v1427
  %1432 = vset.pattern.permute.xlu0 0
  %1433 = vperm.xlu0 %1432, %v1428
  %v1434 = vpop.permute.xlu0 %1433
  %1437 = vset.pattern.permute.xlu0 0
  %1438 = vperm.xlu0 %1437, %v1429
  %v1439 = vpop.permute.xlu0 %1438
  %1442 = vset.pattern.permute.xlu0 0
  %1443 = vperm.xlu0 %1442, %v1430
  %v1444 = vpop.permute.xlu0 %1443
  %v1446 = vmul.f32 %v1434, %v1176
  %v1447 = vmul.f32 %v1439, %v1176
  %v1448 = vmul.f32 %v1444, %v1176
  %1449 = vset.pattern.permute.xlu0 1
  %1450 = vperm.xlu0 %1449, %v1428
  %v1451 = vpop.permute.xlu0 %1450
  %1453 = vset.pattern.permute.xlu0 1
  %1454 = vperm.xlu0 %1453, %v1429
  %v1455 = vpop.permute.xlu0 %1454
  %1457 = vset.pattern.permute.xlu0 1
  %1458 = vperm.xlu0 %1457, %v1430
  %v1459 = vpop.permute.xlu0 %1458
  %v1461 = vmul.f32 %v1451, %v1179
  %v1462 = vmul.f32 %v1455, %v1179
  %v1463 = vmul.f32 %v1459, %v1179
  %v1464 = vadd.f32 %v1446, %v1461
  %v1465 = vadd.f32 %v1447, %v1462
  %v1466 = vadd.f32 %v1448, %v1463
  %1467 = vset.pattern.permute.xlu0 2
  %1468 = vperm.xlu0 %1467, %v1428
  %v1469 = vpop.permute.xlu0 %1468
  %1471 = vset.pattern.permute.xlu0 2
  %1472 = vperm.xlu0 %1471, %v1429
  %v1473 = vpop.permute.xlu0 %1472
  %1475 = vset.pattern.permute.xlu0 2
  %1476 = vperm.xlu0 %1475, %v1430
  %v1477 = vpop.permute.xlu0 %1476
  %v1479 = vmul.f32 %v1469, %v1182
  %v1480 = vmul.f32 %v1473, %v1182
  %v1481 = vmul.f32 %v1477, %v1182
  %v1482 = vadd.f32 %v1464, %v1479
  %v1483 = vadd.f32 %v1465, %v1480
  %v1484 = vadd.f32 %v1466, %v1481
  %1488 = vrot.lane.b32.xlu0 %v1326, 112
  %v1489 = vpop.permute.xlu0 %1488
  %1490 = vrot.lane.b32.xlu0 %v1327, 112
  %v1491 = vpop.permute.xlu0 %1490
  %1492 = vrot.lane.b32.xlu0 %v1328, 112
  %v1493 = vpop.permute.xlu0 %1492
  %1500 = vrot.lane.b32.xlu0 %v1482, 112
  %v1501 = vpop.permute.xlu0 %1500
  %1502 = vrot.lane.b32.xlu0 %v1483, 112
  %v1503 = vpop.permute.xlu0 %1502
  %1504 = vrot.lane.b32.xlu0 %v1484, 112
  %v1505 = vpop.permute.xlu0 %1504
  %v1509 = vsel %vm176, %v1489, %v1501
  %v1510 = vsel %vm176, %v1491, %v1503
  %v1511 = vsel %vm176, %v1493, %v1505
  %v1512 = vperm.slane %v1147, 0
  %v1514 = vsel %vm17, %v1509, 0
  %v1517 = vsel %vm17, %v1510, 0
  %v1520 = vsel %vm17, %v1511, 0
  %1522 = vmatpush.msra.mxu0 0.0
  %1523 = vmatpush.msra.mxu0 0.0
  %1524 = vmatpush.msra.mxu0 0.0
  %1525 = vmatpush.msra.mxu0 0.0
  %1526 = vmatpush.msra.mxu0 0.0
  %1527 = vmatpush.msra.mxu0 0.0
  %1528 = vmatpush.msra.mxu0 0.0
  %1529 = vmatpush.msra.mxu0 0.0
  %1530 = vmatpush.msra.mxu0 0.0
  %1531 = vmatpush.msra.mxu0 0.0
  %1532 = vmatpush.msra.mxu0 0.0
  %1533 = vmatpush.msra.mxu0 0.0
  %1534 = vmatpush.msra.mxu0 0.0
  %1535 = vmatpush.msra.mxu0 0.0
  %1536 = vmatpush.msra.mxu0 0.0
  %1537 = vmatpush.msra.mxu0 %v1146
  %1538 = vmatmul.f32.gmra.mxu0 %v1514
  %v1539 = vpop.f32.mrf.mxu0
  %v1540 = vadd.f32 %v1512, %v1539
  %1541 = vmatmul.f32.gmra.mxu0 %v1517
  %v1542 = vpop.f32.mrf.mxu0
  %v1543 = vadd.f32 %v1512, %v1542
  %1544 = vmatmul.f32.gmra.mxu0 %v1520
  %v1545 = vpop.f32.mrf.mxu0
  %v1546 = vadd.f32 %v1512, %v1545
  %1547 = vdwg.mxu0
  %1549 = vrot.lane.b32.xlu0 %v1543, 8
  %v1550 = vpop.permute.xlu0 %1549
  %1553 = vrot.lane.b32.xlu0 %v1546, 16
  %v1554 = vpop.permute.xlu0 %1553
  %v1556 = vsel %vm17, %v1540, %v1550
  %v1557 = vsel %vm212, %v1556, %v1554
  %v1558 = vld [vmem:[%s1 + $0x80] sm:$0xff]
  %v1559 = vld [vmem:[%s1 + $0x88] sm:$0xff]
  %v1560 = vld [vmem:[%s1 + $0x90] sm:$0xff]
  %v1561 = vld [vmem:[%s1 + $0x98] sm:$0xff]
  %v1562 = vld [vmem:[%s1 + $0xa0] sm:$0xff]
  %v1563 = vld [vmem:[%s1 + $0xa8] sm:$0xff]
  %v1564 = vld [vmem:[%s1 + $0xb0] sm:$0xff]
  %v1565 = vld [vmem:[%s1 + $0xb8] sm:$0xff]
  %v1566 = vld [vmem:[%s1 + $0xc0] sm:$0x1]
  %v1568 = vrot.slane %v1557, 6
  %v1570 = vrot.slane %v1557, 2
  %v1572 = vsel %vm47, %v1568, %v1570
  %v1573 = vsel %vm49, %v1572, %v1568
  %v1574 = vsel %vm650, %v1573, %v1570
  %1576 = vrot.lane.b32.xlu0 %v1574, 24
  %v1577 = vpop.permute.xlu0 %1576
  %v1579 = vsel %vm224, %v1557, %v1577
  %v1580 = vperm.slane %v1566, 0
  %vm1581 = vcmask 392192
  %v1583 = vsel %vm1581, %v1579, 0
  %1585 = vmatpush.msra.mxu0 0.0
  %1586 = vmatpush.msra.mxu0 0.0
  %1587 = vmatpush.msra.mxu0 0.0
  %1588 = vmatpush.msra.mxu0 0.0
  %1589 = vmatpush.msra.mxu0 0.0
  %1590 = vmatpush.msra.mxu0 0.0
  %1591 = vmatpush.msra.mxu0 0.0
  %1592 = vmatpush.msra.mxu0 0.0
  %1593 = vmatpush.msra.mxu0 0.0
  %1594 = vmatpush.msra.mxu0 0.0
  %1595 = vmatpush.msra.mxu0 %v1563
  %1596 = vmatpush.msra.mxu0 %v1562
  %1597 = vmatpush.msra.mxu0 %v1561
  %1598 = vmatpush.msra.mxu0 %v1560
  %1599 = vmatpush.msra.mxu0 %v1559
  %1600 = vmatpush.msra.mxu0 %v1558
  %1601 = vmatmul.f32.gmra.mxu0 %v1583
  %v1602 = vpop.f32.mrf.mxu0
  %v1603 = vadd.f32 %v1580, %v1602
  %1604 = vdwg.mxu0
  %v1605 = vsel %vm212, 0.0, 0
  %1607 = vmatpush.msra.mxu0 0.0
  %1608 = vmatpush.msra.mxu0 0.0
  %1609 = vmatpush.msra.mxu0 0.0
  %1610 = vmatpush.msra.mxu0 0.0
  %1611 = vmatpush.msra.mxu0 0.0
  %1612 = vmatpush.msra.mxu0 0.0
  %1613 = vmatpush.msra.mxu0 0.0
  %1614 = vmatpush.msra.mxu0 0.0
  %1615 = vmatpush.msra.mxu0 0.0
  %1616 = vmatpush.msra.mxu0 0.0
  %1617 = vmatpush.msra.mxu0 0.0
  %1618 = vmatpush.msra.mxu0 0.0
  %1619 = vmatpush.msra.mxu0 0.0
  %1620 = vmatpush.msra.mxu0 0.0
  %1621 = vmatpush.msra.mxu0 %v1565
  %1622 = vmatpush.msra.mxu0 %v1564
  %1623 = vmatmul.f32.gmra.mxu0 %v1605
  %v1624 = vpop.f32.mrf.mxu0
  %v1625 = vadd.f32 0.0, %v1624
  %1626 = vdwg.mxu0
  %v1627 = vadd.f32 %v1603, %v1625
  %v1628 = vxor.u32 %v1627, 2147483648
  %v1629 = vmul.f32 %v1628, 1.442695
  %v1630 = vpow.pop %v1629
  %v1631 = vadd.f32 %v1630, 1.0
  %v1632 = vrcp.pop %v1631
  %v1633 = vmul.f32 %v1631, %v1632
  %v1634 = vsub.f32 1.0, %v1633
  %v1635 = vmul.f32 %v1632, %v1634
  %v1636 = vadd.f32 %v1632, %v1635
  %vm1637 = vweird.f32 %v1631
  %vm1638 = vweird.f32 %v1632
  %vm1639 = vmor %vm1637, %vm1638
  %v1640 = vsel %vm1639, %v1632, %v1636
  %v1641 = vand.u32 2147483647, %v1631
  %vm1642 = vcmp.eq.f32.partialorder %v1641, 8.507059e+37
  %v1643 = vand.u32 %v1631, 2147483648
  %v1644 = vor.u32 1.1754944e-38, %v1643
  %v1645 = vsel %vm1642, %v1644, %v1640
  %v1646 = vmul.f32 1.0, %v1645
  %v1647 = vtanh.pop %v1627
  %v1648 = vmul.f32 %v1646, 0.0
  %1650 = vrot.lane.b32.xlu0 %v1647, 80
  %v1651 = vpop.permute.xlu0 %1650
  %v1653 = vmul.f32 %v1646, %v1651
  %1655 = vrot.lane.b32.xlu0 %v1653, 16
  %v1656 = vpop.permute.xlu0 %1655
  %v1658 = vadd.f32 %v1648, %v1656
  %v1659 = vtanh.pop %v1658
  %1661 = vrot.lane.b32.xlu0 %v1659, 16
  %v1662 = vpop.permute.xlu0 %1661
  %v1664 = vmul.f32 %v1646, %v1662
  %1666 = vrot.lane.b32.xlu0 %v1664, 96
  %v1667 = vpop.permute.xlu0 %1666
  %v1668 = vsel %vm212, %v1667, 0
  %1670 = vmatpush.msra.mxu0 0.0
  %1671 = vmatpush.msra.mxu0 0.0
  %1672 = vmatpush.msra.mxu0 0.0
  %1673 = vmatpush.msra.mxu0 0.0
  %1674 = vmatpush.msra.mxu0 0.0
  %1675 = vmatpush.msra.mxu0 0.0
  %1676 = vmatpush.msra.mxu0 0.0
  %1677 = vmatpush.msra.mxu0 0.0
  %1678 = vmatpush.msra.mxu0 0.0
  %1679 = vmatpush.msra.mxu0 0.0
  %1680 = vmatpush.msra.mxu0 0.0
  %1681 = vmatpush.msra.mxu0 0.0
  %1682 = vmatpush.msra.mxu0 0.0
  %1683 = vmatpush.msra.mxu0 0.0
  %1684 = vmatpush.msra.mxu0 %v1565
  %1685 = vmatpush.msra.mxu0 %v1564
  %1686 = vmatmul.f32.gmra.mxu0 %v1668
  %v1687 = vpop.f32.mrf.mxu0
  %v1688 = vadd.f32 0.0, %v1687
  %1689 = vdwg.mxu0
  %v1691 = vrot.slane %v1688, 6
  %v1693 = vadd.f32 %v1603, %v1691
  %v1694 = vxor.u32 %v1693, 2147483648
  %v1695 = vmul.f32 %v1694, 1.442695
  %v1696 = vpow.pop %v1695
  %v1697 = vadd.f32 %v1696, 1.0
  %v1698 = vrcp.pop %v1697
  %v1699 = vmul.f32 %v1697, %v1698
  %v1700 = vsub.f32 1.0, %v1699
  %v1701 = vmul.f32 %v1698, %v1700
  %v1702 = vadd.f32 %v1698, %v1701
  %vm1703 = vweird.f32 %v1697
  %vm1704 = vweird.f32 %v1698
  %vm1705 = vmor %vm1703, %vm1704
  %v1706 = vsel %vm1705, %v1698, %v1702
  %v1707 = vand.u32 2147483647, %v1697
  %vm1708 = vcmp.eq.f32.partialorder %v1707, 8.507059e+37
  %v1709 = vand.u32 %v1697, 2147483648
  %v1710 = vor.u32 1.1754944e-38, %v1709
  %v1711 = vsel %vm1708, %v1710, %v1706
  %v1712 = vmul.f32 1.0, %v1711
  %v1713 = vtanh.pop %v1693
  %v1715 = vrot.slane %v1658, 6
  %v1717 = vmul.f32 %v1712, %v1715
  %1719 = vrot.lane.b32.xlu0 %v1713, 80
  %v1720 = vpop.permute.xlu0 %1719
  %v1722 = vmul.f32 %v1712, %v1720
  %1724 = vrot.lane.b32.xlu0 %v1722, 16
  %v1725 = vpop.permute.xlu0 %1724
  %v1727 = vadd.f32 %v1717, %v1725
  %v1728 = vtanh.pop %v1727
  %1730 = vrot.lane.b32.xlu0 %v1728, 16
  %v1731 = vpop.permute.xlu0 %1730
  %v1733 = vmul.f32 %v1712, %v1731
  %v1735 = vrot.slane %v1733, 2
  %1736 = vrot.lane.b32.xlu0 %v1735, 96
  %v1737 = vpop.permute.xlu0 %1736
  %v1738 = vsel %vm212, %v1737, 0
  %1740 = vmatpush.msra.mxu0 0.0
  %1741 = vmatpush.msra.mxu0 0.0
  %1742 = vmatpush.msra.mxu0 0.0
  %1743 = vmatpush.msra.mxu0 0.0
  %1744 = vmatpush.msra.mxu0 0.0
  %1745 = vmatpush.msra.mxu0 0.0
  %1746 = vmatpush.msra.mxu0 0.0
  %1747 = vmatpush.msra.mxu0 0.0
  %1748 = vmatpush.msra.mxu0 0.0
  %1749 = vmatpush.msra.mxu0 0.0
  %1750 = vmatpush.msra.mxu0 0.0
  %1751 = vmatpush.msra.mxu0 0.0
  %1752 = vmatpush.msra.mxu0 0.0
  %1753 = vmatpush.msra.mxu0 0.0
  %1754 = vmatpush.msra.mxu0 %v1565
  %1755 = vmatpush.msra.mxu0 %v1564
  %1756 = vmatmul.f32.gmra.mxu0 %v1738
  %v1757 = vpop.f32.mrf.mxu0
  %v1758 = vadd.f32 0.0, %v1757
  %1759 = vdwg.mxu0
  %v1761 = vrot.slane %v1758, 4
  %v1763 = vadd.f32 %v1603, %v1761
  %v1764 = vxor.u32 %v1763, 2147483648
  %v1765 = vmul.f32 %v1764, 1.442695
  %v1766 = vpow.pop %v1765
  %v1767 = vadd.f32 %v1766, 1.0
  %v1768 = vrcp.pop %v1767
  %v1769 = vmul.f32 %v1767, %v1768
  %v1770 = vsub.f32 1.0, %v1769
  %v1771 = vmul.f32 %v1768, %v1770
  %v1772 = vadd.f32 %v1768, %v1771
  %vm1773 = vweird.f32 %v1767
  %vm1774 = vweird.f32 %v1768
  %vm1775 = vmor %vm1773, %vm1774
  %v1776 = vsel %vm1775, %v1768, %v1772
  %v1777 = vand.u32 2147483647, %v1767
  %vm1778 = vcmp.eq.f32.partialorder %v1777, 8.507059e+37
  %v1779 = vand.u32 %v1767, 2147483648
  %v1780 = vor.u32 1.1754944e-38, %v1779
  %v1781 = vsel %vm1778, %v1780, %v1776
  %v1782 = vmul.f32 1.0, %v1781
  %v1783 = vtanh.pop %v1763
  %v1785 = vrot.slane %v1727, 6
  %v1787 = vmul.f32 %v1782, %v1785
  %1789 = vrot.lane.b32.xlu0 %v1783, 80
  %v1790 = vpop.permute.xlu0 %1789
  %v1792 = vmul.f32 %v1782, %v1790
  %1794 = vrot.lane.b32.xlu0 %v1792, 16
  %v1795 = vpop.permute.xlu0 %1794
  %v1797 = vadd.f32 %v1787, %v1795
  %v1798 = vtanh.pop %v1797
  %1800 = vrot.lane.b32.xlu0 %v1798, 16
  %v1801 = vpop.permute.xlu0 %1800
  %v1803 = vmul.f32 %v1782, %v1801
  %v1805 = vrot.slane %v1803, 4
  %1806 = vrot.lane.b32.xlu0 %v1805, 96
  %v1807 = vpop.permute.xlu0 %1806
  %v1808 = vsel %vm212, %v1807, 0
  %1810 = vmatpush.msra.mxu0 0.0
  %1811 = vmatpush.msra.mxu0 0.0
  %1812 = vmatpush.msra.mxu0 0.0
  %1813 = vmatpush.msra.mxu0 0.0
  %1814 = vmatpush.msra.mxu0 0.0
  %1815 = vmatpush.msra.mxu0 0.0
  %1816 = vmatpush.msra.mxu0 0.0
  %1817 = vmatpush.msra.mxu0 0.0
  %1818 = vmatpush.msra.mxu0 0.0
  %1819 = vmatpush.msra.mxu0 0.0
  %1820 = vmatpush.msra.mxu0 0.0
  %1821 = vmatpush.msra.mxu0 0.0
  %1822 = vmatpush.msra.mxu0 0.0
  %1823 = vmatpush.msra.mxu0 0.0
  %1824 = vmatpush.msra.mxu0 %v1565
  %1825 = vmatpush.msra.mxu0 %v1564
  %1826 = vmatmul.f32.gmra.mxu0 %v1808
  %v1827 = vpop.f32.mrf.mxu0
  %v1828 = vadd.f32 0.0, %v1827
  %1829 = vdwg.mxu0
  %v1831 = vrot.slane %v1828, 2
  %v1833 = vadd.f32 %v1603, %v1831
  %v1834 = vxor.u32 %v1833, 2147483648
  %v1835 = vmul.f32 %v1834, 1.442695
  %v1836 = vpow.pop %v1835
  %v1837 = vadd.f32 %v1836, 1.0
  %v1838 = vrcp.pop %v1837
  %v1839 = vmul.f32 %v1837, %v1838
  %v1840 = vsub.f32 1.0, %v1839
  %v1841 = vmul.f32 %v1838, %v1840
  %v1842 = vadd.f32 %v1838, %v1841
  %vm1843 = vweird.f32 %v1837
  %vm1844 = vweird.f32 %v1838
  %vm1845 = vmor %vm1843, %vm1844
  %v1846 = vsel %vm1845, %v1838, %v1842
  %v1847 = vand.u32 2147483647, %v1837
  %vm1848 = vcmp.eq.f32.partialorder %v1847, 8.507059e+37
  %v1849 = vand.u32 %v1837, 2147483648
  %v1850 = vor.u32 1.1754944e-38, %v1849
  %v1851 = vsel %vm1848, %v1850, %v1846
  %v1852 = vmul.f32 1.0, %v1851
  %v1853 = vtanh.pop %v1833
  %v1855 = vrot.slane %v1797, 6
  %v1857 = vmul.f32 %v1852, %v1855
  %1859 = vrot.lane.b32.xlu0 %v1853, 80
  %v1860 = vpop.permute.xlu0 %1859
  %v1862 = vmul.f32 %v1852, %v1860
  %1864 = vrot.lane.b32.xlu0 %v1862, 16
  %v1865 = vpop.permute.xlu0 %1864
  %v1867 = vadd.f32 %v1857, %v1865
  %v1868 = vtanh.pop %v1867
  %1870 = vrot.lane.b32.xlu0 %v1868, 16
  %v1871 = vpop.permute.xlu0 %1870
  %v1873 = vmul.f32 %v1852, %v1871
  %v1876 = vrot.slane %v1873, 6
  %1877 = vrot.lane.b32.xlu0 %v1876, 96
  %v1878 = vpop.permute.xlu0 %1877
  %v1880 = vsel %vm17, %v1667, %v1878
  %1881 = vrot.lane.b32.xlu0 %v1733, 96
  %v1882 = vpop.permute.xlu0 %1881
  %v1884 = vrot.slane %v1803, 2
  %1885 = vrot.lane.b32.xlu0 %v1884, 96
  %v1886 = vpop.permute.xlu0 %1885
  %v1888 = vsel %vm17, %v1882, %v1886
  %1889 = vrot.lane.b32.xlu0 %v1803, 96
  %v1890 = vpop.permute.xlu0 %1889
  %v1892 = vrot.slane %v1733, 6
  %1893 = vrot.lane.b32.xlu0 %v1892, 96
  %v1894 = vpop.permute.xlu0 %1893
  %v1896 = vsel %vm17, %v1890, %v1894
  %1897 = vrot.lane.b32.xlu0 %v1873, 96
  %v1898 = vpop.permute.xlu0 %1897
  %v1900 = vrot.slane %v1664, 2
  %1901 = vrot.lane.b32.xlu0 %v1900, 96
  %v1902 = vpop.permute.xlu0 %1901
  %v1904 = vsel %vm17, %v1898, %v1902
  %v1905 = vsel %vm47, %v1132, %v1140
  %v1906 = vsel %vm47, %v1105, %v1113
  %v1907 = vsel %vm49, %v1906, %v1121
  %v1908 = vsel %vm650, %v1907, %v1129
  %v1909 = vld [vmem:[%s1 + $0x60] sm:$0xff]
  %v1910 = vld [vmem:[%s1 + $0x68] sm:$0x1]
  %v1911 = vld [vmem:[%s1 + $0x70] sm:$0xff]
  %v1912 = vld [vmem:[%s1 + $0x78] sm:$0x1]
  %v1913 = vperm.slane %v1910, 0
  %v1915 = vsel %vm17, %v1905, 0
  %1917 = vmatpush.msra.mxu0 0.0
  %1918 = vmatpush.msra.mxu0 0.0
  %1919 = vmatpush.msra.mxu0 0.0
  %1920 = vmatpush.msra.mxu0 0.0
  %1921 = vmatpush.msra.mxu0 0.0
  %1922 = vmatpush.msra.mxu0 0.0
  %1923 = vmatpush.msra.mxu0 0.0
  %1924 = vmatpush.msra.mxu0 0.0
  %1925 = vmatpush.msra.mxu0 0.0
  %1926 = vmatpush.msra.mxu0 0.0
  %1927 = vmatpush.msra.mxu0 0.0
  %1928 = vmatpush.msra.mxu0 0.0
  %1929 = vmatpush.msra.mxu0 0.0
  %1930 = vmatpush.msra.mxu0 0.0
  %1931 = vmatpush.msra.mxu0 0.0
  %1932 = vmatpush.msra.mxu0 %v1909
  %1933 = vmatmul.f32.gmra.mxu0 %v1915
  %v1934 = vpop.f32.mrf.mxu0
  %v1935 = vadd.f32 %v1913, %v1934
  %1936 = vdwg.mxu0
  %v1937 = vmul.f32 %v1935, 0.5
  %v1938 = vperm.slane %v1912, 0
  %v1940 = vsel %vm17, %v1908, 0
  %1942 = vmatpush.msra.mxu0 0.0
  %1943 = vmatpush.msra.mxu0 0.0
  %1944 = vmatpush.msra.mxu0 0.0
  %1945 = vmatpush.msra.mxu0 0.0
  %1946 = vmatpush.msra.mxu0 0.0
  %1947 = vmatpush.msra.mxu0 0.0
  %1948 = vmatpush.msra.mxu0 0.0
  %1949 = vmatpush.msra.mxu0 0.0
  %1950 = vmatpush.msra.mxu0 0.0
  %1951 = vmatpush.msra.mxu0 0.0
  %1952 = vmatpush.msra.mxu0 0.0
  %1953 = vmatpush.msra.mxu0 0.0
  %1954 = vmatpush.msra.mxu0 0.0
  %1955 = vmatpush.msra.mxu0 0.0
  %1956 = vmatpush.msra.mxu0 0.0
  %1957 = vmatpush.msra.mxu0 %v1911
  %1958 = vmatmul.f32.gmra.mxu0 %v1940
  %v1959 = vpop.f32.mrf.mxu0
  %v1960 = vadd.f32 %v1938, %v1959
  %1961 = vdwg.mxu0
  %v1963 = vrot.slane %v1960, 6
  %v1965 = vsel %vm47, %v1960, %v1963
  %v1966 = vrot.slane %v1960, 2
  %v1968 = vsel %vm47, %v1966, %v1960
  %v1969 = vrot.slane %v1960, 4
  %v1971 = vsel %vm47, %v1969, %v1966
  %v1972 = vsel %vm47, %v1963, %v1969
  %v1973 = vmul.f32 %v1937, %v1965
  %vm1974 = vcmask 27648
  %v1975 = vsel %vm1974, %v1973, 0.0
  %1976 = vadd.xlane.f32.xlu0 %v1975
  %v1977 = vpop.xlane.xlu0 %1976
  %v1978 = vmul.f32 %v1937, %v1968
  %v1979 = vsel %vm1974, %v1978, 0.0
  %1980 = vadd.xlane.f32.xlu0 %v1979
  %v1981 = vpop.xlane.xlu0 %1980
  %v1982 = vmul.f32 %v1937, %v1971
  %v1983 = vsel %vm1974, %v1982, 0.0
  %1984 = vadd.xlane.f32.xlu0 %v1983
  %v1985 = vpop.xlane.xlu0 %1984
  %v1986 = vmul.f32 %v1937, %v1972
  %v1987 = vsel %vm1974, %v1986, 0.0
  %1988 = vadd.xlane.f32.xlu0 %v1987
  %v1989 = vpop.xlane.xlu0 %1988
  %v1990 = vsel %vm82, %v1977, %v1981
  %v1991 = vsel %vm84, %v1990, %v1985
  %v1992 = vsel %vm1241, %v1991, %v1989
  %v1993 = vsel %vm1974, %v1992, -inf
  %1994 = vmax.xlane.f32.xlu0 %v1993
  %v1995 = vpop.xlane.xlu0 %1994
  %v1996 = vsub.f32 %v1992, %v1995
  %v1997 = vmul.f32 %v1996, 1.442695
  %v1998 = vpow.pop %v1997
  %v1999 = vsel %vm1974, %v1998, 0.0
  %2000 = vadd.xlane.f32.xlu0 %v1999
  %v2001 = vpop.xlane.xlu0 %2000
  %v2002 = vrcp.pop %v2001
  %v2003 = vmul.f32 %v1998, %v2002
  %v2004 = vadd.f32 %v2003, 0.0
  %2006 = vrot.lane.b32.xlu0 %v1973, 124
  %v2007 = vpop.permute.xlu0 %2006
  %v2009 = vsel %vm1974, %v2007, 0.0
  %2010 = vadd.xlane.f32.xlu0 %v2009
  %v2011 = vpop.xlane.xlu0 %2010
  %2013 = vrot.lane.b32.xlu0 %v1978, 124
  %v2014 = vpop.permute.xlu0 %2013
  %v2016 = vsel %vm1974, %v2014, 0.0
  %2017 = vadd.xlane.f32.xlu0 %v2016
  %v2018 = vpop.xlane.xlu0 %2017
  %2020 = vrot.lane.b32.xlu0 %v1982, 124
  %v2021 = vpop.permute.xlu0 %2020
  %v2023 = vsel %vm1974, %v2021, 0.0
  %2024 = vadd.xlane.f32.xlu0 %v2023
  %v2025 = vpop.xlane.xlu0 %2024
  %2027 = vrot.lane.b32.xlu0 %v1986, 124
  %v2028 = vpop.permute.xlu0 %2027
  %v2030 = vsel %vm1974, %v2028, 0.0
  %2031 = vadd.xlane.f32.xlu0 %v2030
  %v2032 = vpop.xlane.xlu0 %2031
  %v2033 = vsel %vm82, %v2011, %v2018
  %v2034 = vsel %vm84, %v2033, %v2025
  %v2035 = vsel %vm1241, %v2034, %v2032
  %v2036 = vsel %vm1974, %v2035, -inf
  %2037 = vmax.xlane.f32.xlu0 %v2036
  %v2038 = vpop.xlane.xlu0 %2037
  %v2039 = vsub.f32 %v2035, %v2038
  %v2040 = vmul.f32 %v2039, 1.442695
  %v2041 = vpow.pop %v2040
  %v2042 = vsel %vm1974, %v2041, 0.0
  %2043 = vadd.xlane.f32.xlu0 %v2042
  %v2044 = vpop.xlane.xlu0 %2043
  %v2045 = vrcp.pop %v2044
  %v2046 = vmul.f32 %v2041, %v2045
  %v2047 = vadd.f32 %v2004, %v2046
  %v2048 = vmul.f32 %v2047, 0.5
  %v2049 = vld [vmem:[%s1 + $0x178] sm:$0xff]
  %v2050 = vld [vmem:[%s1 + $0x180] sm:$0x1]
  %v2051 = vperm.slane %v2050, 0
  %2052 = vmatpush.msra.mxu0 0.0
  %2053 = vmatpush.msra.mxu0 0.0
  %2054 = vmatpush.msra.mxu0 0.0
  %2055 = vmatpush.msra.mxu0 0.0
  %2056 = vmatpush.msra.mxu0 0.0
  %2057 = vmatpush.msra.mxu0 0.0
  %2058 = vmatpush.msra.mxu0 0.0
  %2059 = vmatpush.msra.mxu0 0.0
  %2060 = vmatpush.msra.mxu0 0.0
  %2061 = vmatpush.msra.mxu0 0.0
  %2062 = vmatpush.msra.mxu0 0.0
  %2063 = vmatpush.msra.mxu0 0.0
  %2064 = vmatpush.msra.mxu0 0.0
  %2065 = vmatpush.msra.mxu0 0.0
  %2066 = vmatpush.msra.mxu0 0.0
  %2067 = vmatpush.msra.mxu0 %v2049
  %2068 = vmatmul.f32.gmra.mxu0 %v1915
  %v2069 = vpop.f32.mrf.mxu0
  %v2070 = vadd.f32 %v2051, %v2069
  %2071 = vdwg.mxu0
  %v2072 = vxor.u32 %v2070, 2147483648
  %v2073 = vmul.f32 %v2072, 1.442695
  %v2074 = vpow.pop %v2073
  %v2075 = vadd.f32 %v2074, 1.0
  %v2076 = vrcp.pop %v2075
  %v2077 = vmul.f32 %v2075, %v2076
  %v2078 = vsub.f32 1.0, %v2077
  %v2079 = vmul.f32 %v2076, %v2078
  %v2080 = vadd.f32 %v2076, %v2079
  %vm2081 = vweird.f32 %v2075
  %vm2082 = vweird.f32 %v2076
  %vm2083 = vmor %vm2081, %vm2082
  %v2084 = vsel %vm2083, %v2076, %v2080
  %v2085 = vand.u32 2147483647, %v2075
  %vm2086 = vcmp.eq.f32.partialorder %v2085, 8.507059e+37
  %v2087 = vand.u32 %v2075, 2147483648
  %v2088 = vor.u32 1.1754944e-38, %v2087
  %v2089 = vsel %vm2086, %v2088, %v2084
  %v2090 = vmul.f32 1.0, %v2089
  %v2091 = vld [vmem:[%s1 + $0x188] sm:$0xf]
  %2093 = vset.pattern.permute.xlu0 0
  %2094 = vperm.xlu0 %2093, %v2090
  %v2095 = vpop.permute.xlu0 %2094
  %v2097 = vmul.f32 %v2091, %v2095
  %v2098 = vmul.f32 %v2097, 1.442695
  %v2099 = vpow.pop %v2098
  %v2100 = vadd.f32 %v2048, %v2099
  %v2102 = vrot.slane %v1880, 6
  %v2104 = vsel %vm47, %v1880, %v2102
  %2106 = vset.pattern.permute.xlu0 0
  %2107 = vperm.xlu0 %2106, %v2100
  %v2108 = vpop.permute.xlu0 %2107
  %v2110 = vmul.f32 %v2108, %v2104
  %v2111 = vadd.f32 %v2110, 0.0
  %v2113 = vrot.slane %v1888, 2
  %v2115 = vsel %vm47, %v2113, %v1888
  %2116 = vset.pattern.permute.xlu0 1
  %2117 = vperm.xlu0 %2116, %v2100
  %v2118 = vpop.permute.xlu0 %2117
  %v2120 = vmul.f32 %v2118, %v2115
  %v2121 = vadd.f32 %v2111, %v2120
  %v2123 = vrot.slane %v1896, 4
  %v2125 = vrot.slane %v1896, 2
  %v2127 = vsel %vm47, %v2123, %v2125
  %2128 = vset.pattern.permute.xlu0 2
  %2129 = vperm.xlu0 %2128, %v2100
  %v2130 = vpop.permute.xlu0 %2129
  %v2132 = vmul.f32 %v2130, %v2127
  %v2133 = vadd.f32 %v2121, %v2132
  %v2135 = vrot.slane %v1904, 6
  %v2137 = vrot.slane %v1904, 4
  %v2139 = vsel %vm47, %v2135, %v2137
  %2140 = vset.pattern.permute.xlu0 3
  %2141 = vperm.xlu0 %2140, %v2100
  %v2142 = vpop.permute.xlu0 %2141
  %v2144 = vmul.f32 %v2142, %v2139
  %v2145 = vadd.f32 %v2133, %v2144
  %v2147 = vrot.slane %v248, 6
  %v2149 = vsel %vm47, %v248, %v2147
  %2151 = vrot.lane.b32.xlu0 %v2149, 16
  %v2152 = vpop.permute.xlu0 %2151
  %2154 = vrot.lane.b32.xlu0 %v1905, 24
  %v2155 = vpop.permute.xlu0 %2154
  %v2157 = vsel %vm212, %v2145, %v2152
  %v2158 = vsel %vm224, %v2157, %v2155
  %v2159 = vld [vmem:[%s1 + $0x118] sm:$0xff]
  %v2160 = vld [vmem:[%s1 + $0x120] sm:$0xff]
  %v2161 = vld [vmem:[%s1 + $0x128] sm:$0xff]
  %v2162 = vld [vmem:[%s1 + $0x130] sm:$0xff]
  %v2163 = vld [vmem:[%s1 + $0x138] sm:$0x1]
  %v2164 = vperm.slane %v2163, 0
  %vm2165 = vcmask 261120
  %v2167 = vsel %vm2165, %v2158, 0
  %2169 = vmatpush.msra.mxu0 0.0
  %2170 = vmatpush.msra.mxu0 0.0
  %2171 = vmatpush.msra.mxu0 0.0
  %2172 = vmatpush.msra.mxu0 0.0
  %2173 = vmatpush.msra.mxu0 0.0
  %2174 = vmatpush.msra.mxu0 0.0
  %2175 = vmatpush.msra.mxu0 0.0
  %2176 = vmatpush.msra.mxu0 0.0
  %2177 = vmatpush.msra.mxu0 0.0
  %2178 = vmatpush.msra.mxu0 0.0
  %2179 = vmatpush.msra.mxu0 0.0
  %2180 = vmatpush.msra.mxu0 0.0
  %2181 = vmatpush.msra.mxu0 %v2162
  %2182 = vmatpush.msra.mxu0 %v2161
  %2183 = vmatpush.msra.mxu0 %v2160
  %2184 = vmatpush.msra.mxu0 %v2159
  %2185 = vmatmul.f32.gmra.mxu0 %v2167
  %v2186 = vpop.f32.mrf.mxu0
  %v2187 = vadd.f32 %v2164, %v2186
  %2188 = vdwg.mxu0
  %v2189 = vxor.u32 %v2187, 2147483648
  %v2190 = vmul.f32 %v2189, 1.442695
  %v2191 = vpow.pop %v2190
  %v2192 = vadd.f32 %v2191, 1.0
  %v2193 = vrcp.pop %v2192
  %v2194 = vmul.f32 %v2192, %v2193
  %v2195 = vsub.f32 1.0, %v2194
  %v2196 = vmul.f32 %v2193, %v2195
  %v2197 = vadd.f32 %v2193, %v2196
  %vm2198 = vweird.f32 %v2192
  %vm2199 = vweird.f32 %v2193
  %vm2200 = vmor %vm2198, %vm2199
  %v2201 = vsel %vm2200, %v2193, %v2197
  %v2202 = vand.u32 2147483647, %v2192
  %vm2203 = vcmp.eq.f32.partialorder %v2202, 8.507059e+37
  %v2204 = vand.u32 %v2192, 2147483648
  %v2205 = vor.u32 1.1754944e-38, %v2204
  %v2206 = vsel %vm2203, %v2205, %v2201
  %v2207 = vmul.f32 1.0, %v2206
  %vm2208 = vcmask 19456
  %v2209 = vsel %vm2208, %v2207, -inf
  %2210 = vmax.xlane.f32.xlu0 %v2209
  %v2211 = vpop.xlane.xlu0 %2210
  %vm2212 = vcmask 60416
  %v2213 = vsel %vm2212, %v1905, -inf
  %2214 = vmax.xlane.f32.xlu0 %v2213
  %v2215 = vpop.xlane.xlu0 %2214
  %v2217 = vrot.slane %v2211, 2
  %2220 = vrot.lane.b32.xlu0 %v2145, 2
  %v2221 = vpop.permute.xlu0 %2220
  %v2223 = vrot.slane %v2145, 2
  %2224 = vrot.lane.b32.xlu0 %v2223, 18
  %v2225 = vpop.permute.xlu0 %2224
  %v2228 = vrot.slane %v2215, 2
  %2230 = vrot.lane.b32.xlu0 %v248, 36
  %v2231 = vpop.permute.xlu0 %2230
  %v2233 = vsel %vm82, %v2211, %v2217
  %v2234 = vsel %vm84, %v2233, %v2221
  %vm2235 = vcmask 146432
  %v2236 = vsel %vm2235, %v2234, %v2225
  %vm2237 = vcmask 277504
  %v2238 = vsel %vm2237, %v2236, %v2215
  %vm2239 = vcmask 285696
  %v2240 = vsel %vm2239, %v2238, %v2228
  %vm2241 = vcmask 293888
  %v2242 = vsel %vm2241, %v2240, %v2231
  %v2243 = vld [vmem:[%s1 + $0x140] sm:$0xff]
  %v2244 = vld [vmem:[%s1 + $0x148] sm:$0xff]
  %v2245 = vld [vmem:[%s1 + $0x150] sm:$0xff]
  %v2246 = vld [vmem:[%s1 + $0x158] sm:$0xff]
  %v2247 = vld [vmem:[%s1 + $0x160] sm:$0xff]
  %v2248 = vld [vmem:[%s1 + $0x168] sm:$0xf]
  %v2249 = vld [vmem:[%s1 + $0x170] sm:$0x1]
  %v2250 = vperm.slane %v2249, 0
  %vm2251 = vcmask 359424
  %v2253 = vsel %vm2251, %v2242, 0
  %v2256 = vsel %vm49, %v2248, 0
  %2258 = vmatpush.msra.mxu0 0.0
  %2259 = vmatpush.msra.mxu0 0.0
  %2260 = vmatpush.msra.mxu0 0.0
  %2261 = vmatpush.msra.mxu0 0.0
  %2262 = vmatpush.msra.mxu0 0.0
  %2263 = vmatpush.msra.mxu0 0.0
  %2264 = vmatpush.msra.mxu0 0.0
  %2265 = vmatpush.msra.mxu0 0.0
  %2266 = vmatpush.msra.mxu0 0.0
  %2267 = vmatpush.msra.mxu0 0.0
  %2268 = vmatpush.msra.mxu0 %v2256
  %2269 = vmatpush.msra.mxu0 %v2247
  %2270 = vmatpush.msra.mxu0 %v2246
  %2271 = vmatpush.msra.mxu0 %v2245
  %2272 = vmatpush.msra.mxu0 %v2244
  %2273 = vmatpush.msra.mxu0 %v2243
  %2274 = vmatmul.f32.gmra.mxu0 %v2253
  %v2275 = vpop.f32.mrf.mxu0
  %v2276 = vadd.f32 %v2250, %v2275
  %2277 = vdwg.mxu0
  %v2278 = vxor.u32 %v2276, 2147483648
  %v2279 = vmul.f32 %v2278, 1.442695
  %v2280 = vpow.pop %v2279
  %v2281 = vadd.f32 %v2280, 1.0
  %v2282 = vrcp.pop %v2281
  %v2283 = vmul.f32 %v2281, %v2282
  %v2284 = vsub.f32 1.0, %v2283
  %v2285 = vmul.f32 %v2282, %v2284
  %v2286 = vadd.f32 %v2282, %v2285
  %vm2287 = vweird.f32 %v2281
  %vm2288 = vweird.f32 %v2282
  %vm2289 = vmor %vm2287, %vm2288
  %v2290 = vsel %vm2289, %v2282, %v2286
  %v2291 = vand.u32 2147483647, %v2281
  %vm2292 = vcmp.eq.f32.partialorder %v2291, 8.507059e+37
  %v2293 = vand.u32 %v2281, 2147483648
  %v2294 = vor.u32 1.1754944e-38, %v2293
  %v2295 = vsel %vm2292, %v2294, %v2290
  %v2296 = vmul.f32 1.0, %v2295
  %v2297 = vld [vmem:[%s0 + $0x40] sm:$0x3]
  %v2298 = vsub.f32 %v2296, %v2297
  %v2299 = vmul.f32 %v2298, %v2298
  %vm2300 = vcmask 1024
  %v2301 = vsel %vm2300, %v2299, 0.0
  %v2302 = vrot.slane %v2301, 4
  %v2303 = vadd.f32 %v2301, %v2302
  %v2304 = vrot.slane %v2303, 2
  %v2305 = vadd.f32 %v2303, %v2304
  %v2306 = vrot.slane %v2305, 1
  %v2307 = vadd.f32 %v2305, %v2306
  %v2308 = vmul.f32 %v2307, 0.5
  %v2309 = vld [vmem:[%s0 + $0x38] sm:$0xf]
  %v2310 = vlog2.pop %v2207
  %v2311 = vmul.f32 %v2310, 0.6931472
  %v2312 = vmax.f32 %v2311, -100.0
  %v2313 = vsub.f32 1.0, %v2207
  %v2314 = vlog2.pop %v2313
  %v2315 = vmul.f32 %v2314, 0.6931472
  %v2316 = vmax.f32 %v2315, -100.0
  %v2317 = vmul.f32 %v2309, %v2312
  %v2318 = vsub.f32 1.0, %v2309
  %v2319 = vmul.f32 %v2318, %v2316
  %v2320 = vadd.f32 %v2317, %v2319
  %v2321 = vsub.f32 0.0, %v2320
  %v2322 = vsel %vm2208, %v2321, 0.0
  %2323 = vadd.xlane.f32.xlu0 %v2322
  %v2324 = vpop.xlane.xlu0 %2323
  %v2325 = vsel %vm49, %v2324, 0.0
  %v2326 = vrot.slane %v2325, 4
  %v2327 = vadd.f32 %v2325, %v2326
  %v2328 = vrot.slane %v2327, 2
  %v2329 = vadd.f32 %v2327, %v2328
  %v2330 = vrot.slane %v2329, 1
  %v2331 = vadd.f32 %v2329, %v2330
  %v2332 = vmul.f32 %v2331, 0.5
  %v2333 = vmul.f32 %v2332, 0.083333336
  %v2334 = vadd.f32 %v2308, %v2333
  %2335 = vst [vmem:[%s2] sm:$0xff] 0.0
  %vm2336 = vcmask 0
  %2337 = vst.msk [vmem:[%s2] sm:$0x1] %vm2336, %v2334
  %2338 = vst.msk [vmem:[%s2 + $0x1] sm:$0x3] %vm2300, %v2296
  %2339 = vst.msk [vmem:[%s2 + $0x3] sm:$0xf] %vm2208, %v2207
  // Predicated region
  $region10: #{mladp_forward.1} parent=0 // pred_check
    _
  $region11: #{mladp_forward.1} parent=0 // pred_check_branch
    %2341 = sbr.rel (0) target = $region13
  $region12: #{mladp_forward.1} parent=0 // pred_region
    _
  $region13: #{mladp_forward.1} parent=0 // pred_fallthru
    _
  // Predicated region
  $region14: #{mladp_forward.1} parent=0 // pred_check
    _
  $region15: #{mladp_forward.1} parent=0 // pred_check_branch
    %2343 = sbr.rel (0) target = $region17
  $region16: #{mladp_forward.1} parent=0 // pred_region
    _
  $region17: #{mladp_forward.1} parent=0 // pred_fallthru
    _

</llo_original>
